<compile_context>
chip_gen: v7x
topology: tpu7x:2x2x1
jax: 0.10.0
libtpu: 0.0.40
codegen_flags: <defaults>
</compile_context>

<pallas_src>
import jax
import jax.numpy as jnp
from jax.experimental import pallas as pl
from jax.experimental.pallas import tpu as pltpu

# ----------------------------------------------------------------------------
# Model hyper-parameters (small demo shapes, consistent with the module)
# ----------------------------------------------------------------------------
BATCH = 256             # large enough to fill MXU rows / exercise the grid
INPUT_DIM = 32          # L (module default is 320; small for the demo)
CONV_K = 3              # self.kernel_1
CONV_C = 32             # self.channel_1
POOL_K = 3
POOL_S = 2              # stride=2 (module default)
FC1_OUT = 64
FC2_OUT = 2
BN_EPS = 1e-5

L_CONV = INPUT_DIM - CONV_K + 1                 # 30   conv output length
L_POOL = (L_CONV - POOL_K) // POOL_S + 1        # 14   maxpool output length
FLAT = CONV_C * L_POOL                          # 448  LazyLinear in_features
LCP = 32                                        # padded per-channel conv len
WIDE_PAD = CONV_C * LCP                         # 1024 lane-dense conv width

TILE_B = 128                                    # batch rows per grid step


# ----------------------------------------------------------------------------
# Fused kernel: conv+BN1+ReLU+pool+flatten+fc1+BN2+ReLU+fc2+softmax
# ----------------------------------------------------------------------------
def _fused_cnn_kernel(x_ref, wconv_ref, bias1_ref, w1_ref, shift2_ref,
                      w2_ref, b2_ref, out_ref):
    # One MXU matmul produces the conv (with BN1 scale folded in) at all three
    # MaxPool in-window shifts: wconv_ref is (INPUT_DIM, 3*WIDE_PAD) with the
    # shift baked into each 1024-lane block, so no x slicing is needed and the
    # RHS is pushed once for all three shifts.
    xb = x_ref[...].astype(jnp.bfloat16)                     # (TILE_B, 32)
    y = jnp.dot(xb, wconv_ref[...],
                preferred_element_type=jnp.float32)          # (TILE_B, 3072)

    # 3-way max over vreg-aligned lane blocks == MaxPool1d(k=3) at every
    # stride-1 start; the stride-2 selection lives in w1_ref's zero rows.
    z = jnp.maximum(jnp.maximum(y[:, 0:WIDE_PAD],
                                y[:, WIDE_PAD:2 * WIDE_PAD]),
                    y[:, 2 * WIDE_PAD:3 * WIDE_PAD])
    z = jnp.maximum(z + bias1_ref[...], 0.0)                 # BN1 shift + ReLU

    # stride-2 pool selection + torch.flatten + fc1 + BN2 scale are all folded
    # into w1_ref; BN2 shift + fc1 bias in shift2_ref.
    h = jnp.dot(z.astype(jnp.bfloat16), w1_ref[...],
                preferred_element_type=jnp.float32)
    h = jnp.maximum(h + shift2_ref[...], 0.0)                # (TILE_B, 64)

    # fc2 (64 -> 2) on the VPU (two multiply + lane-reduce columns) + stable
    # softmax with the reciprocal on the EUP; single output store.
    l0 = jnp.sum(h * w2_ref[0:1, :], axis=-1, keepdims=True) + b2_ref[:, 0:1]
    l1 = jnp.sum(h * w2_ref[1:2, :], axis=-1, keepdims=True) + b2_ref[:, 1:2]
    m = jnp.maximum(l0, l1)
    e0 = jnp.exp(l0 - m)
    e1 = jnp.exp(l1 - m)
    inv = pl.reciprocal(e0 + e1, approx=True)
    out_ref[...] = jnp.concatenate([e0, e1], axis=-1) * inv


@jax.jit
def cnn_forward(x, kp):
    B = x.shape[0]
    n_tiles = pl.cdiv(B, TILE_B)
    Bp = n_tiles * TILE_B
    xp = jnp.pad(x, ((0, Bp - B), (0, 0))) if Bp != B else x

    weight_block = lambda shape: pl.BlockSpec(shape, lambda b: (0, 0))
    out = pl.pallas_call(
        _fused_cnn_kernel,
        out_shape=jax.ShapeDtypeStruct((Bp, FC2_OUT), jnp.float32),
        grid=(n_tiles,),
        in_specs=[
            pl.BlockSpec((TILE_B, INPUT_DIM), lambda b: (b, 0)),    # x tile
            weight_block((INPUT_DIM, POOL_K * WIDE_PAD)),           # wconv
            weight_block((1, WIDE_PAD)),                            # bias1
            weight_block((WIDE_PAD, FC1_OUT)),                      # w1eff
            weight_block((1, FC1_OUT)),                             # shift2
            weight_block((FC2_OUT, FC1_OUT)),                       # w2
            weight_block((1, FC2_OUT)),                             # b2
        ],
        out_specs=pl.BlockSpec((TILE_B, FC2_OUT), lambda b: (b, 0)),
        compiler_params=pltpu.CompilerParams(
            dimension_semantics=("parallel",)),
    )(xp, kp["wconv"], kp["bias1"], kp["w1eff"], kp["shift2"],
      kp["w2"], kp["b2"])
    return out[:B]


# ----------------------------------------------------------------------------
# One-time weight preprocessing (Toeplitz conv, BN folds, pool/flatten fold)
# ----------------------------------------------------------------------------
def prepare_kernel_params(params):
    """Fold conv/BN/pool/fc weights into the kernel operand layout (run once)."""
    # BN1 (inference) folded into per-channel scale/shift (includes conv bias).
    s1 = params["bn1_gamma"] / jnp.sqrt(params["bn1_var"] + BN_EPS)
    shift1 = (params["conv_b"] - params["bn1_mean"]) * s1 + params["bn1_beta"]

    col = jnp.arange(WIDE_PAD)
    c_of = col // LCP                       # channel of each output lane
    l_of = col % LCP                        # conv position of each lane (padded)
    row = jnp.arange(INPUT_DIM)

    # Toeplitz conv weight over the *full* input, one 1024-lane block per pool
    # shift s, so that (x @ wconv_all)[b, s*WIDE_PAD + c*LCP + l]
    #   = sum_k x[b, l + s + k] * conv_w[c, k] * s1[c]   (= scaled conv[c, l+s])
    blocks = []
    for s in range(POOL_K):
        k_idx = row[:, None] - l_of[None, :] - s           # (INPUT_DIM, WIDE_PAD)
        valid = (k_idx >= 0) & (k_idx < CONV_K) & (l_of[None, :] < L_CONV)
        w_s = jnp.where(
            valid,
            params["conv_w"][c_of[None, :], jnp.clip(k_idx, 0, CONV_K - 1)],
            0.0) * s1[c_of][None, :]
        blocks.append(w_s)
    wconv_all = jnp.concatenate(blocks, axis=1)            # (32, 3*1024)
    bias1 = shift1[c_of].reshape(1, WIDE_PAD)

    # fc1 (pre-transposed) with BN2 scale, the stride-2 pool selection and
    # torch.flatten(start_dim=1) baked in: row g = c*LCP + l of w1eff is
    # fc1_w[:, c*L_POOL + l//2] * s2 when l is a pooled start position, else 0
    # (this also zeroes the padded lanes l in [L_CONV, LCP)).
    s2 = params["bn2_gamma"] / jnp.sqrt(params["bn2_var"] + BN_EPS)
    sel = (l_of < L_CONV) & (l_of % POOL_S == 0) & (l_of // POOL_S < L_POOL)
    flat_idx = c_of * L_POOL + l_of // POOL_S
    w1t = params["fc1_w"].T                                # (FLAT, 64)
    w1eff = jnp.where(sel[:, None],
                      w1t[jnp.clip(flat_idx, 0, FLAT - 1)],
                      0.0) * s2[None, :]
    shift2 = ((params["fc1_b"] - params["bn2_mean"]) * s2
              + params["bn2_beta"]).reshape(1, FC1_OUT)

    return {
        # bf16 only on the MXU operands; all VPU/EUP operands stay f32.
        "wconv": wconv_all.astype(jnp.bfloat16),           # (32, 3072)
        "bias1": bias1.astype(jnp.float32),                # (1, 1024)
        "w1eff": w1eff.astype(jnp.bfloat16),               # (1024, 64)
        "shift2": shift2.astype(jnp.float32),              # (1, 64)
        "w2": params["fc2_w"].astype(jnp.float32),         # (2, 64)
        "b2": params["fc2_b"].reshape(1, FC2_OUT).astype(jnp.float32),
    }


# ----------------------------------------------------------------------------
# Parameter construction (deterministic, PyTorch-oriented shapes)
# ----------------------------------------------------------------------------
def init_params(key):
    k = jax.random.split(key, 4)
    return {
        # conv1d: PyTorch weight (Cout, Cin=1, K) -> stored as (Cout, K)
        "conv_w": 0.2 * jax.random.normal(k[0], (CONV_C, CONV_K), jnp.float32),
        "conv_b": 0.1 * jax.random.normal(k[1], (CONV_C,), jnp.float32),
        # BN1 (freshly initialized PyTorch stats)
        "bn1_gamma": jnp.ones((CONV_C,), jnp.float32),
        "bn1_beta": jnp.zeros((CONV_C,), jnp.float32),
        "bn1_mean": jnp.zeros((CONV_C,), jnp.float32),
        "bn1_var": jnp.ones((CONV_C,), jnp.float32),
        # fc1 (LazyLinear materializes to (64, FLAT))
        "fc1_w": 0.05 * jax.random.normal(k[2], (FC1_OUT, FLAT), jnp.float32),
        "fc1_b": jnp.zeros((FC1_OUT,), jnp.float32),
        # BN2
        "bn2_gamma": jnp.ones((FC1_OUT,), jnp.float32),
        "bn2_beta": jnp.zeros((FC1_OUT,), jnp.float32),
        "bn2_mean": jnp.zeros((FC1_OUT,), jnp.float32),
        "bn2_var": jnp.ones((FC1_OUT,), jnp.float32),
        # fc2
        "fc2_w": 0.1 * jax.random.normal(k[3], (FC2_OUT, FC1_OUT), jnp.float32),
        "fc2_b": jnp.zeros((FC2_OUT,), jnp.float32),
    }


# ----------------------------------------------------------------------------
# Pure-JAX reference (mirrors the PyTorch forward exactly) for validation
# ----------------------------------------------------------------------------
def reference_forward(x, params):
    B = x.shape[0]
    conv = jnp.zeros((B, CONV_C, L_CONV), jnp.float32)
    for k in range(CONV_K):
        conv = conv + x[:, None, k:k + L_CONV] * params["conv_w"][None, :, k:k + 1]
    conv = conv + params["conv_b"][None, :, None]
    bn1 = ((conv - params["bn1_mean"][None, :, None])
           / jnp.sqrt(params["bn1_var"][None, :, None] + BN_EPS)
           * params["bn1_gamma"][None, :, None] + params["bn1_beta"][None, :, None])
    y = jnp.maximum(bn1, 0.0)
    pooled = jnp.stack(
        [y[:, :, POOL_S * p: POOL_S * p + POOL_K].max(axis=-1) for p in range(L_POOL)],
        axis=-1)
    c2 = pooled.reshape(B, FLAT)           # dropout p=0 -> identity
    h = c2 @ params["fc1_w"].T + params["fc1_b"]
    h = ((h - params["bn2_mean"]) / jnp.sqrt(params["bn2_var"] + BN_EPS)
         * params["bn2_gamma"] + params["bn2_beta"])
    h = jnp.maximum(h, 0.0)
    logits = h @ params["fc2_w"].T + params["fc2_b"]
    return jax.nn.softmax(logits, axis=-1)


if __name__ == "__main__":
    key = jax.random.PRNGKey(0)
    kx, kp_key = jax.random.split(key)
    x = jax.random.normal(kx, (BATCH, INPUT_DIM), jnp.float32)

    params = init_params(kp_key)
    kparams = prepare_kernel_params(params)     # one-time weight preprocessing

    out = cnn_forward(x, kparams)
    out = jax.block_until_ready(out)

    ref = reference_forward(x, params)
    assert out.shape == (BATCH, FC2_OUT), out.shape
    # bf16 MXU weights + approx EUP reciprocal -> slightly loosened tolerances
    assert jnp.allclose(jnp.sum(out, axis=-1), 1.0, atol=5e-3)
    assert jnp.allclose(out, ref, atol=1e-2, rtol=1e-2), (out, ref)

    print("KERNEL_OK")
</pallas_src>

<mosaic_0001>
module attributes {stable_mosaic.version = 11 : i64} {
  func.func @_fused_cnn_kernel(%arg0: i32, %arg1: memref<128x32xf32, #tpu.memory_space<vmem>>, %arg2: memref<32x3072xbf16, #tpu.memory_space<vmem>>, %arg3: memref<1x1024xf32, #tpu.memory_space<vmem>>, %arg4: memref<1024x64xbf16, #tpu.memory_space<vmem>>, %arg5: memref<1x64xf32, #tpu.memory_space<vmem>>, %arg6: memref<2x64xf32, #tpu.memory_space<vmem>>, %arg7: memref<1x2xf32, #tpu.memory_space<vmem>>, %arg8: memref<128x2xf32, #tpu.memory_space<vmem>>) attributes {dimension_semantics = [#tpu.dimension_semantics<parallel>], iteration_bounds = array<i64: 2>, scalar_prefetch = 0 : i64, scratch_operands = 0 : i64, tpu.core_type = #tpu.core_type<tc>, window_params = [{transform_indices = @transform_0, window_bounds = array<i64: 128, 32>}, {pipeline_mode = #tpu.pipeline_mode<synchronous>, transform_indices = @transform_1, window_bounds = array<i64: 32, 3072>}, {pipeline_mode = #tpu.pipeline_mode<synchronous>, transform_indices = @transform_2, window_bounds = array<i64: 1, 1024>}, {pipeline_mode = #tpu.pipeline_mode<synchronous>, transform_indices = @transform_3, window_bounds = array<i64: 1024, 64>}, {pipeline_mode = #tpu.pipeline_mode<synchronous>, transform_indices = @transform_4, window_bounds = array<i64: 1, 64>}, {pipeline_mode = #tpu.pipeline_mode<synchronous>, transform_indices = @transform_5, window_bounds = array<i64: 2, 64>}, {pipeline_mode = #tpu.pipeline_mode<synchronous>, transform_indices = @transform_6, window_bounds = array<i64: 1, 2>}, {transform_indices = @transform_7, window_bounds = array<i64: 128, 2>}]} {
    %c0 = arith.constant 0 : index
    %c0_0 = arith.constant 0 : index
    %0 = vector.load %arg1[%c0, %c0_0] : memref<128x32xf32, #tpu.memory_space<vmem>>, vector<128x32xf32>
    %1 = arith.truncf %0 : vector<128x32xf32> to vector<128x32xbf16>
    %c0_1 = arith.constant 0 : index
    %c0_2 = arith.constant 0 : index
    %2 = vector.load %arg2[%c0_1, %c0_2] : memref<32x3072xbf16, #tpu.memory_space<vmem>>, vector<32x3072xbf16>
    %cst = arith.constant dense<0.000000e+00> : vector<128x3072xf32>
    %3 = tpu.matmul %1, %2, %cst {dimension_numbers = #tpu.dot_dimension_numbers<[1], [0], [0], [1], [0, 0, 1, 1], [], []>} : vector<128x32xbf16>, vector<32x3072xbf16>, vector<128x3072xf32> -> vector<128x3072xf32>
    %4 = vector.extract_strided_slice %3 {offsets = [0, 0], sizes = [128, 1024], strides = [1, 1]} : vector<128x3072xf32> to vector<128x1024xf32>
    %5 = vector.extract_strided_slice %3 {offsets = [0, 1024], sizes = [128, 1024], strides = [1, 1]} : vector<128x3072xf32> to vector<128x1024xf32>
    %6 = arith.maximumf %4, %5 : vector<128x1024xf32>
    %7 = vector.extract_strided_slice %3 {offsets = [0, 2048], sizes = [128, 1024], strides = [1, 1]} : vector<128x3072xf32> to vector<128x1024xf32>
    %8 = arith.maximumf %6, %7 : vector<128x1024xf32>
    %c0_3 = arith.constant 0 : index
    %c0_4 = arith.constant 0 : index
    %9 = vector.load %arg3[%c0_3, %c0_4] : memref<1x1024xf32, #tpu.memory_space<vmem>>, vector<1x1024xf32>
    %10 = vector.broadcast %9 : vector<1x1024xf32> to vector<128x1024xf32>
    %11 = arith.addf %8, %10 : vector<128x1024xf32>
    %cst_5 = arith.constant 0.000000e+00 : f32
    %12 = vector.broadcast %cst_5 : f32 to vector<128x1024xf32>
    %13 = arith.maximumf %11, %12 : vector<128x1024xf32>
    %14 = arith.truncf %13 : vector<128x1024xf32> to vector<128x1024xbf16>
    %c0_6 = arith.constant 0 : index
    %c0_7 = arith.constant 0 : index
    %15 = vector.load %arg4[%c0_6, %c0_7] : memref<1024x64xbf16, #tpu.memory_space<vmem>>, vector<1024x64xbf16>
    %cst_8 = arith.constant dense<0.000000e+00> : vector<128x64xf32>
    %16 = tpu.matmul %14, %15, %cst_8 {dimension_numbers = #tpu.dot_dimension_numbers<[1], [0], [0], [1], [0, 0, 1, 1], [], []>} : vector<128x1024xbf16>, vector<1024x64xbf16>, vector<128x64xf32> -> vector<128x64xf32>
    %c0_9 = arith.constant 0 : index
    %c0_10 = arith.constant 0 : index
    %17 = vector.load %arg5[%c0_9, %c0_10] : memref<1x64xf32, #tpu.memory_space<vmem>>, vector<1x64xf32>
    %18 = vector.broadcast %17 : vector<1x64xf32> to vector<128x64xf32>
    %19 = arith.addf %16, %18 : vector<128x64xf32>
    %cst_11 = arith.constant 0.000000e+00 : f32
    %20 = vector.broadcast %cst_11 : f32 to vector<128x64xf32>
    %21 = arith.maximumf %19, %20 : vector<128x64xf32>
    %c0_12 = arith.constant 0 : index
    %c0_13 = arith.constant 0 : index
    %22 = vector.load %arg6[%c0_12, %c0_13] : memref<2x64xf32, #tpu.memory_space<vmem>>, vector<1x64xf32>
    %23 = vector.broadcast %22 : vector<1x64xf32> to vector<128x64xf32>
    %24 = arith.mulf %21, %23 : vector<128x64xf32>
    %cst_14 = arith.constant dense<0.000000e+00> : vector<128xf32>
    %25 = vector.multi_reduction <add>, %24, %cst_14 [1] : vector<128x64xf32> to vector<128xf32>
    %26 = vector.shape_cast %25 : vector<128xf32> to vector<128x1xf32>
    %c0_15 = arith.constant 0 : index
    %c0_16 = arith.constant 0 : index
    %27 = vector.load %arg7[%c0_15, %c0_16] : memref<1x2xf32, #tpu.memory_space<vmem>>, vector<1x1xf32>
    %28 = vector.broadcast %27 : vector<1x1xf32> to vector<128x1xf32>
    %29 = arith.addf %26, %28 : vector<128x1xf32>
    %c1 = arith.constant 1 : index
    %c0_17 = arith.constant 0 : index
    %30 = vector.load %arg6[%c1, %c0_17] : memref<2x64xf32, #tpu.memory_space<vmem>>, vector<1x64xf32>
    %31 = vector.broadcast %30 : vector<1x64xf32> to vector<128x64xf32>
    %32 = arith.mulf %21, %31 : vector<128x64xf32>
    %cst_18 = arith.constant dense<0.000000e+00> : vector<128xf32>
    %33 = vector.multi_reduction <add>, %32, %cst_18 [1] : vector<128x64xf32> to vector<128xf32>
    %34 = vector.shape_cast %33 : vector<128xf32> to vector<128x1xf32>
    %c0_19 = arith.constant 0 : index
    %c1_20 = arith.constant 1 : index
    %35 = vector.load %arg7[%c0_19, %c1_20] : memref<1x2xf32, #tpu.memory_space<vmem>>, vector<1x1xf32>
    %36 = vector.broadcast %35 : vector<1x1xf32> to vector<128x1xf32>
    %37 = arith.addf %34, %36 : vector<128x1xf32>
    %38 = arith.maximumf %29, %37 : vector<128x1xf32>
    %39 = arith.subf %29, %38 : vector<128x1xf32>
    %40 = math.exp %39 : vector<128x1xf32>
    %41 = arith.subf %37, %38 : vector<128x1xf32>
    %42 = math.exp %41 : vector<128x1xf32>
    %43 = arith.addf %40, %42 : vector<128x1xf32>
    %44 = tpu.reciprocal %43 {approx = true} : vector<128x1xf32> -> vector<128x1xf32>
    %45 = tpu.concatenate %40, %42 in 1 : vector<128x1xf32>, vector<128x1xf32> -> vector<128x2xf32>
    %46 = vector.broadcast %44 : vector<128x1xf32> to vector<128x2xf32>
    %47 = arith.mulf %45, %46 : vector<128x2xf32>
    %c0_21 = arith.constant 0 : index
    %c0_22 = arith.constant 0 : index
    %48 = vector.load %arg8[%c0_21, %c0_22] : memref<128x2xf32, #tpu.memory_space<vmem>>, vector<128x2xf32>
    tpu.vector_store %arg8[%c0_21, %c0_22], %47 {strides = array<i32>} : memref<128x2xf32, #tpu.memory_space<vmem>>, vector<128x2xf32>,
    return
  }
  func.func @transform_0(%arg0: i32) -> (i32, i32) {
    %c0_i32 = arith.constant 0 : i32
    %c0_i32_0 = arith.constant 0 : i32
    return %arg0, %c0_i32 : i32, i32
  }
  func.func @transform_1(%arg0: i32) -> (i32, i32) {
    %c0_i32 = arith.constant 0 : i32
    %c0_i32_0 = arith.constant 0 : i32
    %c0_i32_1 = arith.constant 0 : i32
    return %c0_i32, %c0_i32_0 : i32, i32
  }
  func.func @transform_2(%arg0: i32) -> (i32, i32) {
    %c0_i32 = arith.constant 0 : i32
    %c0_i32_0 = arith.constant 0 : i32
    %c0_i32_1 = arith.constant 0 : i32
    return %c0_i32, %c0_i32_0 : i32, i32
  }
  func.func @transform_3(%arg0: i32) -> (i32, i32) {
    %c0_i32 = arith.constant 0 : i32
    %c0_i32_0 = arith.constant 0 : i32
    %c0_i32_1 = arith.constant 0 : i32
    return %c0_i32, %c0_i32_0 : i32, i32
  }
  func.func @transform_4(%arg0: i32) -> (i32, i32) {
    %c0_i32 = arith.constant 0 : i32
    %c0_i32_0 = arith.constant 0 : i32
    %c0_i32_1 = arith.constant 0 : i32
    return %c0_i32, %c0_i32_0 : i32, i32
  }
  func.func @transform_5(%arg0: i32) -> (i32, i32) {
    %c0_i32 = arith.constant 0 : i32
    %c0_i32_0 = arith.constant 0 : i32
    %c0_i32_1 = arith.constant 0 : i32
    return %c0_i32, %c0_i32_0 : i32, i32
  }
  func.func @transform_6(%arg0: i32) -> (i32, i32) {
    %c0_i32 = arith.constant 0 : i32
    %c0_i32_0 = arith.constant 0 : i32
    %c0_i32_1 = arith.constant 0 : i32
    return %c0_i32, %c0_i32_0 : i32, i32
  }
  func.func @transform_7(%arg0: i32) -> (i32, i32) {
    %c0_i32 = arith.constant 0 : i32
    %c0_i32_0 = arith.constant 0 : i32
    return %arg0, %c0_i32 : i32, i32
  }
}

</mosaic_0001>

<llo_original>
// kernel: cnn_forward.1
$region0: #{cnn_forward.1}
  #allocation0 [shape = 'u32[]', space=smem, size = 0x4, offset = 0x4, fixed_abs, tag = 'smem constant byte address 0x4 - core index']
  #allocation1 [shape = 'u32[144,128]{1,0:T(1,128)}', space=vmem, size = 0x12000, scoped, tag = 'internal scratch']
  %s0 = inlined_call_operand.vmem [shape: f32[256,32], index: 0, kind: input, shape index: {}]
  %s1 = inlined_call_operand.vmem [shape: bf16[32,3072], index: 1, kind: input, shape index: {}]
  %s2 = inlined_call_operand.vmem [shape: f32[1,1024], index: 2, kind: input, shape index: {}]
  %s3 = inlined_call_operand.vmem [shape: bf16[1024,64], index: 3, kind: input, shape index: {}]
  %s4 = inlined_call_operand.vmem [shape: f32[1,64], index: 4, kind: input, shape index: {}]
  %s5 = inlined_call_operand.vmem [shape: f32[2,64], index: 5, kind: input, shape index: {}]
  %s6 = inlined_call_operand.vmem [shape: f32[1,2], index: 6, kind: input, shape index: {}]
  %s7 = inlined_call_operand.vmem [shape: f32[256,2], index: 7, kind: output, shape index: {}]
  %s8 = sld [smem:[#allocation0]]
  $region61: #{cnn_forward.1} parent=0
    _
  %s10 = ssub.s32 1, %s8
  %s11 = scalar_select 0, %s10, %s8
  loop: start=0, step=1, limit=4
  $region2: #{cnn_forward.1} parent=0 // loop_pre_header
    _
  $region3: #{cnn_forward.1} parent=0 // loop_header
    %s13 = sphi 0, %s17
    %p14 = scmp.ge.s32.totalorder %s13, 4
    %s23 = sphi 0, %s25
    %s26 = sphi 0, %s23
    %s27 = sphi 0, %s26
    %s43 = sphi 0, %s27
    %s47 = sphi 0, %s47
    %s49 = sphi 0, %s47
    %s50 = sphi 0, %s49
    %s64 = sphi 0, %s50
    %s68 = sphi 0, %s68
    %s70 = sphi 0, %s68
    %s71 = sphi 0, %s70
    %s85 = sphi 0, %s71
    %s89 = sphi 0, %s89
    %s91 = sphi 0, %s89
    %s92 = sphi 0, %s91
    %s106 = sphi 0, %s92
    %s110 = sphi 0, %s110
    %s112 = sphi 0, %s110
    %s113 = sphi 0, %s112
    %s127 = sphi 0, %s113
    %s131 = sphi 0, %s131
    %s133 = sphi 0, %s131
    %s134 = sphi 0, %s133
    %s148 = sphi 0, %s134
    %s152 = sphi 0, %s152
    %s154 = sphi 0, %s152
    %s155 = sphi 0, %s154
    %s169 = sphi 0, %s155
    %s175 = sphi 0, %s177
    %s178 = sphi 0, %s175
    %s179 = sphi 0, %s178
    %s195 = sphi 0, %s179
  $region4: #{cnn_forward.1} parent=0 // loop_header_branch
    %16 = sbr.rel (%p14) target = $region8
  $region5: #{cnn_forward.1} parent=0 // loop_body
    %s18 = ssub.s32 %s13, 1
    %s19 = ssub.s32 %s13, 2
    %s20 = sadd.s32 %s13, 1
    %s21 = ssub.s32 %s13, %s20
    %p22 = scmp.eq.s32.totalorder %s21, 0
    %s24 = sadd.s32 %s23, 1
    %s25 = scalar_select %p22, %s23, %s24
    %p28 = pneg %p22
    %p29 = scmp.eq.s32.totalorder %s13, 1
    %p30 = por %p28, %p29
    %p31 = scmp.ne.s32.totalorder %s23, %s26
    %p32 = scmp.eq.s32.totalorder %s13, 0
    %p33 = por %p31, %p32
    %p34 = scmp.ne.s32.totalorder %s23, %s26
    %p35 = scmp.eq.s32.totalorder %s18, 1
    %p36 = por %p34, %p35
    %p37 = scmp.ne.s32.totalorder %s26, %s27
    %p38 = scmp.eq.s32.totalorder %s18, 0
    %p39 = por %p37, %p38
    %p40 = scmp.ne.s32.totalorder %s26, %s27
    %p41 = scmp.eq.s32.totalorder %s19, 1
    %p42 = por %p40, %p41
    %p44 = scmp.ne.s32.totalorder %s27, %s43
    %p45 = scmp.eq.s32.totalorder %s19, 0
    %p46 = por %p44, %p45
    %s48 = sadd.s32 %s47, 1
    %p51 = scmp.eq.s32.totalorder %s13, 1
    %p52 = scmp.ne.s32.totalorder %s47, %s49
    %p53 = scmp.eq.s32.totalorder %s13, 0
    %p54 = por %p52, %p53
    %p55 = scmp.ne.s32.totalorder %s47, %s49
    %p56 = scmp.eq.s32.totalorder %s18, 1
    %p57 = por %p55, %p56
    %p58 = scmp.ne.s32.totalorder %s49, %s50
    %p59 = scmp.eq.s32.totalorder %s18, 0
    %p60 = por %p58, %p59
    %p61 = scmp.ne.s32.totalorder %s49, %s50
    %p62 = scmp.eq.s32.totalorder %s19, 1
    %p63 = por %p61, %p62
    %p65 = scmp.ne.s32.totalorder %s50, %s64
    %p66 = scmp.eq.s32.totalorder %s19, 0
    %p67 = por %p65, %p66
    %s69 = sadd.s32 %s68, 1
    %p72 = scmp.eq.s32.totalorder %s13, 1
    %p73 = scmp.ne.s32.totalorder %s68, %s70
    %p74 = scmp.eq.s32.totalorder %s13, 0
    %p75 = por %p73, %p74
    %p76 = scmp.ne.s32.totalorder %s68, %s70
    %p77 = scmp.eq.s32.totalorder %s18, 1
    %p78 = por %p76, %p77
    %p79 = scmp.ne.s32.totalorder %s70, %s71
    %p80 = scmp.eq.s32.totalorder %s18, 0
    %p81 = por %p79, %p80
    %p82 = scmp.ne.s32.totalorder %s70, %s71
    %p83 = scmp.eq.s32.totalorder %s19, 1
    %p84 = por %p82, %p83
    %p86 = scmp.ne.s32.totalorder %s71, %s85
    %p87 = scmp.eq.s32.totalorder %s19, 0
    %p88 = por %p86, %p87
    %s90 = sadd.s32 %s89, 1
    %p93 = scmp.eq.s32.totalorder %s13, 1
    %p94 = scmp.ne.s32.totalorder %s89, %s91
    %p95 = scmp.eq.s32.totalorder %s13, 0
    %p96 = por %p94, %p95
    %p97 = scmp.ne.s32.totalorder %s89, %s91
    %p98 = scmp.eq.s32.totalorder %s18, 1
    %p99 = por %p97, %p98
    %p100 = scmp.ne.s32.totalorder %s91, %s92
    %p101 = scmp.eq.s32.totalorder %s18, 0
    %p102 = por %p100, %p101
    %p103 = scmp.ne.s32.totalorder %s91, %s92
    %p104 = scmp.eq.s32.totalorder %s19, 1
    %p105 = por %p103, %p104
    %p107 = scmp.ne.s32.totalorder %s92, %s106
    %p108 = scmp.eq.s32.totalorder %s19, 0
    %p109 = por %p107, %p108
    %s111 = sadd.s32 %s110, 1
    %p114 = scmp.eq.s32.totalorder %s13, 1
    %p115 = scmp.ne.s32.totalorder %s110, %s112
    %p116 = scmp.eq.s32.totalorder %s13, 0
    %p117 = por %p115, %p116
    %p118 = scmp.ne.s32.totalorder %s110, %s112
    %p119 = scmp.eq.s32.totalorder %s18, 1
    %p120 = por %p118, %p119
    %p121 = scmp.ne.s32.totalorder %s112, %s113
    %p122 = scmp.eq.s32.totalorder %s18, 0
    %p123 = por %p121, %p122
    %p124 = scmp.ne.s32.totalorder %s112, %s113
    %p125 = scmp.eq.s32.totalorder %s19, 1
    %p126 = por %p124, %p125
    %p128 = scmp.ne.s32.totalorder %s113, %s127
    %p129 = scmp.eq.s32.totalorder %s19, 0
    %p130 = por %p128, %p129
    %s132 = sadd.s32 %s131, 1
    %p135 = scmp.eq.s32.totalorder %s13, 1
    %p136 = scmp.ne.s32.totalorder %s131, %s133
    %p137 = scmp.eq.s32.totalorder %s13, 0
    %p138 = por %p136, %p137
    %p139 = scmp.ne.s32.totalorder %s131, %s133
    %p140 = scmp.eq.s32.totalorder %s18, 1
    %p141 = por %p139, %p140
    %p142 = scmp.ne.s32.totalorder %s133, %s134
    %p143 = scmp.eq.s32.totalorder %s18, 0
    %p144 = por %p142, %p143
    %p145 = scmp.ne.s32.totalorder %s133, %s134
    %p146 = scmp.eq.s32.totalorder %s19, 1
    %p147 = por %p145, %p146
    %p149 = scmp.ne.s32.totalorder %s134, %s148
    %p150 = scmp.eq.s32.totalorder %s19, 0
    %p151 = por %p149, %p150
    %s153 = sadd.s32 %s152, 1
    %p156 = scmp.eq.s32.totalorder %s13, 1
    %p157 = scmp.ne.s32.totalorder %s152, %s154
    %p158 = scmp.eq.s32.totalorder %s13, 0
    %p159 = por %p157, %p158
    %p160 = scmp.ne.s32.totalorder %s152, %s154
    %p161 = scmp.eq.s32.totalorder %s18, 1
    %p162 = por %p160, %p161
    %p163 = scmp.ne.s32.totalorder %s154, %s155
    %p164 = scmp.eq.s32.totalorder %s18, 0
    %p165 = por %p163, %p164
    %p166 = scmp.ne.s32.totalorder %s154, %s155
    %p167 = scmp.eq.s32.totalorder %s19, 1
    %p168 = por %p166, %p167
    %p170 = scmp.ne.s32.totalorder %s155, %s169
    %p171 = scmp.eq.s32.totalorder %s19, 0
    %p172 = por %p170, %p171
    %s173 = ssub.s32 %s13, %s20
    %p174 = scmp.eq.s32.totalorder %s173, 0
    %s176 = sadd.s32 %s175, 1
    %s177 = scalar_select %p174, %s175, %s176
    %p180 = pneg %p174
    %p181 = scmp.eq.s32.totalorder %s13, 1
    %p182 = por %p180, %p181
    %p183 = scmp.ne.s32.totalorder %s175, %s178
    %p184 = scmp.eq.s32.totalorder %s13, 0
    %p185 = por %p183, %p184
    %p186 = scmp.ne.s32.totalorder %s175, %s178
    %p187 = scmp.eq.s32.totalorder %s18, 1
    %p188 = por %p186, %p187
    %p189 = scmp.ne.s32.totalorder %s178, %s179
    %p190 = scmp.eq.s32.totalorder %s18, 0
    %p191 = por %p189, %p190
    %p192 = scmp.ne.s32.totalorder %s178, %s179
    %p193 = scmp.eq.s32.totalorder %s19, 1
    %p194 = por %p192, %p193
    %p196 = scmp.ne.s32.totalorder %s179, %s195
    %p197 = scmp.eq.s32.totalorder %s19, 0
    %p198 = por %p196, %p197
    %p199 = scmp.le.s32.totalorder 1, %s13
    %p200 = scmp.lt.s32.totalorder %s13, 3
    %p201 = pnand %p199, %p200
    %p202 = pneg %p201
    // Predicated region
    $region9: #{cnn_forward.1} parent=5 // pred_check
      _
    $region10: #{cnn_forward.1} parent=5 // pred_check_branch
      %204 = sbr.rel (%p201) target = $region12
    $region11: #{cnn_forward.1} parent=5 // pred_region
      %s205 = ssub.s32 %s13, 1
      // Predicated region
      $region13: #{cnn_forward.1} parent=11 // pred_check
        %p206 = pneg %p60
      $region14: #{cnn_forward.1} parent=11 // pred_check_branch
        %208 = sbr.rel (%p206) target = $region16
      $region15: #{cnn_forward.1} parent=11 // pred_region
        _
      $region16: #{cnn_forward.1} parent=11 // pred_fallthru
        _
      // Predicated region
      $region17: #{cnn_forward.1} parent=11 // pred_check
        %p209 = pneg %p81
      $region18: #{cnn_forward.1} parent=11 // pred_check_branch
        %211 = sbr.rel (%p209) target = $region20
      $region19: #{cnn_forward.1} parent=11 // pred_region
        _
      $region20: #{cnn_forward.1} parent=11 // pred_fallthru
        _
      // Predicated region
      $region21: #{cnn_forward.1} parent=11 // pred_check
        %p212 = pneg %p102
      $region22: #{cnn_forward.1} parent=11 // pred_check_branch
        %214 = sbr.rel (%p212) target = $region24
      $region23: #{cnn_forward.1} parent=11 // pred_region
        _
      $region24: #{cnn_forward.1} parent=11 // pred_fallthru
        _
      // Predicated region
      $region25: #{cnn_forward.1} parent=11 // pred_check
        %p215 = pneg %p123
      $region26: #{cnn_forward.1} parent=11 // pred_check_branch
        %217 = sbr.rel (%p215) target = $region28
      $region27: #{cnn_forward.1} parent=11 // pred_region
        _
      $region28: #{cnn_forward.1} parent=11 // pred_fallthru
        _
      // Predicated region
      $region29: #{cnn_forward.1} parent=11 // pred_check
        %p218 = pneg %p144
      $region30: #{cnn_forward.1} parent=11 // pred_check_branch
        %220 = sbr.rel (%p218) target = $region32
      $region31: #{cnn_forward.1} parent=11 // pred_region
        _
      $region32: #{cnn_forward.1} parent=11 // pred_fallthru
        _
      // Predicated region
      $region33: #{cnn_forward.1} parent=11 // pred_check
        %p221 = pneg %p165
      $region34: #{cnn_forward.1} parent=11 // pred_check_branch
        %223 = sbr.rel (%p221) target = $region36
      $region35: #{cnn_forward.1} parent=11 // pred_region
        _
      $region36: #{cnn_forward.1} parent=11 // pred_fallthru
        _
    $region12: #{cnn_forward.1} parent=5 // pred_fallthru
      _
    %p224 = scmp.lt.s32.totalorder %s13, 2
    // Predicated region
    $region37: #{cnn_forward.1} parent=5 // pred_check
      %p225 = pneg %p224
    $region38: #{cnn_forward.1} parent=5 // pred_check_branch
      %227 = sbr.rel (%p225) target = $region40
    $region39: #{cnn_forward.1} parent=5 // pred_region
      // Predicated region
      $region41: #{cnn_forward.1} parent=39 // pred_check
        %p228 = pneg %p33
      $region42: #{cnn_forward.1} parent=39 // pred_check_branch
        %230 = sbr.rel (%p228) target = $region44
      $region43: #{cnn_forward.1} parent=39 // pred_region
        %s231 = smul.u32 16, %s13
        %p232 = scmp.lt.s32.totalorder %s231, 31
        %s233 = scalar_select %p232, %s231, 31
        %s234 = smul.addr %s233, 8
        %s235 = scalar_lea.vmem %s0, %s234
        %s236 = smul.u32 16, %s13
      $region44: #{cnn_forward.1} parent=39 // pred_fallthru
        _
    $region40: #{cnn_forward.1} parent=5 // pred_fallthru
      _
    %p237 = scmp.le.s32.totalorder 1, %s13
    %p238 = scmp.lt.s32.totalorder %s13, 3
    %p239 = pnand %p237, %p238
    %p240 = pneg %p239
    // Predicated region
    $region45: #{cnn_forward.1} parent=5 // pred_check
      _
    $region46: #{cnn_forward.1} parent=5 // pred_check_branch
      %242 = sbr.rel (%p239) target = $region48
    $region47: #{cnn_forward.1} parent=5 // pred_region
      %s243 = ssub.s32 %s13, 1
      %s244 = smul.u32 16, %s18
      %p245 = scmp.lt.s32.totalorder %s244, 31
      %s246 = scalar_select %p245, %s244, 31
      %s247 = smul.addr %s246, 8
      %s248 = scalar_lea.vmem %s0, %s247
      %p249 = pneg %p39
      %p250 = pneg %p36
      %p251 = pneg %p60
      %p252 = pneg %p57
      %p253 = pneg %p81
      %p254 = pneg %p78
      %p255 = pneg %p102
      %p256 = pneg %p99
      %p257 = pneg %p123
      %p258 = pneg %p120
      %p259 = pneg %p144
      %p260 = pneg %p141
      %p261 = pneg %p165
      %p262 = pneg %p162
      %p263 = pneg %p191
      %p264 = pneg %p188
      %s265 = smul.u32 16, %s18
      %p266 = scmp.lt.s32.totalorder %s265, 31
      %s267 = scalar_select %p266, %s265, 31
      %s268 = smul.addr %s267, 8
      %s269 = scalar_lea.vmem %s7, %s268
      %s270 = smul.u32 16, %s18
      %p271 = scmp.lt.s32.totalorder %s270, 31
      %s272 = scalar_select %p271, %s270, 31
      %s273 = smul.addr %s272, 8
      %s274 = scalar_lea.vmem %s0, %s273
      %s275 = smul.u32 16, %s18
      %s276 = smul.u32 16, %s18
      %p277 = scmp.lt.s32.totalorder %s276, 31
      %s278 = scalar_select %p277, %s276, 31
      %s279 = smul.addr %s278, 8
      %s280 = scalar_lea.vmem %s7, %s279
      %s281 = smul.u32 16, %s18
      %v283 = vld [vmem:[%s274] sm:$0xff]
      %v284 = vld [vmem:[%s274 + $0x8] sm:$0xff]
      %v285 = vld [vmem:[%s274 + $0x10] sm:$0xff]
      %v286 = vld [vmem:[%s274 + $0x18] sm:$0xff]
      %v287 = vld [vmem:[%s274 + $0x20] sm:$0xff]
      %v288 = vld [vmem:[%s274 + $0x28] sm:$0xff]
      %v289 = vld [vmem:[%s274 + $0x30] sm:$0xff]
      %v290 = vld [vmem:[%s274 + $0x38] sm:$0xff]
      %v291 = vld [vmem:[%s274 + $0x40] sm:$0xff]
      %v292 = vld [vmem:[%s274 + $0x48] sm:$0xff]
      %v293 = vld [vmem:[%s274 + $0x50] sm:$0xff]
      %v294 = vld [vmem:[%s274 + $0x58] sm:$0xff]
      %v295 = vld [vmem:[%s274 + $0x60] sm:$0xff]
      %v296 = vld [vmem:[%s274 + $0x68] sm:$0xff]
      %v297 = vld [vmem:[%s274 + $0x70] sm:$0xff]
      %v298 = vld [vmem:[%s274 + $0x78] sm:$0xff]
      %v299 = vpack.c.bf16 %v284, %v283
      %v300 = vpack.c.bf16 %v286, %v285
      %v301 = vpack.c.bf16 %v288, %v287
      %v302 = vpack.c.bf16 %v290, %v289
      %v303 = vpack.c.bf16 %v292, %v291
      %v304 = vpack.c.bf16 %v294, %v293
      %v305 = vpack.c.bf16 %v296, %v295
      %v306 = vpack.c.bf16 %v298, %v297
      %v307 = vld [vmem:[%s1] sm:$0xff]
      %v308 = vld [vmem:[%s1 + $0x8] sm:$0xff]
      %v309 = vld [vmem:[%s1 + $0x10] sm:$0xff]
      %v310 = vld [vmem:[%s1 + $0x18] sm:$0xff]
      %v311 = vld [vmem:[%s1 + $0x20] sm:$0xff]
      %v312 = vld [vmem:[%s1 + $0x28] sm:$0xff]
      %v313 = vld [vmem:[%s1 + $0x30] sm:$0xff]
      %v314 = vld [vmem:[%s1 + $0x38] sm:$0xff]
      %v315 = vld [vmem:[%s1 + $0x40] sm:$0xff]
      %v316 = vld [vmem:[%s1 + $0x48] sm:$0xff]
      %v317 = vld [vmem:[%s1 + $0x50] sm:$0xff]
      %v318 = vld [vmem:[%s1 + $0x58] sm:$0xff]
      %v319 = vld [vmem:[%s1 + $0x60] sm:$0xff]
      %v320 = vld [vmem:[%s1 + $0x68] sm:$0xff]
      %v321 = vld [vmem:[%s1 + $0x70] sm:$0xff]
      %v322 = vld [vmem:[%s1 + $0x78] sm:$0xff]
      %v323 = vld [vmem:[%s1 + $0x80] sm:$0xff]
      %v324 = vld [vmem:[%s1 + $0x88] sm:$0xff]
      %v325 = vld [vmem:[%s1 + $0x90] sm:$0xff]
      %v326 = vld [vmem:[%s1 + $0x98] sm:$0xff]
      %v327 = vld [vmem:[%s1 + $0xa0] sm:$0xff]
      %v328 = vld [vmem:[%s1 + $0xa8] sm:$0xff]
      %v329 = vld [vmem:[%s1 + $0xb0] sm:$0xff]
      %v330 = vld [vmem:[%s1 + $0xb8] sm:$0xff]
      %v331 = vld [vmem:[%s1 + $0xc0] sm:$0xff]
      %v332 = vld [vmem:[%s1 + $0xc8] sm:$0xff]
      %v333 = vld [vmem:[%s1 + $0xd0] sm:$0xff]
      %v334 = vld [vmem:[%s1 + $0xd8] sm:$0xff]
      %v335 = vld [vmem:[%s1 + $0xe0] sm:$0xff]
      %v336 = vld [vmem:[%s1 + $0xe8] sm:$0xff]
      %v337 = vld [vmem:[%s1 + $0xf0] sm:$0xff]
      %v338 = vld [vmem:[%s1 + $0xf8] sm:$0xff]
      %v339 = vld [vmem:[%s1 + $0x100] sm:$0xff]
      %v340 = vld [vmem:[%s1 + $0x108] sm:$0xff]
      %v341 = vld [vmem:[%s1 + $0x110] sm:$0xff]
      %v342 = vld [vmem:[%s1 + $0x118] sm:$0xff]
      %v343 = vld [vmem:[%s1 + $0x120] sm:$0xff]
      %v344 = vld [vmem:[%s1 + $0x128] sm:$0xff]
      %v345 = vld [vmem:[%s1 + $0x130] sm:$0xff]
      %v346 = vld [vmem:[%s1 + $0x138] sm:$0xff]
      %v347 = vld [vmem:[%s1 + $0x140] sm:$0xff]
      %v348 = vld [vmem:[%s1 + $0x148] sm:$0xff]
      %v349 = vld [vmem:[%s1 + $0x150] sm:$0xff]
      %v350 = vld [vmem:[%s1 + $0x158] sm:$0xff]
      %v351 = vld [vmem:[%s1 + $0x160] sm:$0xff]
      %v352 = vld [vmem:[%s1 + $0x168] sm:$0xff]
      %v353 = vld [vmem:[%s1 + $0x170] sm:$0xff]
      %v354 = vld [vmem:[%s1 + $0x178] sm:$0xff]
      %v403 = vunpack.c.l.b16 %v307
      %v404 = vunpack.c.h.b16 %v307
      %v405 = vunpack.c.l.b16 %v308
      %v406 = vunpack.c.h.b16 %v308
      %v407 = vunpack.c.l.b16 %v309
      %v408 = vunpack.c.h.b16 %v309
      %v409 = vunpack.c.l.b16 %v310
      %v410 = vunpack.c.h.b16 %v310
      %v411 = vunpack.c.l.b16 %v311
      %v412 = vunpack.c.h.b16 %v311
      %v413 = vunpack.c.l.b16 %v312
      %v414 = vunpack.c.h.b16 %v312
      %v415 = vunpack.c.l.b16 %v313
      %v416 = vunpack.c.h.b16 %v313
      %v417 = vunpack.c.l.b16 %v314
      %v418 = vunpack.c.h.b16 %v314
      %v419 = vunpack.c.l.b16 %v315
      %v420 = vunpack.c.h.b16 %v315
      %v421 = vunpack.c.l.b16 %v316
      %v422 = vunpack.c.h.b16 %v316
      %v423 = vunpack.c.l.b16 %v317
      %v424 = vunpack.c.h.b16 %v317
      %v425 = vunpack.c.l.b16 %v318
      %v426 = vunpack.c.h.b16 %v318
      %v427 = vunpack.c.l.b16 %v319
      %v428 = vunpack.c.h.b16 %v319
      %v429 = vunpack.c.l.b16 %v320
      %v430 = vunpack.c.h.b16 %v320
      %v431 = vunpack.c.l.b16 %v321
      %v432 = vunpack.c.h.b16 %v321
      %v433 = vunpack.c.l.b16 %v322
      %v434 = vunpack.c.h.b16 %v322
      %v435 = vunpack.c.l.b16 %v323
      %v436 = vunpack.c.h.b16 %v323
      %v437 = vunpack.c.l.b16 %v324
      %v438 = vunpack.c.h.b16 %v324
      %v439 = vunpack.c.l.b16 %v325
      %v440 = vunpack.c.h.b16 %v325
      %v441 = vunpack.c.l.b16 %v326
      %v442 = vunpack.c.h.b16 %v326
      %v443 = vunpack.c.l.b16 %v327
      %v444 = vunpack.c.h.b16 %v327
      %v445 = vunpack.c.l.b16 %v328
      %v446 = vunpack.c.h.b16 %v328
      %v447 = vunpack.c.l.b16 %v329
      %v448 = vunpack.c.h.b16 %v329
      %v449 = vunpack.c.l.b16 %v330
      %v450 = vunpack.c.h.b16 %v330
      %v451 = vunpack.c.l.b16 %v331
      %v452 = vunpack.c.h.b16 %v331
      %v453 = vunpack.c.l.b16 %v332
      %v454 = vunpack.c.h.b16 %v332
      %v455 = vunpack.c.l.b16 %v333
      %v456 = vunpack.c.h.b16 %v333
      %v457 = vunpack.c.l.b16 %v334
      %v458 = vunpack.c.h.b16 %v334
      %v459 = vunpack.c.l.b16 %v335
      %v460 = vunpack.c.h.b16 %v335
      %v461 = vunpack.c.l.b16 %v336
      %v462 = vunpack.c.h.b16 %v336
      %v463 = vunpack.c.l.b16 %v337
      %v464 = vunpack.c.h.b16 %v337
      %v465 = vunpack.c.l.b16 %v338
      %v466 = vunpack.c.h.b16 %v338
      %v467 = vunpack.c.l.b16 %v339
      %v468 = vunpack.c.h.b16 %v339
      %v469 = vunpack.c.l.b16 %v340
      %v470 = vunpack.c.h.b16 %v340
      %v471 = vunpack.c.l.b16 %v341
      %v472 = vunpack.c.h.b16 %v341
      %v473 = vunpack.c.l.b16 %v342
      %v474 = vunpack.c.h.b16 %v342
      %v475 = vunpack.c.l.b16 %v343
      %v476 = vunpack.c.h.b16 %v343
      %v477 = vunpack.c.l.b16 %v344
      %v478 = vunpack.c.h.b16 %v344
      %v479 = vunpack.c.l.b16 %v345
      %v480 = vunpack.c.h.b16 %v345
      %v481 = vunpack.c.l.b16 %v346
      %v482 = vunpack.c.h.b16 %v346
      %v483 = vunpack.c.l.b16 %v347
      %v484 = vunpack.c.h.b16 %v347
      %v485 = vunpack.c.l.b16 %v348
      %v486 = vunpack.c.h.b16 %v348
      %v487 = vunpack.c.l.b16 %v349
      %v488 = vunpack.c.h.b16 %v349
      %v489 = vunpack.c.l.b16 %v350
      %v490 = vunpack.c.h.b16 %v350
      %v491 = vunpack.c.l.b16 %v351
      %v492 = vunpack.c.h.b16 %v351
      %v493 = vunpack.c.l.b16 %v352
      %v494 = vunpack.c.h.b16 %v352
      %v495 = vunpack.c.l.b16 %v353
      %v496 = vunpack.c.h.b16 %v353
      %v497 = vunpack.c.l.b16 %v354
      %v498 = vunpack.c.h.b16 %v354
      %v499 = vpack.c.b16 %v427, %v403
      %v500 = vpack.c.b16 %v428, %v404
      %v501 = vpack.c.b16 %v429, %v405
      %v502 = vpack.c.b16 %v430, %v406
      %v503 = vpack.c.b16 %v431, %v407
      %v504 = vpack.c.b16 %v432, %v408
      %v505 = vpack.c.b16 %v433, %v409
      %v506 = vpack.c.b16 %v434, %v410
      %v507 = vpack.c.b16 %v435, %v411
      %v508 = vpack.c.b16 %v436, %v412
      %v509 = vpack.c.b16 %v437, %v413
      %v510 = vpack.c.b16 %v438, %v414
      %v511 = vpack.c.b16 %v439, %v415
      %v512 = vpack.c.b16 %v440, %v416
      %v513 = vpack.c.b16 %v441, %v417
      %v514 = vpack.c.b16 %v442, %v418
      %v515 = vpack.c.b16 %v443, %v419
      %v516 = vpack.c.b16 %v444, %v420
      %v517 = vpack.c.b16 %v445, %v421
      %v518 = vpack.c.b16 %v446, %v422
      %v519 = vpack.c.b16 %v447, %v423
      %v520 = vpack.c.b16 %v448, %v424
      %v521 = vpack.c.b16 %v449, %v425
      %v522 = vpack.c.b16 %v450, %v426
      %v523 = vpack.c.b16 %v475, %v451
      %v524 = vpack.c.b16 %v476, %v452
      %v525 = vpack.c.b16 %v477, %v453
      %v526 = vpack.c.b16 %v478, %v454
      %v527 = vpack.c.b16 %v479, %v455
      %v528 = vpack.c.b16 %v480, %v456
      %v529 = vpack.c.b16 %v481, %v457
      %v530 = vpack.c.b16 %v482, %v458
      %v531 = vpack.c.b16 %v483, %v459
      %v532 = vpack.c.b16 %v484, %v460
      %v533 = vpack.c.b16 %v485, %v461
      %v534 = vpack.c.b16 %v486, %v462
      %v535 = vpack.c.b16 %v487, %v463
      %v536 = vpack.c.b16 %v488, %v464
      %v537 = vpack.c.b16 %v489, %v465
      %v538 = vpack.c.b16 %v490, %v466
      %v539 = vpack.c.b16 %v491, %v467
      %v540 = vpack.c.b16 %v492, %v468
      %v541 = vpack.c.b16 %v493, %v469
      %v542 = vpack.c.b16 %v494, %v470
      %v543 = vpack.c.b16 %v495, %v471
      %v544 = vpack.c.b16 %v496, %v472
      %v545 = vpack.c.b16 %v497, %v473
      %v546 = vpack.c.b16 %v498, %v474
      %vm595 = vcmask 261120
      %v597 = vsel %vm595, %v299, 0
      %v600 = vsel %vm595, %v300, 0
      %v603 = vsel %vm595, %v301, 0
      %v606 = vsel %vm595, %v302, 0
      %v609 = vsel %vm595, %v303, 0
      %v612 = vsel %vm595, %v304, 0
      %v615 = vsel %vm595, %v305, 0
      %v618 = vsel %vm595, %v306, 0
      %620 = vmatprep.subr.bf16.mxu0 %v500
      %621 = vmatpush1.bf16.msra.mxu0 %v499
      %622 = vmatprep.subr.bf16.mxu0 %v524
      %623 = vmatpush1.bf16.msra.mxu0 %v523
      %624 = vmatprep.subr.bf16.mxu0 0
      %625 = vmatpush1.bf16.msra.mxu0 0
      %626 = vmatprep.subr.bf16.mxu0 0
      %627 = vmatpush1.bf16.msra.mxu0 0
      %628 = vmatprep.subr.bf16.mxu0 0
      %629 = vmatpush1.bf16.msra.mxu0 0
      %630 = vmatprep.subr.bf16.mxu0 0
      %631 = vmatpush1.bf16.msra.mxu0 0
      %632 = vmatprep.subr.bf16.mxu0 0
      %633 = vmatpush1.bf16.msra.mxu0 0
      %634 = vmatprep.subr.bf16.mxu0 0
      %635 = vmatpush1.bf16.msra.mxu0 0
      %636 = vmatprep.subr.bf16.mxu0 0
      %637 = vmatpush1.bf16.msra.mxu0 0
      %638 = vmatprep.subr.bf16.mxu0 0
      %639 = vmatpush1.bf16.msra.mxu0 0
      %640 = vmatprep.subr.bf16.mxu0 0
      %641 = vmatpush1.bf16.msra.mxu0 0
      %642 = vmatprep.subr.bf16.mxu0 0
      %643 = vmatpush1.bf16.msra.mxu0 0
      %644 = vmatprep.subr.bf16.mxu0 0
      %645 = vmatpush1.bf16.msra.mxu0 0
      %646 = vmatprep.subr.bf16.mxu0 0
      %647 = vmatpush1.bf16.msra.mxu0 0
      %648 = vmatprep.subr.bf16.mxu0 0
      %649 = vmatpush1.bf16.msra.mxu0 0
      %650 = vmatprep.subr.bf16.mxu0 0
      %651 = vmatpush1.bf16.msra.mxu0 0
      %652 = vmatprep.mubr.bf16.mxu0 0
      %653 = vmatmul.mubr.bf16.gmra.mrb[0].mxu0 %v597
      %v654 = vpop.f32.mrb[0].mxu0
      %v655 = vadd.f32 0.0, %v654
      %v656 = vpop.f32.mrb[0].mxu0
      %v657 = vadd.f32 0.0, %v656
      %v658 = vpop.f32.mrb[0].mxu0
      %v659 = vadd.f32 0.0, %v658
      %v660 = vpop.f32.mrb[0].mxu0
      %v661 = vadd.f32 0.0, %v660
      %662 = vmatprep.mubr.bf16.mxu0 0
      %663 = vmatmul.mubr.bf16.gmra.mrb[0].mxu0 %v600
      %v664 = vpop.f32.mrb[0].mxu0
      %v665 = vadd.f32 0.0, %v664
      %v666 = vpop.f32.mrb[0].mxu0
      %v667 = vadd.f32 0.0, %v666
      %v668 = vpop.f32.mrb[0].mxu0
      %v669 = vadd.f32 0.0, %v668
      %v670 = vpop.f32.mrb[0].mxu0
      %v671 = vadd.f32 0.0, %v670
      %672 = vmatprep.mubr.bf16.mxu0 0
      %673 = vmatmul.mubr.bf16.gmra.mrb[0].mxu0 %v603
      %v674 = vpop.f32.mrb[0].mxu0
      %v675 = vadd.f32 0.0, %v674
      %v676 = vpop.f32.mrb[0].mxu0
      %v677 = vadd.f32 0.0, %v676
      %v678 = vpop.f32.mrb[0].mxu0
      %v679 = vadd.f32 0.0, %v678
      %v680 = vpop.f32.mrb[0].mxu0
      %v681 = vadd.f32 0.0, %v680
      %682 = vmatprep.mubr.bf16.mxu0 0
      %683 = vmatmul.mubr.bf16.gmra.mrb[0].mxu0 %v606
      %v684 = vpop.f32.mrb[0].mxu0
      %v685 = vadd.f32 0.0, %v684
      %v686 = vpop.f32.mrb[0].mxu0
      %v687 = vadd.f32 0.0, %v686
      %v688 = vpop.f32.mrb[0].mxu0
      %v689 = vadd.f32 0.0, %v688
      %v690 = vpop.f32.mrb[0].mxu0
      %v691 = vadd.f32 0.0, %v690
      %692 = vmatprep.mubr.bf16.mxu0 0
      %693 = vmatmul.mubr.bf16.gmra.mrb[0].mxu0 %v609
      %v694 = vpop.f32.mrb[0].mxu0
      %v695 = vadd.f32 0.0, %v694
      %v696 = vpop.f32.mrb[0].mxu0
      %v697 = vadd.f32 0.0, %v696
      %v698 = vpop.f32.mrb[0].mxu0
      %v699 = vadd.f32 0.0, %v698
      %v700 = vpop.f32.mrb[0].mxu0
      %v701 = vadd.f32 0.0, %v700
      %702 = vmatprep.mubr.bf16.mxu0 0
      %703 = vmatmul.mubr.bf16.gmra.mrb[0].mxu0 %v612
      %v704 = vpop.f32.mrb[0].mxu0
      %v705 = vadd.f32 0.0, %v704
      %v706 = vpop.f32.mrb[0].mxu0
      %v707 = vadd.f32 0.0, %v706
      %v708 = vpop.f32.mrb[0].mxu0
      %v709 = vadd.f32 0.0, %v708
      %v710 = vpop.f32.mrb[0].mxu0
      %v711 = vadd.f32 0.0, %v710
      %712 = vmatprep.mubr.bf16.mxu0 0
      %713 = vmatmul.mubr.bf16.gmra.mrb[0].mxu0 %v615
      %v714 = vpop.f32.mrb[0].mxu0
      %v715 = vadd.f32 0.0, %v714
      %v716 = vpop.f32.mrb[0].mxu0
      %v717 = vadd.f32 0.0, %v716
      %v718 = vpop.f32.mrb[0].mxu0
      %v719 = vadd.f32 0.0, %v718
      %v720 = vpop.f32.mrb[0].mxu0
      %v721 = vadd.f32 0.0, %v720
      %722 = vmatprep.mubr.bf16.mxu0 0
      %723 = vmatmul.mubr.bf16.gmra.mrb[0].mxu0 %v618
      %v724 = vpop.f32.mrb[0].mxu0
      %v725 = vadd.f32 0.0, %v724
      %v726 = vpop.f32.mrb[0].mxu0
      %v727 = vadd.f32 0.0, %v726
      %v728 = vpop.f32.mrb[0].mxu0
      %v729 = vadd.f32 0.0, %v728
      %v730 = vpop.f32.mrb[0].mxu0
      %v731 = vadd.f32 0.0, %v730
      %732 = vdwg.mxu0
      %733 = vmatprep.subr.bf16.mxu0 %v502
      %734 = vmatpush1.bf16.msra.mxu0 %v501
      %735 = vmatprep.subr.bf16.mxu0 %v526
      %736 = vmatpush1.bf16.msra.mxu0 %v525
      %737 = vmatprep.subr.bf16.mxu0 0
      %738 = vmatpush1.bf16.msra.mxu0 0
      %739 = vmatprep.subr.bf16.mxu0 0
      %740 = vmatpush1.bf16.msra.mxu0 0
      %741 = vmatprep.subr.bf16.mxu0 0
      %742 = vmatpush1.bf16.msra.mxu0 0
      %743 = vmatprep.subr.bf16.mxu0 0
      %744 = vmatpush1.bf16.msra.mxu0 0
      %745 = vmatprep.subr.bf16.mxu0 0
      %746 = vmatpush1.bf16.msra.mxu0 0
      %747 = vmatprep.subr.bf16.mxu0 0
      %748 = vmatpush1.bf16.msra.mxu0 0
      %749 = vmatprep.subr.bf16.mxu0 0
      %750 = vmatpush1.bf16.msra.mxu0 0
      %751 = vmatprep.subr.bf16.mxu0 0
      %752 = vmatpush1.bf16.msra.mxu0 0
      %753 = vmatprep.subr.bf16.mxu0 0
      %754 = vmatpush1.bf16.msra.mxu0 0
      %755 = vmatprep.subr.bf16.mxu0 0
      %756 = vmatpush1.bf16.msra.mxu0 0
      %757 = vmatprep.subr.bf16.mxu0 0
      %758 = vmatpush1.bf16.msra.mxu0 0
      %759 = vmatprep.subr.bf16.mxu0 0
      %760 = vmatpush1.bf16.msra.mxu0 0
      %761 = vmatprep.subr.bf16.mxu0 0
      %762 = vmatpush1.bf16.msra.mxu0 0
      %763 = vmatprep.subr.bf16.mxu0 0
      %764 = vmatpush1.bf16.msra.mxu0 0
      %765 = vmatprep.mubr.bf16.mxu0 0
      %766 = vmatmul.mubr.bf16.gmra.mrb[0].mxu0 %v597
      %v767 = vpop.f32.mrb[0].mxu0
      %v768 = vadd.f32 0.0, %v767
      %v769 = vpop.f32.mrb[0].mxu0
      %v770 = vadd.f32 0.0, %v769
      %v771 = vpop.f32.mrb[0].mxu0
      %v772 = vadd.f32 0.0, %v771
      %v773 = vpop.f32.mrb[0].mxu0
      %v774 = vadd.f32 0.0, %v773
      %775 = vmatprep.mubr.bf16.mxu0 0
      %776 = vmatmul.mubr.bf16.gmra.mrb[0].mxu0 %v600
      %v777 = vpop.f32.mrb[0].mxu0
      %v778 = vadd.f32 0.0, %v777
      %v779 = vpop.f32.mrb[0].mxu0
      %v780 = vadd.f32 0.0, %v779
      %v781 = vpop.f32.mrb[0].mxu0
      %v782 = vadd.f32 0.0, %v781
      %v783 = vpop.f32.mrb[0].mxu0
      %v784 = vadd.f32 0.0, %v783
      %785 = vmatprep.mubr.bf16.mxu0 0
      %786 = vmatmul.mubr.bf16.gmra.mrb[0].mxu0 %v603
      %v787 = vpop.f32.mrb[0].mxu0
      %v788 = vadd.f32 0.0, %v787
      %v789 = vpop.f32.mrb[0].mxu0
      %v790 = vadd.f32 0.0, %v789
      %v791 = vpop.f32.mrb[0].mxu0
      %v792 = vadd.f32 0.0, %v791
      %v793 = vpop.f32.mrb[0].mxu0
      %v794 = vadd.f32 0.0, %v793
      %795 = vmatprep.mubr.bf16.mxu0 0
      %796 = vmatmul.mubr.bf16.gmra.mrb[0].mxu0 %v606
      %v797 = vpop.f32.mrb[0].mxu0
      %v798 = vadd.f32 0.0, %v797
      %v799 = vpop.f32.mrb[0].mxu0
      %v800 = vadd.f32 0.0, %v799
      %v801 = vpop.f32.mrb[0].mxu0
      %v802 = vadd.f32 0.0, %v801
      %v803 = vpop.f32.mrb[0].mxu0
      %v804 = vadd.f32 0.0, %v803
      %805 = vmatprep.mubr.bf16.mxu0 0
      %806 = vmatmul.mubr.bf16.gmra.mrb[0].mxu0 %v609
      %v807 = vpop.f32.mrb[0].mxu0
      %v808 = vadd.f32 0.0, %v807
      %v809 = vpop.f32.mrb[0].mxu0
      %v810 = vadd.f32 0.0, %v809
      %v811 = vpop.f32.mrb[0].mxu0
      %v812 = vadd.f32 0.0, %v811
      %v813 = vpop.f32.mrb[0].mxu0
      %v814 = vadd.f32 0.0, %v813
      %815 = vmatprep.mubr.bf16.mxu0 0
      %816 = vmatmul.mubr.bf16.gmra.mrb[0].mxu0 %v612
      %v817 = vpop.f32.mrb[0].mxu0
      %v818 = vadd.f32 0.0, %v817
      %v819 = vpop.f32.mrb[0].mxu0
      %v820 = vadd.f32 0.0, %v819
      %v821 = vpop.f32.mrb[0].mxu0
      %v822 = vadd.f32 0.0, %v821
      %v823 = vpop.f32.mrb[0].mxu0
      %v824 = vadd.f32 0.0, %v823
      %825 = vmatprep.mubr.bf16.mxu0 0
      %826 = vmatmul.mubr.bf16.gmra.mrb[0].mxu0 %v615
      %v827 = vpop.f32.mrb[0].mxu0
      %v828 = vadd.f32 0.0, %v827
      %v829 = vpop.f32.mrb[0].mxu0
      %v830 = vadd.f32 0.0, %v829
      %v831 = vpop.f32.mrb[0].mxu0
      %v832 = vadd.f32 0.0, %v831
      %v833 = vpop.f32.mrb[0].mxu0
      %v834 = vadd.f32 0.0, %v833
      %835 = vmatprep.mubr.bf16.mxu0 0
      %836 = vmatmul.mubr.bf16.gmra.mrb[0].mxu0 %v618
      %v837 = vpop.f32.mrb[0].mxu0
      %v838 = vadd.f32 0.0, %v837
      %v839 = vpop.f32.mrb[0].mxu0
      %v840 = vadd.f32 0.0, %v839
      %v841 = vpop.f32.mrb[0].mxu0
      %v842 = vadd.f32 0.0, %v841
      %v843 = vpop.f32.mrb[0].mxu0
      %v844 = vadd.f32 0.0, %v843
      %845 = vdwg.mxu0
      %846 = vmatprep.subr.bf16.mxu0 %v504
      %847 = vmatpush1.bf16.msra.mxu0 %v503
      %848 = vmatprep.subr.bf16.mxu0 %v528
      %849 = vmatpush1.bf16.msra.mxu0 %v527
      %850 = vmatprep.subr.bf16.mxu0 0
      %851 = vmatpush1.bf16.msra.mxu0 0
      %852 = vmatprep.subr.bf16.mxu0 0
      %853 = vmatpush1.bf16.msra.mxu0 0
      %854 = vmatprep.subr.bf16.mxu0 0
      %855 = vmatpush1.bf16.msra.mxu0 0
      %856 = vmatprep.subr.bf16.mxu0 0
      %857 = vmatpush1.bf16.msra.mxu0 0
      %858 = vmatprep.subr.bf16.mxu0 0
      %859 = vmatpush1.bf16.msra.mxu0 0
      %860 = vmatprep.subr.bf16.mxu0 0
      %861 = vmatpush1.bf16.msra.mxu0 0
      %862 = vmatprep.subr.bf16.mxu0 0
      %863 = vmatpush1.bf16.msra.mxu0 0
      %864 = vmatprep.subr.bf16.mxu0 0
      %865 = vmatpush1.bf16.msra.mxu0 0
      %866 = vmatprep.subr.bf16.mxu0 0
      %867 = vmatpush1.bf16.msra.mxu0 0
      %868 = vmatprep.subr.bf16.mxu0 0
      %869 = vmatpush1.bf16.msra.mxu0 0
      %870 = vmatprep.subr.bf16.mxu0 0
      %871 = vmatpush1.bf16.msra.mxu0 0
      %872 = vmatprep.subr.bf16.mxu0 0
      %873 = vmatpush1.bf16.msra.mxu0 0
      %874 = vmatprep.subr.bf16.mxu0 0
      %875 = vmatpush1.bf16.msra.mxu0 0
      %876 = vmatprep.subr.bf16.mxu0 0
      %877 = vmatpush1.bf16.msra.mxu0 0
      %878 = vmatprep.mubr.bf16.mxu0 0
      %879 = vmatmul.mubr.bf16.gmra.mrb[0].mxu0 %v597
      %v880 = vpop.f32.mrb[0].mxu0
      %v881 = vadd.f32 0.0, %v880
      %v882 = vpop.f32.mrb[0].mxu0
      %v883 = vadd.f32 0.0, %v882
      %v884 = vpop.f32.mrb[0].mxu0
      %v885 = vadd.f32 0.0, %v884
      %v886 = vpop.f32.mrb[0].mxu0
      %v887 = vadd.f32 0.0, %v886
      %888 = vmatprep.mubr.bf16.mxu0 0
      %889 = vmatmul.mubr.bf16.gmra.mrb[0].mxu0 %v600
      %v890 = vpop.f32.mrb[0].mxu0
      %v891 = vadd.f32 0.0, %v890
      %v892 = vpop.f32.mrb[0].mxu0
      %v893 = vadd.f32 0.0, %v892
      %v894 = vpop.f32.mrb[0].mxu0
      %v895 = vadd.f32 0.0, %v894
      %v896 = vpop.f32.mrb[0].mxu0
      %v897 = vadd.f32 0.0, %v896
      %898 = vmatprep.mubr.bf16.mxu0 0
      %899 = vmatmul.mubr.bf16.gmra.mrb[0].mxu0 %v603
      %v900 = vpop.f32.mrb[0].mxu0
      %v901 = vadd.f32 0.0, %v900
      %v902 = vpop.f32.mrb[0].mxu0
      %v903 = vadd.f32 0.0, %v902
      %v904 = vpop.f32.mrb[0].mxu0
      %v905 = vadd.f32 0.0, %v904
      %v906 = vpop.f32.mrb[0].mxu0
      %v907 = vadd.f32 0.0, %v906
      %908 = vmatprep.mubr.bf16.mxu0 0
      %909 = vmatmul.mubr.bf16.gmra.mrb[0].mxu0 %v606
      %v910 = vpop.f32.mrb[0].mxu0
      %v911 = vadd.f32 0.0, %v910
      %v912 = vpop.f32.mrb[0].mxu0
      %v913 = vadd.f32 0.0, %v912
      %v914 = vpop.f32.mrb[0].mxu0
      %v915 = vadd.f32 0.0, %v914
      %v916 = vpop.f32.mrb[0].mxu0
      %v917 = vadd.f32 0.0, %v916
      %918 = vmatprep.mubr.bf16.mxu0 0
      %919 = vmatmul.mubr.bf16.gmra.mrb[0].mxu0 %v609
      %v920 = vpop.f32.mrb[0].mxu0
      %v921 = vadd.f32 0.0, %v920
      %v922 = vpop.f32.mrb[0].mxu0
      %v923 = vadd.f32 0.0, %v922
      %v924 = vpop.f32.mrb[0].mxu0
      %v925 = vadd.f32 0.0, %v924
      %v926 = vpop.f32.mrb[0].mxu0
      %v927 = vadd.f32 0.0, %v926
      %928 = vmatprep.mubr.bf16.mxu0 0
      %929 = vmatmul.mubr.bf16.gmra.mrb[0].mxu0 %v612
      %v930 = vpop.f32.mrb[0].mxu0
      %v931 = vadd.f32 0.0, %v930
      %v932 = vpop.f32.mrb[0].mxu0
      %v933 = vadd.f32 0.0, %v932
      %v934 = vpop.f32.mrb[0].mxu0
      %v935 = vadd.f32 0.0, %v934
      %v936 = vpop.f32.mrb[0].mxu0
      %v937 = vadd.f32 0.0, %v936
      %938 = vmatprep.mubr.bf16.mxu0 0
      %939 = vmatmul.mubr.bf16.gmra.mrb[0].mxu0 %v615
      %v940 = vpop.f32.mrb[0].mxu0
      %v941 = vadd.f32 0.0, %v940
      %v942 = vpop.f32.mrb[0].mxu0
      %v943 = vadd.f32 0.0, %v942
      %v944 = vpop.f32.mrb[0].mxu0
      %v945 = vadd.f32 0.0, %v944
      %v946 = vpop.f32.mrb[0].mxu0
      %v947 = vadd.f32 0.0, %v946
      %948 = vmatprep.mubr.bf16.mxu0 0
      %949 = vmatmul.mubr.bf16.gmra.mrb[0].mxu0 %v618
      %v950 = vpop.f32.mrb[0].mxu0
      %v951 = vadd.f32 0.0, %v950
      %v952 = vpop.f32.mrb[0].mxu0
      %v953 = vadd.f32 0.0, %v952
      %v954 = vpop.f32.mrb[0].mxu0
      %v955 = vadd.f32 0.0, %v954
      %v956 = vpop.f32.mrb[0].mxu0
      %v957 = vadd.f32 0.0, %v956
      %958 = vdwg.mxu0
      %959 = vmatprep.subr.bf16.mxu0 %v506
      %960 = vmatpush1.bf16.msra.mxu0 %v505
      %961 = vmatprep.subr.bf16.mxu0 %v530
      %962 = vmatpush1.bf16.msra.mxu0 %v529
      %963 = vmatprep.subr.bf16.mxu0 0
      %964 = vmatpush1.bf16.msra.mxu0 0
      %965 = vmatprep.subr.bf16.mxu0 0
      %966 = vmatpush1.bf16.msra.mxu0 0
      %967 = vmatprep.subr.bf16.mxu0 0
      %968 = vmatpush1.bf16.msra.mxu0 0
      %969 = vmatprep.subr.bf16.mxu0 0
      %970 = vmatpush1.bf16.msra.mxu0 0
      %971 = vmatprep.subr.bf16.mxu0 0
      %972 = vmatpush1.bf16.msra.mxu0 0
      %973 = vmatprep.subr.bf16.mxu0 0
      %974 = vmatpush1.bf16.msra.mxu0 0
      %975 = vmatprep.subr.bf16.mxu0 0
      %976 = vmatpush1.bf16.msra.mxu0 0
      %977 = vmatprep.subr.bf16.mxu0 0
      %978 = vmatpush1.bf16.msra.mxu0 0
      %979 = vmatprep.subr.bf16.mxu0 0
      %980 = vmatpush1.bf16.msra.mxu0 0
      %981 = vmatprep.subr.bf16.mxu0 0
      %982 = vmatpush1.bf16.msra.mxu0 0
      %983 = vmatprep.subr.bf16.mxu0 0
      %984 = vmatpush1.bf16.msra.mxu0 0
      %985 = vmatprep.subr.bf16.mxu0 0
      %986 = vmatpush1.bf16.msra.mxu0 0
      %987 = vmatprep.subr.bf16.mxu0 0
      %988 = vmatpush1.bf16.msra.mxu0 0
      %989 = vmatprep.subr.bf16.mxu0 0
      %990 = vmatpush1.bf16.msra.mxu0 0
      %991 = vmatprep.mubr.bf16.mxu0 0
      %992 = vmatmul.mubr.bf16.gmra.mrb[0].mxu0 %v597
      %v993 = vpop.f32.mrb[0].mxu0
      %v994 = vadd.f32 0.0, %v993
      %v995 = vpop.f32.mrb[0].mxu0
      %v996 = vadd.f32 0.0, %v995
      %v997 = vpop.f32.mrb[0].mxu0
      %v998 = vadd.f32 0.0, %v997
      %v999 = vpop.f32.mrb[0].mxu0
      %v1000 = vadd.f32 0.0, %v999
      %1001 = vmatprep.mubr.bf16.mxu0 0
      %1002 = vmatmul.mubr.bf16.gmra.mrb[0].mxu0 %v600
      %v1003 = vpop.f32.mrb[0].mxu0
      %v1004 = vadd.f32 0.0, %v1003
      %v1005 = vpop.f32.mrb[0].mxu0
      %v1006 = vadd.f32 0.0, %v1005
      %v1007 = vpop.f32.mrb[0].mxu0
      %v1008 = vadd.f32 0.0, %v1007
      %v1009 = vpop.f32.mrb[0].mxu0
      %v1010 = vadd.f32 0.0, %v1009
      %1011 = vmatprep.mubr.bf16.mxu0 0
      %1012 = vmatmul.mubr.bf16.gmra.mrb[0].mxu0 %v603
      %v1013 = vpop.f32.mrb[0].mxu0
      %v1014 = vadd.f32 0.0, %v1013
      %v1015 = vpop.f32.mrb[0].mxu0
      %v1016 = vadd.f32 0.0, %v1015
      %v1017 = vpop.f32.mrb[0].mxu0
      %v1018 = vadd.f32 0.0, %v1017
      %v1019 = vpop.f32.mrb[0].mxu0
      %v1020 = vadd.f32 0.0, %v1019
      %1021 = vmatprep.mubr.bf16.mxu0 0
      %1022 = vmatmul.mubr.bf16.gmra.mrb[0].mxu0 %v606
      %v1023 = vpop.f32.mrb[0].mxu0
      %v1024 = vadd.f32 0.0, %v1023
      %v1025 = vpop.f32.mrb[0].mxu0
      %v1026 = vadd.f32 0.0, %v1025
      %v1027 = vpop.f32.mrb[0].mxu0
      %v1028 = vadd.f32 0.0, %v1027
      %v1029 = vpop.f32.mrb[0].mxu0
      %v1030 = vadd.f32 0.0, %v1029
      %1031 = vmatprep.mubr.bf16.mxu0 0
      %1032 = vmatmul.mubr.bf16.gmra.mrb[0].mxu0 %v609
      %v1033 = vpop.f32.mrb[0].mxu0
      %v1034 = vadd.f32 0.0, %v1033
      %v1035 = vpop.f32.mrb[0].mxu0
      %v1036 = vadd.f32 0.0, %v1035
      %v1037 = vpop.f32.mrb[0].mxu0
      %v1038 = vadd.f32 0.0, %v1037
      %v1039 = vpop.f32.mrb[0].mxu0
      %v1040 = vadd.f32 0.0, %v1039
      %1041 = vmatprep.mubr.bf16.mxu0 0
      %1042 = vmatmul.mubr.bf16.gmra.mrb[0].mxu0 %v612
      %v1043 = vpop.f32.mrb[0].mxu0
      %v1044 = vadd.f32 0.0, %v1043
      %v1045 = vpop.f32.mrb[0].mxu0
      %v1046 = vadd.f32 0.0, %v1045
      %v1047 = vpop.f32.mrb[0].mxu0
      %v1048 = vadd.f32 0.0, %v1047
      %v1049 = vpop.f32.mrb[0].mxu0
      %v1050 = vadd.f32 0.0, %v1049
      %1051 = vmatprep.mubr.bf16.mxu0 0
      %1052 = vmatmul.mubr.bf16.gmra.mrb[0].mxu0 %v615
      %v1053 = vpop.f32.mrb[0].mxu0
      %v1054 = vadd.f32 0.0, %v1053
      %v1055 = vpop.f32.mrb[0].mxu0
      %v1056 = vadd.f32 0.0, %v1055
      %v1057 = vpop.f32.mrb[0].mxu0
      %v1058 = vadd.f32 0.0, %v1057
      %v1059 = vpop.f32.mrb[0].mxu0
      %v1060 = vadd.f32 0.0, %v1059
      %1061 = vmatprep.mubr.bf16.mxu0 0
      %1062 = vmatmul.mubr.bf16.gmra.mrb[0].mxu0 %v618
      %v1063 = vpop.f32.mrb[0].mxu0
      %v1064 = vadd.f32 0.0, %v1063
      %v1065 = vpop.f32.mrb[0].mxu0
      %v1066 = vadd.f32 0.0, %v1065
      %v1067 = vpop.f32.mrb[0].mxu0
      %v1068 = vadd.f32 0.0, %v1067
      %v1069 = vpop.f32.mrb[0].mxu0
      %v1070 = vadd.f32 0.0, %v1069
      %1071 = vdwg.mxu0
      %1072 = vmatprep.subr.bf16.mxu0 %v508
      %1073 = vmatpush1.bf16.msra.mxu0 %v507
      %1074 = vmatprep.subr.bf16.mxu0 %v532
      %1075 = vmatpush1.bf16.msra.mxu0 %v531
      %1076 = vmatprep.subr.bf16.mxu0 0
      %1077 = vmatpush1.bf16.msra.mxu0 0
      %1078 = vmatprep.subr.bf16.mxu0 0
      %1079 = vmatpush1.bf16.msra.mxu0 0
      %1080 = vmatprep.subr.bf16.mxu0 0
      %1081 = vmatpush1.bf16.msra.mxu0 0
      %1082 = vmatprep.subr.bf16.mxu0 0
      %1083 = vmatpush1.bf16.msra.mxu0 0
      %1084 = vmatprep.subr.bf16.mxu0 0
      %1085 = vmatpush1.bf16.msra.mxu0 0
      %1086 = vmatprep.subr.bf16.mxu0 0
      %1087 = vmatpush1.bf16.msra.mxu0 0
      %1088 = vmatprep.subr.bf16.mxu0 0
      %1089 = vmatpush1.bf16.msra.mxu0 0
      %1090 = vmatprep.subr.bf16.mxu0 0
      %1091 = vmatpush1.bf16.msra.mxu0 0
      %1092 = vmatprep.subr.bf16.mxu0 0
      %1093 = vmatpush1.bf16.msra.mxu0 0
      %1094 = vmatprep.subr.bf16.mxu0 0
      %1095 = vmatpush1.bf16.msra.mxu0 0
      %1096 = vmatprep.subr.bf16.mxu0 0
      %1097 = vmatpush1.bf16.msra.mxu0 0
      %1098 = vmatprep.subr.bf16.mxu0 0
      %1099 = vmatpush1.bf16.msra.mxu0 0
      %1100 = vmatprep.subr.bf16.mxu0 0
      %1101 = vmatpush1.bf16.msra.mxu0 0
      %1102 = vmatprep.subr.bf16.mxu0 0
      %1103 = vmatpush1.bf16.msra.mxu0 0
      %1104 = vmatprep.mubr.bf16.mxu0 0
      %1105 = vmatmul.mubr.bf16.gmra.mrb[0].mxu0 %v597
      %v1106 = vpop.f32.mrb[0].mxu0
      %v1107 = vadd.f32 0.0, %v1106
      %v1108 = vpop.f32.mrb[0].mxu0
      %v1109 = vadd.f32 0.0, %v1108
      %v1110 = vpop.f32.mrb[0].mxu0
      %v1111 = vadd.f32 0.0, %v1110
      %v1112 = vpop.f32.mrb[0].mxu0
      %v1113 = vadd.f32 0.0, %v1112
      %1114 = vmatprep.mubr.bf16.mxu0 0
      %1115 = vmatmul.mubr.bf16.gmra.mrb[0].mxu0 %v600
      %v1116 = vpop.f32.mrb[0].mxu0
      %v1117 = vadd.f32 0.0, %v1116
      %v1118 = vpop.f32.mrb[0].mxu0
      %v1119 = vadd.f32 0.0, %v1118
      %v1120 = vpop.f32.mrb[0].mxu0
      %v1121 = vadd.f32 0.0, %v1120
      %v1122 = vpop.f32.mrb[0].mxu0
      %v1123 = vadd.f32 0.0, %v1122
      %1124 = vmatprep.mubr.bf16.mxu0 0
      %1125 = vmatmul.mubr.bf16.gmra.mrb[0].mxu0 %v603
      %v1126 = vpop.f32.mrb[0].mxu0
      %v1127 = vadd.f32 0.0, %v1126
      %v1128 = vpop.f32.mrb[0].mxu0
      %v1129 = vadd.f32 0.0, %v1128
      %v1130 = vpop.f32.mrb[0].mxu0
      %v1131 = vadd.f32 0.0, %v1130
      %v1132 = vpop.f32.mrb[0].mxu0
      %v1133 = vadd.f32 0.0, %v1132
      %1134 = vmatprep.mubr.bf16.mxu0 0
      %1135 = vmatmul.mubr.bf16.gmra.mrb[0].mxu0 %v606
      %v1136 = vpop.f32.mrb[0].mxu0
      %v1137 = vadd.f32 0.0, %v1136
      %v1138 = vpop.f32.mrb[0].mxu0
      %v1139 = vadd.f32 0.0, %v1138
      %v1140 = vpop.f32.mrb[0].mxu0
      %v1141 = vadd.f32 0.0, %v1140
      %v1142 = vpop.f32.mrb[0].mxu0
      %v1143 = vadd.f32 0.0, %v1142
      %1144 = vmatprep.mubr.bf16.mxu0 0
      %1145 = vmatmul.mubr.bf16.gmra.mrb[0].mxu0 %v609
      %v1146 = vpop.f32.mrb[0].mxu0
      %v1147 = vadd.f32 0.0, %v1146
      %v1148 = vpop.f32.mrb[0].mxu0
      %v1149 = vadd.f32 0.0, %v1148
      %v1150 = vpop.f32.mrb[0].mxu0
      %v1151 = vadd.f32 0.0, %v1150
      %v1152 = vpop.f32.mrb[0].mxu0
      %v1153 = vadd.f32 0.0, %v1152
      %1154 = vmatprep.mubr.bf16.mxu0 0
      %1155 = vmatmul.mubr.bf16.gmra.mrb[0].mxu0 %v612
      %v1156 = vpop.f32.mrb[0].mxu0
      %v1157 = vadd.f32 0.0, %v1156
      %v1158 = vpop.f32.mrb[0].mxu0
      %v1159 = vadd.f32 0.0, %v1158
      %v1160 = vpop.f32.mrb[0].mxu0
      %v1161 = vadd.f32 0.0, %v1160
      %v1162 = vpop.f32.mrb[0].mxu0
      %v1163 = vadd.f32 0.0, %v1162
      %1164 = vmatprep.mubr.bf16.mxu0 0
      %1165 = vmatmul.mubr.bf16.gmra.mrb[0].mxu0 %v615
      %v1166 = vpop.f32.mrb[0].mxu0
      %v1167 = vadd.f32 0.0, %v1166
      %v1168 = vpop.f32.mrb[0].mxu0
      %v1169 = vadd.f32 0.0, %v1168
      %v1170 = vpop.f32.mrb[0].mxu0
      %v1171 = vadd.f32 0.0, %v1170
      %v1172 = vpop.f32.mrb[0].mxu0
      %v1173 = vadd.f32 0.0, %v1172
      %1174 = vmatprep.mubr.bf16.mxu0 0
      %1175 = vmatmul.mubr.bf16.gmra.mrb[0].mxu0 %v618
      %v1176 = vpop.f32.mrb[0].mxu0
      %v1177 = vadd.f32 0.0, %v1176
      %v1178 = vpop.f32.mrb[0].mxu0
      %v1179 = vadd.f32 0.0, %v1178
      %v1180 = vpop.f32.mrb[0].mxu0
      %v1181 = vadd.f32 0.0, %v1180
      %v1182 = vpop.f32.mrb[0].mxu0
      %v1183 = vadd.f32 0.0, %v1182
      %1184 = vdwg.mxu0
      %1185 = vmatprep.subr.bf16.mxu0 %v510
      %1186 = vmatpush1.bf16.msra.mxu0 %v509
      %1187 = vmatprep.subr.bf16.mxu0 %v534
      %1188 = vmatpush1.bf16.msra.mxu0 %v533
      %1189 = vmatprep.subr.bf16.mxu0 0
      %1190 = vmatpush1.bf16.msra.mxu0 0
      %1191 = vmatprep.subr.bf16.mxu0 0
      %1192 = vmatpush1.bf16.msra.mxu0 0
      %1193 = vmatprep.subr.bf16.mxu0 0
      %1194 = vmatpush1.bf16.msra.mxu0 0
      %1195 = vmatprep.subr.bf16.mxu0 0
      %1196 = vmatpush1.bf16.msra.mxu0 0
      %1197 = vmatprep.subr.bf16.mxu0 0
      %1198 = vmatpush1.bf16.msra.mxu0 0
      %1199 = vmatprep.subr.bf16.mxu0 0
      %1200 = vmatpush1.bf16.msra.mxu0 0
      %1201 = vmatprep.subr.bf16.mxu0 0
      %1202 = vmatpush1.bf16.msra.mxu0 0
      %1203 = vmatprep.subr.bf16.mxu0 0
      %1204 = vmatpush1.bf16.msra.mxu0 0
      %1205 = vmatprep.subr.bf16.mxu0 0
      %1206 = vmatpush1.bf16.msra.mxu0 0
      %1207 = vmatprep.subr.bf16.mxu0 0
      %1208 = vmatpush1.bf16.msra.mxu0 0
      %1209 = vmatprep.subr.bf16.mxu0 0
      %1210 = vmatpush1.bf16.msra.mxu0 0
      %1211 = vmatprep.subr.bf16.mxu0 0
      %1212 = vmatpush1.bf16.msra.mxu0 0
      %1213 = vmatprep.subr.bf16.mxu0 0
      %1214 = vmatpush1.bf16.msra.mxu0 0
      %1215 = vmatprep.subr.bf16.mxu0 0
      %1216 = vmatpush1.bf16.msra.mxu0 0
      %1217 = vmatprep.mubr.bf16.mxu0 0
      %1218 = vmatmul.mubr.bf16.gmra.mrb[0].mxu0 %v597
      %v1219 = vpop.f32.mrb[0].mxu0
      %v1220 = vadd.f32 0.0, %v1219
      %v1221 = vpop.f32.mrb[0].mxu0
      %v1222 = vadd.f32 0.0, %v1221
      %v1223 = vpop.f32.mrb[0].mxu0
      %v1224 = vadd.f32 0.0, %v1223
      %v1225 = vpop.f32.mrb[0].mxu0
      %v1226 = vadd.f32 0.0, %v1225
      %1227 = vmatprep.mubr.bf16.mxu0 0
      %1228 = vmatmul.mubr.bf16.gmra.mrb[0].mxu0 %v600
      %v1229 = vpop.f32.mrb[0].mxu0
      %v1230 = vadd.f32 0.0, %v1229
      %v1231 = vpop.f32.mrb[0].mxu0
      %v1232 = vadd.f32 0.0, %v1231
      %v1233 = vpop.f32.mrb[0].mxu0
      %v1234 = vadd.f32 0.0, %v1233
      %v1235 = vpop.f32.mrb[0].mxu0
      %v1236 = vadd.f32 0.0, %v1235
      %1237 = vmatprep.mubr.bf16.mxu0 0
      %1238 = vmatmul.mubr.bf16.gmra.mrb[0].mxu0 %v603
      %v1239 = vpop.f32.mrb[0].mxu0
      %v1240 = vadd.f32 0.0, %v1239
      %v1241 = vpop.f32.mrb[0].mxu0
      %v1242 = vadd.f32 0.0, %v1241
      %v1243 = vpop.f32.mrb[0].mxu0
      %v1244 = vadd.f32 0.0, %v1243
      %v1245 = vpop.f32.mrb[0].mxu0
      %v1246 = vadd.f32 0.0, %v1245
      %1247 = vmatprep.mubr.bf16.mxu0 0
      %1248 = vmatmul.mubr.bf16.gmra.mrb[0].mxu0 %v606
      %v1249 = vpop.f32.mrb[0].mxu0
      %v1250 = vadd.f32 0.0, %v1249
      %v1251 = vpop.f32.mrb[0].mxu0
      %v1252 = vadd.f32 0.0, %v1251
      %v1253 = vpop.f32.mrb[0].mxu0
      %v1254 = vadd.f32 0.0, %v1253
      %v1255 = vpop.f32.mrb[0].mxu0
      %v1256 = vadd.f32 0.0, %v1255
      %1257 = vmatprep.mubr.bf16.mxu0 0
      %1258 = vmatmul.mubr.bf16.gmra.mrb[0].mxu0 %v609
      %v1259 = vpop.f32.mrb[0].mxu0
      %v1260 = vadd.f32 0.0, %v1259
      %v1261 = vpop.f32.mrb[0].mxu0
      %v1262 = vadd.f32 0.0, %v1261
      %v1263 = vpop.f32.mrb[0].mxu0
      %v1264 = vadd.f32 0.0, %v1263
      %v1265 = vpop.f32.mrb[0].mxu0
      %v1266 = vadd.f32 0.0, %v1265
      %1267 = vmatprep.mubr.bf16.mxu0 0
      %1268 = vmatmul.mubr.bf16.gmra.mrb[0].mxu0 %v612
      %v1269 = vpop.f32.mrb[0].mxu0
      %v1270 = vadd.f32 0.0, %v1269
      %v1271 = vpop.f32.mrb[0].mxu0
      %v1272 = vadd.f32 0.0, %v1271
      %v1273 = vpop.f32.mrb[0].mxu0
      %v1274 = vadd.f32 0.0, %v1273
      %v1275 = vpop.f32.mrb[0].mxu0
      %v1276 = vadd.f32 0.0, %v1275
      %1277 = vmatprep.mubr.bf16.mxu0 0
      %1278 = vmatmul.mubr.bf16.gmra.mrb[0].mxu0 %v615
      %v1279 = vpop.f32.mrb[0].mxu0
      %v1280 = vadd.f32 0.0, %v1279
      %v1281 = vpop.f32.mrb[0].mxu0
      %v1282 = vadd.f32 0.0, %v1281
      %v1283 = vpop.f32.mrb[0].mxu0
      %v1284 = vadd.f32 0.0, %v1283
      %v1285 = vpop.f32.mrb[0].mxu0
      %v1286 = vadd.f32 0.0, %v1285
      %1287 = vmatprep.mubr.bf16.mxu0 0
      %1288 = vmatmul.mubr.bf16.gmra.mrb[0].mxu0 %v618
      %v1289 = vpop.f32.mrb[0].mxu0
      %v1290 = vadd.f32 0.0, %v1289
      %v1291 = vpop.f32.mrb[0].mxu0
      %v1292 = vadd.f32 0.0, %v1291
      %v1293 = vpop.f32.mrb[0].mxu0
      %v1294 = vadd.f32 0.0, %v1293
      %v1295 = vpop.f32.mrb[0].mxu0
      %v1296 = vadd.f32 0.0, %v1295
      %1297 = vdwg.mxu0
      %1298 = vmatprep.subr.bf16.mxu0 %v512
      %1299 = vmatpush1.bf16.msra.mxu0 %v511
      %1300 = vmatprep.subr.bf16.mxu0 %v536
      %1301 = vmatpush1.bf16.msra.mxu0 %v535
      %1302 = vmatprep.subr.bf16.mxu0 0
      %1303 = vmatpush1.bf16.msra.mxu0 0
      %1304 = vmatprep.subr.bf16.mxu0 0
      %1305 = vmatpush1.bf16.msra.mxu0 0
      %1306 = vmatprep.subr.bf16.mxu0 0
      %1307 = vmatpush1.bf16.msra.mxu0 0
      %1308 = vmatprep.subr.bf16.mxu0 0
      %1309 = vmatpush1.bf16.msra.mxu0 0
      %1310 = vmatprep.subr.bf16.mxu0 0
      %1311 = vmatpush1.bf16.msra.mxu0 0
      %1312 = vmatprep.subr.bf16.mxu0 0
      %1313 = vmatpush1.bf16.msra.mxu0 0
      %1314 = vmatprep.subr.bf16.mxu0 0
      %1315 = vmatpush1.bf16.msra.mxu0 0
      %1316 = vmatprep.subr.bf16.mxu0 0
      %1317 = vmatpush1.bf16.msra.mxu0 0
      %1318 = vmatprep.subr.bf16.mxu0 0
      %1319 = vmatpush1.bf16.msra.mxu0 0
      %1320 = vmatprep.subr.bf16.mxu0 0
      %1321 = vmatpush1.bf16.msra.mxu0 0
      %1322 = vmatprep.subr.bf16.mxu0 0
      %1323 = vmatpush1.bf16.msra.mxu0 0
      %1324 = vmatprep.subr.bf16.mxu0 0
      %1325 = vmatpush1.bf16.msra.mxu0 0
      %1326 = vmatprep.subr.bf16.mxu0 0
      %1327 = vmatpush1.bf16.msra.mxu0 0
      %1328 = vmatprep.subr.bf16.mxu0 0
      %1329 = vmatpush1.bf16.msra.mxu0 0
      %1330 = vmatprep.mubr.bf16.mxu0 0
      %1331 = vmatmul.mubr.bf16.gmra.mrb[0].mxu0 %v597
      %v1332 = vpop.f32.mrb[0].mxu0
      %v1333 = vadd.f32 0.0, %v1332
      %v1334 = vpop.f32.mrb[0].mxu0
      %v1335 = vadd.f32 0.0, %v1334
      %v1336 = vpop.f32.mrb[0].mxu0
      %v1337 = vadd.f32 0.0, %v1336
      %v1338 = vpop.f32.mrb[0].mxu0
      %v1339 = vadd.f32 0.0, %v1338
      %1340 = vmatprep.mubr.bf16.mxu0 0
      %1341 = vmatmul.mubr.bf16.gmra.mrb[0].mxu0 %v600
      %v1342 = vpop.f32.mrb[0].mxu0
      %v1343 = vadd.f32 0.0, %v1342
      %v1344 = vpop.f32.mrb[0].mxu0
      %v1345 = vadd.f32 0.0, %v1344
      %v1346 = vpop.f32.mrb[0].mxu0
      %v1347 = vadd.f32 0.0, %v1346
      %v1348 = vpop.f32.mrb[0].mxu0
      %v1349 = vadd.f32 0.0, %v1348
      %1350 = vmatprep.mubr.bf16.mxu0 0
      %1351 = vmatmul.mubr.bf16.gmra.mrb[0].mxu0 %v603
      %v1352 = vpop.f32.mrb[0].mxu0
      %v1353 = vadd.f32 0.0, %v1352
      %v1354 = vpop.f32.mrb[0].mxu0
      %v1355 = vadd.f32 0.0, %v1354
      %v1356 = vpop.f32.mrb[0].mxu0
      %v1357 = vadd.f32 0.0, %v1356
      %v1358 = vpop.f32.mrb[0].mxu0
      %v1359 = vadd.f32 0.0, %v1358
      %1360 = vmatprep.mubr.bf16.mxu0 0
      %1361 = vmatmul.mubr.bf16.gmra.mrb[0].mxu0 %v606
      %v1362 = vpop.f32.mrb[0].mxu0
      %v1363 = vadd.f32 0.0, %v1362
      %v1364 = vpop.f32.mrb[0].mxu0
      %v1365 = vadd.f32 0.0, %v1364
      %v1366 = vpop.f32.mrb[0].mxu0
      %v1367 = vadd.f32 0.0, %v1366
      %v1368 = vpop.f32.mrb[0].mxu0
      %v1369 = vadd.f32 0.0, %v1368
      %1370 = vmatprep.mubr.bf16.mxu0 0
      %1371 = vmatmul.mubr.bf16.gmra.mrb[0].mxu0 %v609
      %v1372 = vpop.f32.mrb[0].mxu0
      %v1373 = vadd.f32 0.0, %v1372
      %v1374 = vpop.f32.mrb[0].mxu0
      %v1375 = vadd.f32 0.0, %v1374
      %v1376 = vpop.f32.mrb[0].mxu0
      %v1377 = vadd.f32 0.0, %v1376
      %v1378 = vpop.f32.mrb[0].mxu0
      %v1379 = vadd.f32 0.0, %v1378
      %1380 = vmatprep.mubr.bf16.mxu0 0
      %1381 = vmatmul.mubr.bf16.gmra.mrb[0].mxu0 %v612
      %v1382 = vpop.f32.mrb[0].mxu0
      %v1383 = vadd.f32 0.0, %v1382
      %v1384 = vpop.f32.mrb[0].mxu0
      %v1385 = vadd.f32 0.0, %v1384
      %v1386 = vpop.f32.mrb[0].mxu0
      %v1387 = vadd.f32 0.0, %v1386
      %v1388 = vpop.f32.mrb[0].mxu0
      %v1389 = vadd.f32 0.0, %v1388
      %1390 = vmatprep.mubr.bf16.mxu0 0
      %1391 = vmatmul.mubr.bf16.gmra.mrb[0].mxu0 %v615
      %v1392 = vpop.f32.mrb[0].mxu0
      %v1393 = vadd.f32 0.0, %v1392
      %v1394 = vpop.f32.mrb[0].mxu0
      %v1395 = vadd.f32 0.0, %v1394
      %v1396 = vpop.f32.mrb[0].mxu0
      %v1397 = vadd.f32 0.0, %v1396
      %v1398 = vpop.f32.mrb[0].mxu0
      %v1399 = vadd.f32 0.0, %v1398
      %1400 = vmatprep.mubr.bf16.mxu0 0
      %1401 = vmatmul.mubr.bf16.gmra.mrb[0].mxu0 %v618
      %v1402 = vpop.f32.mrb[0].mxu0
      %v1403 = vadd.f32 0.0, %v1402
      %v1404 = vpop.f32.mrb[0].mxu0
      %v1405 = vadd.f32 0.0, %v1404
      %v1406 = vpop.f32.mrb[0].mxu0
      %v1407 = vadd.f32 0.0, %v1406
      %v1408 = vpop.f32.mrb[0].mxu0
      %v1409 = vadd.f32 0.0, %v1408
      %1410 = vdwg.mxu0
      %1411 = vmatprep.subr.bf16.mxu0 %v514
      %1412 = vmatpush1.bf16.msra.mxu0 %v513
      %1413 = vmatprep.subr.bf16.mxu0 %v538
      %1414 = vmatpush1.bf16.msra.mxu0 %v537
      %1415 = vmatprep.subr.bf16.mxu0 0
      %1416 = vmatpush1.bf16.msra.mxu0 0
      %1417 = vmatprep.subr.bf16.mxu0 0
      %1418 = vmatpush1.bf16.msra.mxu0 0
      %1419 = vmatprep.subr.bf16.mxu0 0
      %1420 = vmatpush1.bf16.msra.mxu0 0
      %1421 = vmatprep.subr.bf16.mxu0 0
      %1422 = vmatpush1.bf16.msra.mxu0 0
      %1423 = vmatprep.subr.bf16.mxu0 0
      %1424 = vmatpush1.bf16.msra.mxu0 0
      %1425 = vmatprep.subr.bf16.mxu0 0
      %1426 = vmatpush1.bf16.msra.mxu0 0
      %1427 = vmatprep.subr.bf16.mxu0 0
      %1428 = vmatpush1.bf16.msra.mxu0 0
      %1429 = vmatprep.subr.bf16.mxu0 0
      %1430 = vmatpush1.bf16.msra.mxu0 0
      %1431 = vmatprep.subr.bf16.mxu0 0
      %1432 = vmatpush1.bf16.msra.mxu0 0
      %1433 = vmatprep.subr.bf16.mxu0 0
      %1434 = vmatpush1.bf16.msra.mxu0 0
      %1435 = vmatprep.subr.bf16.mxu0 0
      %1436 = vmatpush1.bf16.msra.mxu0 0
      %1437 = vmatprep.subr.bf16.mxu0 0
      %1438 = vmatpush1.bf16.msra.mxu0 0
      %1439 = vmatprep.subr.bf16.mxu0 0
      %1440 = vmatpush1.bf16.msra.mxu0 0
      %1441 = vmatprep.subr.bf16.mxu0 0
      %1442 = vmatpush1.bf16.msra.mxu0 0
      %1443 = vmatprep.mubr.bf16.mxu0 0
      %1444 = vmatmul.mubr.bf16.gmra.mrb[0].mxu0 %v597
      %v1445 = vpop.f32.mrb[0].mxu0
      %v1446 = vadd.f32 0.0, %v1445
      %v1447 = vpop.f32.mrb[0].mxu0
      %v1448 = vadd.f32 0.0, %v1447
      %v1449 = vpop.f32.mrb[0].mxu0
      %v1450 = vadd.f32 0.0, %v1449
      %v1451 = vpop.f32.mrb[0].mxu0
      %v1452 = vadd.f32 0.0, %v1451
      %1453 = vmatprep.mubr.bf16.mxu0 0
      %1454 = vmatmul.mubr.bf16.gmra.mrb[0].mxu0 %v600
      %v1455 = vpop.f32.mrb[0].mxu0
      %v1456 = vadd.f32 0.0, %v1455
      %v1457 = vpop.f32.mrb[0].mxu0
      %v1458 = vadd.f32 0.0, %v1457
      %v1459 = vpop.f32.mrb[0].mxu0
      %v1460 = vadd.f32 0.0, %v1459
      %v1461 = vpop.f32.mrb[0].mxu0
      %v1462 = vadd.f32 0.0, %v1461
      %1463 = vmatprep.mubr.bf16.mxu0 0
      %1464 = vmatmul.mubr.bf16.gmra.mrb[0].mxu0 %v603
      %v1465 = vpop.f32.mrb[0].mxu0
      %v1466 = vadd.f32 0.0, %v1465
      %v1467 = vpop.f32.mrb[0].mxu0
      %v1468 = vadd.f32 0.0, %v1467
      %v1469 = vpop.f32.mrb[0].mxu0
      %v1470 = vadd.f32 0.0, %v1469
      %v1471 = vpop.f32.mrb[0].mxu0
      %v1472 = vadd.f32 0.0, %v1471
      %1473 = vmatprep.mubr.bf16.mxu0 0
      %1474 = vmatmul.mubr.bf16.gmra.mrb[0].mxu0 %v606
      %v1475 = vpop.f32.mrb[0].mxu0
      %v1476 = vadd.f32 0.0, %v1475
      %v1477 = vpop.f32.mrb[0].mxu0
      %v1478 = vadd.f32 0.0, %v1477
      %v1479 = vpop.f32.mrb[0].mxu0
      %v1480 = vadd.f32 0.0, %v1479
      %v1481 = vpop.f32.mrb[0].mxu0
      %v1482 = vadd.f32 0.0, %v1481
      %1483 = vmatprep.mubr.bf16.mxu0 0
      %1484 = vmatmul.mubr.bf16.gmra.mrb[0].mxu0 %v609
      %v1485 = vpop.f32.mrb[0].mxu0
      %v1486 = vadd.f32 0.0, %v1485
      %v1487 = vpop.f32.mrb[0].mxu0
      %v1488 = vadd.f32 0.0, %v1487
      %v1489 = vpop.f32.mrb[0].mxu0
      %v1490 = vadd.f32 0.0, %v1489
      %v1491 = vpop.f32.mrb[0].mxu0
      %v1492 = vadd.f32 0.0, %v1491
      %1493 = vmatprep.mubr.bf16.mxu0 0
      %1494 = vmatmul.mubr.bf16.gmra.mrb[0].mxu0 %v612
      %v1495 = vpop.f32.mrb[0].mxu0
      %v1496 = vadd.f32 0.0, %v1495
      %v1497 = vpop.f32.mrb[0].mxu0
      %v1498 = vadd.f32 0.0, %v1497
      %v1499 = vpop.f32.mrb[0].mxu0
      %v1500 = vadd.f32 0.0, %v1499
      %v1501 = vpop.f32.mrb[0].mxu0
      %v1502 = vadd.f32 0.0, %v1501
      %1503 = vmatprep.mubr.bf16.mxu0 0
      %1504 = vmatmul.mubr.bf16.gmra.mrb[0].mxu0 %v615
      %v1505 = vpop.f32.mrb[0].mxu0
      %v1506 = vadd.f32 0.0, %v1505
      %v1507 = vpop.f32.mrb[0].mxu0
      %v1508 = vadd.f32 0.0, %v1507
      %v1509 = vpop.f32.mrb[0].mxu0
      %v1510 = vadd.f32 0.0, %v1509
      %v1511 = vpop.f32.mrb[0].mxu0
      %v1512 = vadd.f32 0.0, %v1511
      %1513 = vmatprep.mubr.bf16.mxu0 0
      %1514 = vmatmul.mubr.bf16.gmra.mrb[0].mxu0 %v618
      %v1515 = vpop.f32.mrb[0].mxu0
      %v1516 = vadd.f32 0.0, %v1515
      %v1517 = vpop.f32.mrb[0].mxu0
      %v1518 = vadd.f32 0.0, %v1517
      %v1519 = vpop.f32.mrb[0].mxu0
      %v1520 = vadd.f32 0.0, %v1519
      %v1521 = vpop.f32.mrb[0].mxu0
      %v1522 = vadd.f32 0.0, %v1521
      %1523 = vdwg.mxu0
      %1524 = vmatprep.subr.bf16.mxu0 %v516
      %1525 = vmatpush1.bf16.msra.mxu0 %v515
      %1526 = vmatprep.subr.bf16.mxu0 %v540
      %1527 = vmatpush1.bf16.msra.mxu0 %v539
      %1528 = vmatprep.subr.bf16.mxu0 0
      %1529 = vmatpush1.bf16.msra.mxu0 0
      %1530 = vmatprep.subr.bf16.mxu0 0
      %1531 = vmatpush1.bf16.msra.mxu0 0
      %1532 = vmatprep.subr.bf16.mxu0 0
      %1533 = vmatpush1.bf16.msra.mxu0 0
      %1534 = vmatprep.subr.bf16.mxu0 0
      %1535 = vmatpush1.bf16.msra.mxu0 0
      %1536 = vmatprep.subr.bf16.mxu0 0
      %1537 = vmatpush1.bf16.msra.mxu0 0
      %1538 = vmatprep.subr.bf16.mxu0 0
      %1539 = vmatpush1.bf16.msra.mxu0 0
      %1540 = vmatprep.subr.bf16.mxu0 0
      %1541 = vmatpush1.bf16.msra.mxu0 0
      %1542 = vmatprep.subr.bf16.mxu0 0
      %1543 = vmatpush1.bf16.msra.mxu0 0
      %1544 = vmatprep.subr.bf16.mxu0 0
      %1545 = vmatpush1.bf16.msra.mxu0 0
      %1546 = vmatprep.subr.bf16.mxu0 0
      %1547 = vmatpush1.bf16.msra.mxu0 0
      %1548 = vmatprep.subr.bf16.mxu0 0
      %1549 = vmatpush1.bf16.msra.mxu0 0
      %1550 = vmatprep.subr.bf16.mxu0 0
      %1551 = vmatpush1.bf16.msra.mxu0 0
      %1552 = vmatprep.subr.bf16.mxu0 0
      %1553 = vmatpush1.bf16.msra.mxu0 0
      %1554 = vmatprep.subr.bf16.mxu0 0
      %1555 = vmatpush1.bf16.msra.mxu0 0
      %1556 = vmatprep.mubr.bf16.mxu0 0
      %1557 = vmatmul.mubr.bf16.gmra.mrb[0].mxu0 %v597
      %v1558 = vpop.f32.mrb[0].mxu0
      %v1559 = vadd.f32 0.0, %v1558
      %v1560 = vpop.f32.mrb[0].mxu0
      %v1561 = vadd.f32 0.0, %v1560
      %v1562 = vpop.f32.mrb[0].mxu0
      %v1563 = vadd.f32 0.0, %v1562
      %v1564 = vpop.f32.mrb[0].mxu0
      %v1565 = vadd.f32 0.0, %v1564
      %1566 = vmatprep.mubr.bf16.mxu0 0
      %1567 = vmatmul.mubr.bf16.gmra.mrb[0].mxu0 %v600
      %v1568 = vpop.f32.mrb[0].mxu0
      %v1569 = vadd.f32 0.0, %v1568
      %v1570 = vpop.f32.mrb[0].mxu0
      %v1571 = vadd.f32 0.0, %v1570
      %v1572 = vpop.f32.mrb[0].mxu0
      %v1573 = vadd.f32 0.0, %v1572
      %v1574 = vpop.f32.mrb[0].mxu0
      %v1575 = vadd.f32 0.0, %v1574
      %1576 = vmatprep.mubr.bf16.mxu0 0
      %1577 = vmatmul.mubr.bf16.gmra.mrb[0].mxu0 %v603
      %v1578 = vpop.f32.mrb[0].mxu0
      %v1579 = vadd.f32 0.0, %v1578
      %v1580 = vpop.f32.mrb[0].mxu0
      %v1581 = vadd.f32 0.0, %v1580
      %v1582 = vpop.f32.mrb[0].mxu0
      %v1583 = vadd.f32 0.0, %v1582
      %v1584 = vpop.f32.mrb[0].mxu0
      %v1585 = vadd.f32 0.0, %v1584
      %1586 = vmatprep.mubr.bf16.mxu0 0
      %1587 = vmatmul.mubr.bf16.gmra.mrb[0].mxu0 %v606
      %v1588 = vpop.f32.mrb[0].mxu0
      %v1589 = vadd.f32 0.0, %v1588
      %v1590 = vpop.f32.mrb[0].mxu0
      %v1591 = vadd.f32 0.0, %v1590
      %v1592 = vpop.f32.mrb[0].mxu0
      %v1593 = vadd.f32 0.0, %v1592
      %v1594 = vpop.f32.mrb[0].mxu0
      %v1595 = vadd.f32 0.0, %v1594
      %1596 = vmatprep.mubr.bf16.mxu0 0
      %1597 = vmatmul.mubr.bf16.gmra.mrb[0].mxu0 %v609
      %v1598 = vpop.f32.mrb[0].mxu0
      %v1599 = vadd.f32 0.0, %v1598
      %v1600 = vpop.f32.mrb[0].mxu0
      %v1601 = vadd.f32 0.0, %v1600
      %v1602 = vpop.f32.mrb[0].mxu0
      %v1603 = vadd.f32 0.0, %v1602
      %v1604 = vpop.f32.mrb[0].mxu0
      %v1605 = vadd.f32 0.0, %v1604
      %1606 = vmatprep.mubr.bf16.mxu0 0
      %1607 = vmatmul.mubr.bf16.gmra.mrb[0].mxu0 %v612
      %v1608 = vpop.f32.mrb[0].mxu0
      %v1609 = vadd.f32 0.0, %v1608
      %v1610 = vpop.f32.mrb[0].mxu0
      %v1611 = vadd.f32 0.0, %v1610
      %v1612 = vpop.f32.mrb[0].mxu0
      %v1613 = vadd.f32 0.0, %v1612
      %v1614 = vpop.f32.mrb[0].mxu0
      %v1615 = vadd.f32 0.0, %v1614
      %1616 = vmatprep.mubr.bf16.mxu0 0
      %1617 = vmatmul.mubr.bf16.gmra.mrb[0].mxu0 %v615
      %v1618 = vpop.f32.mrb[0].mxu0
      %v1619 = vadd.f32 0.0, %v1618
      %v1620 = vpop.f32.mrb[0].mxu0
      %v1621 = vadd.f32 0.0, %v1620
      %v1622 = vpop.f32.mrb[0].mxu0
      %v1623 = vadd.f32 0.0, %v1622
      %v1624 = vpop.f32.mrb[0].mxu0
      %v1625 = vadd.f32 0.0, %v1624
      %1626 = vmatprep.mubr.bf16.mxu0 0
      %1627 = vmatmul.mubr.bf16.gmra.mrb[0].mxu0 %v618
      %v1628 = vpop.f32.mrb[0].mxu0
      %v1629 = vadd.f32 0.0, %v1628
      %v1630 = vpop.f32.mrb[0].mxu0
      %v1631 = vadd.f32 0.0, %v1630
      %v1632 = vpop.f32.mrb[0].mxu0
      %v1633 = vadd.f32 0.0, %v1632
      %v1634 = vpop.f32.mrb[0].mxu0
      %v1635 = vadd.f32 0.0, %v1634
      %1636 = vdwg.mxu0
      %1637 = vmatprep.subr.bf16.mxu0 %v518
      %1638 = vmatpush1.bf16.msra.mxu0 %v517
      %1639 = vmatprep.subr.bf16.mxu0 %v542
      %1640 = vmatpush1.bf16.msra.mxu0 %v541
      %1641 = vmatprep.subr.bf16.mxu0 0
      %1642 = vmatpush1.bf16.msra.mxu0 0
      %1643 = vmatprep.subr.bf16.mxu0 0
      %1644 = vmatpush1.bf16.msra.mxu0 0
      %1645 = vmatprep.subr.bf16.mxu0 0
      %1646 = vmatpush1.bf16.msra.mxu0 0
      %1647 = vmatprep.subr.bf16.mxu0 0
      %1648 = vmatpush1.bf16.msra.mxu0 0
      %1649 = vmatprep.subr.bf16.mxu0 0
      %1650 = vmatpush1.bf16.msra.mxu0 0
      %1651 = vmatprep.subr.bf16.mxu0 0
      %1652 = vmatpush1.bf16.msra.mxu0 0
      %1653 = vmatprep.subr.bf16.mxu0 0
      %1654 = vmatpush1.bf16.msra.mxu0 0
      %1655 = vmatprep.subr.bf16.mxu0 0
      %1656 = vmatpush1.bf16.msra.mxu0 0
      %1657 = vmatprep.subr.bf16.mxu0 0
      %1658 = vmatpush1.bf16.msra.mxu0 0
      %1659 = vmatprep.subr.bf16.mxu0 0
      %1660 = vmatpush1.bf16.msra.mxu0 0
      %1661 = vmatprep.subr.bf16.mxu0 0
      %1662 = vmatpush1.bf16.msra.mxu0 0
      %1663 = vmatprep.subr.bf16.mxu0 0
      %1664 = vmatpush1.bf16.msra.mxu0 0
      %1665 = vmatprep.subr.bf16.mxu0 0
      %1666 = vmatpush1.bf16.msra.mxu0 0
      %1667 = vmatprep.subr.bf16.mxu0 0
      %1668 = vmatpush1.bf16.msra.mxu0 0
      %1669 = vmatprep.mubr.bf16.mxu0 0
      %1670 = vmatmul.mubr.bf16.gmra.mrb[0].mxu0 %v597
      %v1671 = vpop.f32.mrb[0].mxu0
      %v1672 = vadd.f32 0.0, %v1671
      %v1673 = vpop.f32.mrb[0].mxu0
      %v1674 = vadd.f32 0.0, %v1673
      %v1675 = vpop.f32.mrb[0].mxu0
      %v1676 = vadd.f32 0.0, %v1675
      %v1677 = vpop.f32.mrb[0].mxu0
      %v1678 = vadd.f32 0.0, %v1677
      %1679 = vmatprep.mubr.bf16.mxu0 0
      %1680 = vmatmul.mubr.bf16.gmra.mrb[0].mxu0 %v600
      %v1681 = vpop.f32.mrb[0].mxu0
      %v1682 = vadd.f32 0.0, %v1681
      %v1683 = vpop.f32.mrb[0].mxu0
      %v1684 = vadd.f32 0.0, %v1683
      %v1685 = vpop.f32.mrb[0].mxu0
      %v1686 = vadd.f32 0.0, %v1685
      %v1687 = vpop.f32.mrb[0].mxu0
      %v1688 = vadd.f32 0.0, %v1687
      %1689 = vmatprep.mubr.bf16.mxu0 0
      %1690 = vmatmul.mubr.bf16.gmra.mrb[0].mxu0 %v603
      %v1691 = vpop.f32.mrb[0].mxu0
      %v1692 = vadd.f32 0.0, %v1691
      %v1693 = vpop.f32.mrb[0].mxu0
      %v1694 = vadd.f32 0.0, %v1693
      %v1695 = vpop.f32.mrb[0].mxu0
      %v1696 = vadd.f32 0.0, %v1695
      %v1697 = vpop.f32.mrb[0].mxu0
      %v1698 = vadd.f32 0.0, %v1697
      %1699 = vmatprep.mubr.bf16.mxu0 0
      %1700 = vmatmul.mubr.bf16.gmra.mrb[0].mxu0 %v606
      %v1701 = vpop.f32.mrb[0].mxu0
      %v1702 = vadd.f32 0.0, %v1701
      %v1703 = vpop.f32.mrb[0].mxu0
      %v1704 = vadd.f32 0.0, %v1703
      %v1705 = vpop.f32.mrb[0].mxu0
      %v1706 = vadd.f32 0.0, %v1705
      %v1707 = vpop.f32.mrb[0].mxu0
      %v1708 = vadd.f32 0.0, %v1707
      %1709 = vmatprep.mubr.bf16.mxu0 0
      %1710 = vmatmul.mubr.bf16.gmra.mrb[0].mxu0 %v609
      %v1711 = vpop.f32.mrb[0].mxu0
      %v1712 = vadd.f32 0.0, %v1711
      %v1713 = vpop.f32.mrb[0].mxu0
      %v1714 = vadd.f32 0.0, %v1713
      %v1715 = vpop.f32.mrb[0].mxu0
      %v1716 = vadd.f32 0.0, %v1715
      %v1717 = vpop.f32.mrb[0].mxu0
      %v1718 = vadd.f32 0.0, %v1717
      %1719 = vmatprep.mubr.bf16.mxu0 0
      %1720 = vmatmul.mubr.bf16.gmra.mrb[0].mxu0 %v612
      %v1721 = vpop.f32.mrb[0].mxu0
      %v1722 = vadd.f32 0.0, %v1721
      %v1723 = vpop.f32.mrb[0].mxu0
      %v1724 = vadd.f32 0.0, %v1723
      %v1725 = vpop.f32.mrb[0].mxu0
      %v1726 = vadd.f32 0.0, %v1725
      %v1727 = vpop.f32.mrb[0].mxu0
      %v1728 = vadd.f32 0.0, %v1727
      %1729 = vmatprep.mubr.bf16.mxu0 0
      %1730 = vmatmul.mubr.bf16.gmra.mrb[0].mxu0 %v615
      %v1731 = vpop.f32.mrb[0].mxu0
      %v1732 = vadd.f32 0.0, %v1731
      %v1733 = vpop.f32.mrb[0].mxu0
      %v1734 = vadd.f32 0.0, %v1733
      %v1735 = vpop.f32.mrb[0].mxu0
      %v1736 = vadd.f32 0.0, %v1735
      %v1737 = vpop.f32.mrb[0].mxu0
      %v1738 = vadd.f32 0.0, %v1737
      %1739 = vmatprep.mubr.bf16.mxu0 0
      %1740 = vmatmul.mubr.bf16.gmra.mrb[0].mxu0 %v618
      %v1741 = vpop.f32.mrb[0].mxu0
      %v1742 = vadd.f32 0.0, %v1741
      %v1743 = vpop.f32.mrb[0].mxu0
      %v1744 = vadd.f32 0.0, %v1743
      %v1745 = vpop.f32.mrb[0].mxu0
      %v1746 = vadd.f32 0.0, %v1745
      %v1747 = vpop.f32.mrb[0].mxu0
      %v1748 = vadd.f32 0.0, %v1747
      %1749 = vdwg.mxu0
      %1750 = vmatprep.subr.bf16.mxu0 %v520
      %1751 = vmatpush1.bf16.msra.mxu0 %v519
      %1752 = vmatprep.subr.bf16.mxu0 %v544
      %1753 = vmatpush1.bf16.msra.mxu0 %v543
      %1754 = vmatprep.subr.bf16.mxu0 0
      %1755 = vmatpush1.bf16.msra.mxu0 0
      %1756 = vmatprep.subr.bf16.mxu0 0
      %1757 = vmatpush1.bf16.msra.mxu0 0
      %1758 = vmatprep.subr.bf16.mxu0 0
      %1759 = vmatpush1.bf16.msra.mxu0 0
      %1760 = vmatprep.subr.bf16.mxu0 0
      %1761 = vmatpush1.bf16.msra.mxu0 0
      %1762 = vmatprep.subr.bf16.mxu0 0
      %1763 = vmatpush1.bf16.msra.mxu0 0
      %1764 = vmatprep.subr.bf16.mxu0 0
      %1765 = vmatpush1.bf16.msra.mxu0 0
      %1766 = vmatprep.subr.bf16.mxu0 0
      %1767 = vmatpush1.bf16.msra.mxu0 0
      %1768 = vmatprep.subr.bf16.mxu0 0
      %1769 = vmatpush1.bf16.msra.mxu0 0
      %1770 = vmatprep.subr.bf16.mxu0 0
      %1771 = vmatpush1.bf16.msra.mxu0 0
      %1772 = vmatprep.subr.bf16.mxu0 0
      %1773 = vmatpush1.bf16.msra.mxu0 0
      %1774 = vmatprep.subr.bf16.mxu0 0
      %1775 = vmatpush1.bf16.msra.mxu0 0
      %1776 = vmatprep.subr.bf16.mxu0 0
      %1777 = vmatpush1.bf16.msra.mxu0 0
      %1778 = vmatprep.subr.bf16.mxu0 0
      %1779 = vmatpush1.bf16.msra.mxu0 0
      %1780 = vmatprep.subr.bf16.mxu0 0
      %1781 = vmatpush1.bf16.msra.mxu0 0
      %1782 = vmatprep.mubr.bf16.mxu0 0
      %1783 = vmatmul.mubr.bf16.gmra.mrb[0].mxu0 %v597
      %v1784 = vpop.f32.mrb[0].mxu0
      %v1785 = vadd.f32 0.0, %v1784
      %v1786 = vpop.f32.mrb[0].mxu0
      %v1787 = vadd.f32 0.0, %v1786
      %v1788 = vpop.f32.mrb[0].mxu0
      %v1789 = vadd.f32 0.0, %v1788
      %v1790 = vpop.f32.mrb[0].mxu0
      %v1791 = vadd.f32 0.0, %v1790
      %1792 = vmatprep.mubr.bf16.mxu0 0
      %1793 = vmatmul.mubr.bf16.gmra.mrb[0].mxu0 %v600
      %v1794 = vpop.f32.mrb[0].mxu0
      %v1795 = vadd.f32 0.0, %v1794
      %v1796 = vpop.f32.mrb[0].mxu0
      %v1797 = vadd.f32 0.0, %v1796
      %v1798 = vpop.f32.mrb[0].mxu0
      %v1799 = vadd.f32 0.0, %v1798
      %v1800 = vpop.f32.mrb[0].mxu0
      %v1801 = vadd.f32 0.0, %v1800
      %1802 = vmatprep.mubr.bf16.mxu0 0
      %1803 = vmatmul.mubr.bf16.gmra.mrb[0].mxu0 %v603
      %v1804 = vpop.f32.mrb[0].mxu0
      %v1805 = vadd.f32 0.0, %v1804
      %v1806 = vpop.f32.mrb[0].mxu0
      %v1807 = vadd.f32 0.0, %v1806
      %v1808 = vpop.f32.mrb[0].mxu0
      %v1809 = vadd.f32 0.0, %v1808
      %v1810 = vpop.f32.mrb[0].mxu0
      %v1811 = vadd.f32 0.0, %v1810
      %1812 = vmatprep.mubr.bf16.mxu0 0
      %1813 = vmatmul.mubr.bf16.gmra.mrb[0].mxu0 %v606
      %v1814 = vpop.f32.mrb[0].mxu0
      %v1815 = vadd.f32 0.0, %v1814
      %v1816 = vpop.f32.mrb[0].mxu0
      %v1817 = vadd.f32 0.0, %v1816
      %v1818 = vpop.f32.mrb[0].mxu0
      %v1819 = vadd.f32 0.0, %v1818
      %v1820 = vpop.f32.mrb[0].mxu0
      %v1821 = vadd.f32 0.0, %v1820
      %1822 = vmatprep.mubr.bf16.mxu0 0
      %1823 = vmatmul.mubr.bf16.gmra.mrb[0].mxu0 %v609
      %v1824 = vpop.f32.mrb[0].mxu0
      %v1825 = vadd.f32 0.0, %v1824
      %v1826 = vpop.f32.mrb[0].mxu0
      %v1827 = vadd.f32 0.0, %v1826
      %v1828 = vpop.f32.mrb[0].mxu0
      %v1829 = vadd.f32 0.0, %v1828
      %v1830 = vpop.f32.mrb[0].mxu0
      %v1831 = vadd.f32 0.0, %v1830
      %1832 = vmatprep.mubr.bf16.mxu0 0
      %1833 = vmatmul.mubr.bf16.gmra.mrb[0].mxu0 %v612
      %v1834 = vpop.f32.mrb[0].mxu0
      %v1835 = vadd.f32 0.0, %v1834
      %v1836 = vpop.f32.mrb[0].mxu0
      %v1837 = vadd.f32 0.0, %v1836
      %v1838 = vpop.f32.mrb[0].mxu0
      %v1839 = vadd.f32 0.0, %v1838
      %v1840 = vpop.f32.mrb[0].mxu0
      %v1841 = vadd.f32 0.0, %v1840
      %1842 = vmatprep.mubr.bf16.mxu0 0
      %1843 = vmatmul.mubr.bf16.gmra.mrb[0].mxu0 %v615
      %v1844 = vpop.f32.mrb[0].mxu0
      %v1845 = vadd.f32 0.0, %v1844
      %v1846 = vpop.f32.mrb[0].mxu0
      %v1847 = vadd.f32 0.0, %v1846
      %v1848 = vpop.f32.mrb[0].mxu0
      %v1849 = vadd.f32 0.0, %v1848
      %v1850 = vpop.f32.mrb[0].mxu0
      %v1851 = vadd.f32 0.0, %v1850
      %1852 = vmatprep.mubr.bf16.mxu0 0
      %1853 = vmatmul.mubr.bf16.gmra.mrb[0].mxu0 %v618
      %v1854 = vpop.f32.mrb[0].mxu0
      %v1855 = vadd.f32 0.0, %v1854
      %v1856 = vpop.f32.mrb[0].mxu0
      %v1857 = vadd.f32 0.0, %v1856
      %v1858 = vpop.f32.mrb[0].mxu0
      %v1859 = vadd.f32 0.0, %v1858
      %v1860 = vpop.f32.mrb[0].mxu0
      %v1861 = vadd.f32 0.0, %v1860
      %1862 = vdwg.mxu0
      %1863 = vmatprep.subr.bf16.mxu0 %v522
      %1864 = vmatpush1.bf16.msra.mxu0 %v521
      %1865 = vmatprep.subr.bf16.mxu0 %v546
      %1866 = vmatpush1.bf16.msra.mxu0 %v545
      %1867 = vmatprep.subr.bf16.mxu0 0
      %1868 = vmatpush1.bf16.msra.mxu0 0
      %1869 = vmatprep.subr.bf16.mxu0 0
      %1870 = vmatpush1.bf16.msra.mxu0 0
      %1871 = vmatprep.subr.bf16.mxu0 0
      %1872 = vmatpush1.bf16.msra.mxu0 0
      %1873 = vmatprep.subr.bf16.mxu0 0
      %1874 = vmatpush1.bf16.msra.mxu0 0
      %1875 = vmatprep.subr.bf16.mxu0 0
      %1876 = vmatpush1.bf16.msra.mxu0 0
      %1877 = vmatprep.subr.bf16.mxu0 0
      %1878 = vmatpush1.bf16.msra.mxu0 0
      %1879 = vmatprep.subr.bf16.mxu0 0
      %1880 = vmatpush1.bf16.msra.mxu0 0
      %1881 = vmatprep.subr.bf16.mxu0 0
      %1882 = vmatpush1.bf16.msra.mxu0 0
      %1883 = vmatprep.subr.bf16.mxu0 0
      %1884 = vmatpush1.bf16.msra.mxu0 0
      %1885 = vmatprep.subr.bf16.mxu0 0
      %1886 = vmatpush1.bf16.msra.mxu0 0
      %1887 = vmatprep.subr.bf16.mxu0 0
      %1888 = vmatpush1.bf16.msra.mxu0 0
      %1889 = vmatprep.subr.bf16.mxu0 0
      %1890 = vmatpush1.bf16.msra.mxu0 0
      %1891 = vmatprep.subr.bf16.mxu0 0
      %1892 = vmatpush1.bf16.msra.mxu0 0
      %1893 = vmatprep.subr.bf16.mxu0 0
      %1894 = vmatpush1.bf16.msra.mxu0 0
      %1895 = vmatprep.mubr.bf16.mxu0 0
      %1896 = vmatmul.mubr.bf16.gmra.mrb[0].mxu0 %v597
      %v1897 = vpop.f32.mrb[0].mxu0
      %v1898 = vadd.f32 0.0, %v1897
      %v1899 = vpop.f32.mrb[0].mxu0
      %v1900 = vadd.f32 0.0, %v1899
      %v1901 = vpop.f32.mrb[0].mxu0
      %v1902 = vadd.f32 0.0, %v1901
      %v1903 = vpop.f32.mrb[0].mxu0
      %v1904 = vadd.f32 0.0, %v1903
      %1905 = vmatprep.mubr.bf16.mxu0 0
      %1906 = vmatmul.mubr.bf16.gmra.mrb[0].mxu0 %v600
      %v1907 = vpop.f32.mrb[0].mxu0
      %v1908 = vadd.f32 0.0, %v1907
      %v1909 = vpop.f32.mrb[0].mxu0
      %v1910 = vadd.f32 0.0, %v1909
      %v1911 = vpop.f32.mrb[0].mxu0
      %v1912 = vadd.f32 0.0, %v1911
      %v1913 = vpop.f32.mrb[0].mxu0
      %v1914 = vadd.f32 0.0, %v1913
      %1915 = vmatprep.mubr.bf16.mxu0 0
      %1916 = vmatmul.mubr.bf16.gmra.mrb[0].mxu0 %v603
      %v1917 = vpop.f32.mrb[0].mxu0
      %v1918 = vadd.f32 0.0, %v1917
      %v1919 = vpop.f32.mrb[0].mxu0
      %v1920 = vadd.f32 0.0, %v1919
      %v1921 = vpop.f32.mrb[0].mxu0
      %v1922 = vadd.f32 0.0, %v1921
      %v1923 = vpop.f32.mrb[0].mxu0
      %v1924 = vadd.f32 0.0, %v1923
      %1925 = vmatprep.mubr.bf16.mxu0 0
      %1926 = vmatmul.mubr.bf16.gmra.mrb[0].mxu0 %v606
      %v1927 = vpop.f32.mrb[0].mxu0
      %v1928 = vadd.f32 0.0, %v1927
      %v1929 = vpop.f32.mrb[0].mxu0
      %v1930 = vadd.f32 0.0, %v1929
      %v1931 = vpop.f32.mrb[0].mxu0
      %v1932 = vadd.f32 0.0, %v1931
      %v1933 = vpop.f32.mrb[0].mxu0
      %v1934 = vadd.f32 0.0, %v1933
      %1935 = vmatprep.mubr.bf16.mxu0 0
      %1936 = vmatmul.mubr.bf16.gmra.mrb[0].mxu0 %v609
      %v1937 = vpop.f32.mrb[0].mxu0
      %v1938 = vadd.f32 0.0, %v1937
      %v1939 = vpop.f32.mrb[0].mxu0
      %v1940 = vadd.f32 0.0, %v1939
      %v1941 = vpop.f32.mrb[0].mxu0
      %v1942 = vadd.f32 0.0, %v1941
      %v1943 = vpop.f32.mrb[0].mxu0
      %v1944 = vadd.f32 0.0, %v1943
      %1945 = vmatprep.mubr.bf16.mxu0 0
      %1946 = vmatmul.mubr.bf16.gmra.mrb[0].mxu0 %v612
      %v1947 = vpop.f32.mrb[0].mxu0
      %v1948 = vadd.f32 0.0, %v1947
      %v1949 = vpop.f32.mrb[0].mxu0
      %v1950 = vadd.f32 0.0, %v1949
      %v1951 = vpop.f32.mrb[0].mxu0
      %v1952 = vadd.f32 0.0, %v1951
      %v1953 = vpop.f32.mrb[0].mxu0
      %v1954 = vadd.f32 0.0, %v1953
      %1955 = vmatprep.mubr.bf16.mxu0 0
      %1956 = vmatmul.mubr.bf16.gmra.mrb[0].mxu0 %v615
      %v1957 = vpop.f32.mrb[0].mxu0
      %v1958 = vadd.f32 0.0, %v1957
      %v1959 = vpop.f32.mrb[0].mxu0
      %v1960 = vadd.f32 0.0, %v1959
      %v1961 = vpop.f32.mrb[0].mxu0
      %v1962 = vadd.f32 0.0, %v1961
      %v1963 = vpop.f32.mrb[0].mxu0
      %v1964 = vadd.f32 0.0, %v1963
      %1965 = vmatprep.mubr.bf16.mxu0 0
      %1966 = vmatmul.mubr.bf16.gmra.mrb[0].mxu0 %v618
      %v1967 = vpop.f32.mrb[0].mxu0
      %v1968 = vadd.f32 0.0, %v1967
      %v1969 = vpop.f32.mrb[0].mxu0
      %v1970 = vadd.f32 0.0, %v1969
      %v1971 = vpop.f32.mrb[0].mxu0
      %v1972 = vadd.f32 0.0, %v1971
      %v1973 = vpop.f32.mrb[0].mxu0
      %v1974 = vadd.f32 0.0, %v1973
      %1975 = vdwg.mxu0
      %v1976 = vmax.f32 %v655, %v1107
      %v1977 = vmax.f32 %v657, %v1109
      %v1978 = vmax.f32 %v768, %v1220
      %v1979 = vmax.f32 %v770, %v1222
      %v1980 = vmax.f32 %v881, %v1333
      %v1981 = vmax.f32 %v883, %v1335
      %v1982 = vmax.f32 %v994, %v1446
      %v1983 = vmax.f32 %v996, %v1448
      %v1984 = vmax.f32 %v659, %v1111
      %v1985 = vmax.f32 %v661, %v1113
      %v1986 = vmax.f32 %v772, %v1224
      %v1987 = vmax.f32 %v774, %v1226
      %v1988 = vmax.f32 %v885, %v1337
      %v1989 = vmax.f32 %v887, %v1339
      %v1990 = vmax.f32 %v998, %v1450
      %v1991 = vmax.f32 %v1000, %v1452
      %v1992 = vmax.f32 %v665, %v1117
      %v1993 = vmax.f32 %v667, %v1119
      %v1994 = vmax.f32 %v778, %v1230
      %v1995 = vmax.f32 %v780, %v1232
      %v1996 = vmax.f32 %v891, %v1343
      %v1997 = vmax.f32 %v893, %v1345
      %v1998 = vmax.f32 %v1004, %v1456
      %v1999 = vmax.f32 %v1006, %v1458
      %v2000 = vmax.f32 %v669, %v1121
      %v2001 = vmax.f32 %v671, %v1123
      %v2002 = vmax.f32 %v782, %v1234
      %v2003 = vmax.f32 %v784, %v1236
      %v2004 = vmax.f32 %v895, %v1347
      %v2005 = vmax.f32 %v897, %v1349
      %v2006 = vmax.f32 %v1008, %v1460
      %v2007 = vmax.f32 %v1010, %v1462
      %v2008 = vmax.f32 %v675, %v1127
      %v2009 = vmax.f32 %v677, %v1129
      %v2010 = vmax.f32 %v788, %v1240
      %v2011 = vmax.f32 %v790, %v1242
      %v2012 = vmax.f32 %v901, %v1353
      %v2013 = vmax.f32 %v903, %v1355
      %v2014 = vmax.f32 %v1014, %v1466
      %v2015 = vmax.f32 %v1016, %v1468
      %v2016 = vmax.f32 %v679, %v1131
      %v2017 = vmax.f32 %v681, %v1133
      %v2018 = vmax.f32 %v792, %v1244
      %v2019 = vmax.f32 %v794, %v1246
      %v2020 = vmax.f32 %v905, %v1357
      %v2021 = vmax.f32 %v907, %v1359
      %v2022 = vmax.f32 %v1018, %v1470
      %v2023 = vmax.f32 %v1020, %v1472
      %v2024 = vmax.f32 %v685, %v1137
      %v2025 = vmax.f32 %v687, %v1139
      %v2026 = vmax.f32 %v798, %v1250
      %v2027 = vmax.f32 %v800, %v1252
      %v2028 = vmax.f32 %v911, %v1363
      %v2029 = vmax.f32 %v913, %v1365
      %v2030 = vmax.f32 %v1024, %v1476
      %v2031 = vmax.f32 %v1026, %v1478
      %v2032 = vmax.f32 %v689, %v1141
      %v2033 = vmax.f32 %v691, %v1143
      %v2034 = vmax.f32 %v802, %v1254
      %v2035 = vmax.f32 %v804, %v1256
      %v2036 = vmax.f32 %v915, %v1367
      %v2037 = vmax.f32 %v917, %v1369
      %v2038 = vmax.f32 %v1028, %v1480
      %v2039 = vmax.f32 %v1030, %v1482
      %v2040 = vmax.f32 %v695, %v1147
      %v2041 = vmax.f32 %v697, %v1149
      %v2042 = vmax.f32 %v808, %v1260
      %v2043 = vmax.f32 %v810, %v1262
      %v2044 = vmax.f32 %v921, %v1373
      %v2045 = vmax.f32 %v923, %v1375
      %v2046 = vmax.f32 %v1034, %v1486
      %v2047 = vmax.f32 %v1036, %v1488
      %v2048 = vmax.f32 %v699, %v1151
      %v2049 = vmax.f32 %v701, %v1153
      %v2050 = vmax.f32 %v812, %v1264
      %v2051 = vmax.f32 %v814, %v1266
      %v2052 = vmax.f32 %v925, %v1377
      %v2053 = vmax.f32 %v927, %v1379
      %v2054 = vmax.f32 %v1038, %v1490
      %v2055 = vmax.f32 %v1040, %v1492
      %v2056 = vmax.f32 %v705, %v1157
      %v2057 = vmax.f32 %v707, %v1159
      %v2058 = vmax.f32 %v818, %v1270
      %v2059 = vmax.f32 %v820, %v1272
      %v2060 = vmax.f32 %v931, %v1383
      %v2061 = vmax.f32 %v933, %v1385
      %v2062 = vmax.f32 %v1044, %v1496
      %v2063 = vmax.f32 %v1046, %v1498
      %v2064 = vmax.f32 %v709, %v1161
      %v2065 = vmax.f32 %v711, %v1163
      %v2066 = vmax.f32 %v822, %v1274
      %v2067 = vmax.f32 %v824, %v1276
      %v2068 = vmax.f32 %v935, %v1387
      %v2069 = vmax.f32 %v937, %v1389
      %v2070 = vmax.f32 %v1048, %v1500
      %v2071 = vmax.f32 %v1050, %v1502
      %v2072 = vmax.f32 %v715, %v1167
      %v2073 = vmax.f32 %v717, %v1169
      %v2074 = vmax.f32 %v828, %v1280
      %v2075 = vmax.f32 %v830, %v1282
      %v2076 = vmax.f32 %v941, %v1393
      %v2077 = vmax.f32 %v943, %v1395
      %v2078 = vmax.f32 %v1054, %v1506
      %v2079 = vmax.f32 %v1056, %v1508
      %v2080 = vmax.f32 %v719, %v1171
      %v2081 = vmax.f32 %v721, %v1173
      %v2082 = vmax.f32 %v832, %v1284
      %v2083 = vmax.f32 %v834, %v1286
      %v2084 = vmax.f32 %v945, %v1397
      %v2085 = vmax.f32 %v947, %v1399
      %v2086 = vmax.f32 %v1058, %v1510
      %v2087 = vmax.f32 %v1060, %v1512
      %v2088 = vmax.f32 %v725, %v1177
      %v2089 = vmax.f32 %v727, %v1179
      %v2090 = vmax.f32 %v838, %v1290
      %v2091 = vmax.f32 %v840, %v1292
      %v2092 = vmax.f32 %v951, %v1403
      %v2093 = vmax.f32 %v953, %v1405
      %v2094 = vmax.f32 %v1064, %v1516
      %v2095 = vmax.f32 %v1066, %v1518
      %v2096 = vmax.f32 %v729, %v1181
      %v2097 = vmax.f32 %v731, %v1183
      %v2098 = vmax.f32 %v842, %v1294
      %v2099 = vmax.f32 %v844, %v1296
      %v2100 = vmax.f32 %v955, %v1407
      %v2101 = vmax.f32 %v957, %v1409
      %v2102 = vmax.f32 %v1068, %v1520
      %v2103 = vmax.f32 %v1070, %v1522
      %v2104 = vmax.f32 %v1976, %v1559
      %v2105 = vmax.f32 %v1977, %v1561
      %v2106 = vmax.f32 %v1978, %v1672
      %v2107 = vmax.f32 %v1979, %v1674
      %v2108 = vmax.f32 %v1980, %v1785
      %v2109 = vmax.f32 %v1981, %v1787
      %v2110 = vmax.f32 %v1982, %v1898
      %v2111 = vmax.f32 %v1983, %v1900
      %v2112 = vmax.f32 %v1984, %v1563
      %v2113 = vmax.f32 %v1985, %v1565
      %v2114 = vmax.f32 %v1986, %v1676
      %v2115 = vmax.f32 %v1987, %v1678
      %v2116 = vmax.f32 %v1988, %v1789
      %v2117 = vmax.f32 %v1989, %v1791
      %v2118 = vmax.f32 %v1990, %v1902
      %v2119 = vmax.f32 %v1991, %v1904
      %v2120 = vmax.f32 %v1992, %v1569
      %v2121 = vmax.f32 %v1993, %v1571
      %v2122 = vmax.f32 %v1994, %v1682
      %v2123 = vmax.f32 %v1995, %v1684
      %v2124 = vmax.f32 %v1996, %v1795
      %v2125 = vmax.f32 %v1997, %v1797
      %v2126 = vmax.f32 %v1998, %v1908
      %v2127 = vmax.f32 %v1999, %v1910
      %v2128 = vmax.f32 %v2000, %v1573
      %v2129 = vmax.f32 %v2001, %v1575
      %v2130 = vmax.f32 %v2002, %v1686
      %v2131 = vmax.f32 %v2003, %v1688
      %v2132 = vmax.f32 %v2004, %v1799
      %v2133 = vmax.f32 %v2005, %v1801
      %v2134 = vmax.f32 %v2006, %v1912
      %v2135 = vmax.f32 %v2007, %v1914
      %v2136 = vmax.f32 %v2008, %v1579
      %v2137 = vmax.f32 %v2009, %v1581
      %v2138 = vmax.f32 %v2010, %v1692
      %v2139 = vmax.f32 %v2011, %v1694
      %v2140 = vmax.f32 %v2012, %v1805
      %v2141 = vmax.f32 %v2013, %v1807
      %v2142 = vmax.f32 %v2014, %v1918
      %v2143 = vmax.f32 %v2015, %v1920
      %v2144 = vmax.f32 %v2016, %v1583
      %v2145 = vmax.f32 %v2017, %v1585
      %v2146 = vmax.f32 %v2018, %v1696
      %v2147 = vmax.f32 %v2019, %v1698
      %v2148 = vmax.f32 %v2020, %v1809
      %v2149 = vmax.f32 %v2021, %v1811
      %v2150 = vmax.f32 %v2022, %v1922
      %v2151 = vmax.f32 %v2023, %v1924
      %v2152 = vmax.f32 %v2024, %v1589
      %v2153 = vmax.f32 %v2025, %v1591
      %v2154 = vmax.f32 %v2026, %v1702
      %v2155 = vmax.f32 %v2027, %v1704
      %v2156 = vmax.f32 %v2028, %v1815
      %v2157 = vmax.f32 %v2029, %v1817
      %v2158 = vmax.f32 %v2030, %v1928
      %v2159 = vmax.f32 %v2031, %v1930
      %v2160 = vmax.f32 %v2032, %v1593
      %v2161 = vmax.f32 %v2033, %v1595
      %v2162 = vmax.f32 %v2034, %v1706
      %v2163 = vmax.f32 %v2035, %v1708
      %v2164 = vmax.f32 %v2036, %v1819
      %v2165 = vmax.f32 %v2037, %v1821
      %v2166 = vmax.f32 %v2038, %v1932
      %v2167 = vmax.f32 %v2039, %v1934
      %v2168 = vmax.f32 %v2040, %v1599
      %v2169 = vmax.f32 %v2041, %v1601
      %v2170 = vmax.f32 %v2042, %v1712
      %v2171 = vmax.f32 %v2043, %v1714
      %v2172 = vmax.f32 %v2044, %v1825
      %v2173 = vmax.f32 %v2045, %v1827
      %v2174 = vmax.f32 %v2046, %v1938
      %v2175 = vmax.f32 %v2047, %v1940
      %v2176 = vmax.f32 %v2048, %v1603
      %v2177 = vmax.f32 %v2049, %v1605
      %v2178 = vmax.f32 %v2050, %v1716
      %v2179 = vmax.f32 %v2051, %v1718
      %v2180 = vmax.f32 %v2052, %v1829
      %v2181 = vmax.f32 %v2053, %v1831
      %v2182 = vmax.f32 %v2054, %v1942
      %v2183 = vmax.f32 %v2055, %v1944
      %v2184 = vmax.f32 %v2056, %v1609
      %v2185 = vmax.f32 %v2057, %v1611
      %v2186 = vmax.f32 %v2058, %v1722
      %v2187 = vmax.f32 %v2059, %v1724
      %v2188 = vmax.f32 %v2060, %v1835
      %v2189 = vmax.f32 %v2061, %v1837
      %v2190 = vmax.f32 %v2062, %v1948
      %v2191 = vmax.f32 %v2063, %v1950
      %v2192 = vmax.f32 %v2064, %v1613
      %v2193 = vmax.f32 %v2065, %v1615
      %v2194 = vmax.f32 %v2066, %v1726
      %v2195 = vmax.f32 %v2067, %v1728
      %v2196 = vmax.f32 %v2068, %v1839
      %v2197 = vmax.f32 %v2069, %v1841
      %v2198 = vmax.f32 %v2070, %v1952
      %v2199 = vmax.f32 %v2071, %v1954
      %v2200 = vmax.f32 %v2072, %v1619
      %v2201 = vmax.f32 %v2073, %v1621
      %v2202 = vmax.f32 %v2074, %v1732
      %v2203 = vmax.f32 %v2075, %v1734
      %v2204 = vmax.f32 %v2076, %v1845
      %v2205 = vmax.f32 %v2077, %v1847
      %v2206 = vmax.f32 %v2078, %v1958
      %v2207 = vmax.f32 %v2079, %v1960
      %v2208 = vmax.f32 %v2080, %v1623
      %v2209 = vmax.f32 %v2081, %v1625
      %v2210 = vmax.f32 %v2082, %v1736
      %v2211 = vmax.f32 %v2083, %v1738
      %v2212 = vmax.f32 %v2084, %v1849
      %v2213 = vmax.f32 %v2085, %v1851
      %v2214 = vmax.f32 %v2086, %v1962
      %v2215 = vmax.f32 %v2087, %v1964
      %v2216 = vmax.f32 %v2088, %v1629
      %v2217 = vmax.f32 %v2089, %v1631
      %v2218 = vmax.f32 %v2090, %v1742
      %v2219 = vmax.f32 %v2091, %v1744
      %v2220 = vmax.f32 %v2092, %v1855
      %v2221 = vmax.f32 %v2093, %v1857
      %v2222 = vmax.f32 %v2094, %v1968
      %v2223 = vmax.f32 %v2095, %v1970
      %v2224 = vmax.f32 %v2096, %v1633
      %v2225 = vmax.f32 %v2097, %v1635
      %v2226 = vmax.f32 %v2098, %v1746
      %v2227 = vmax.f32 %v2099, %v1748
      %v2228 = vmax.f32 %v2100, %v1859
      %v2229 = vmax.f32 %v2101, %v1861
      %v2230 = vmax.f32 %v2102, %v1972
      %v2231 = vmax.f32 %v2103, %v1974
      %v2232 = vld [vmem:[%s2] sm:$0xff]
      %v2234 = vlaneseq
      %v2235 = vshrl.u32 %v2234, 7
      %v2236 = vsub.s32 0, %v2235
      %v2237 = vrot.slane %v2232, %v2236
      %v2238 = vlaneseq
      %v2239 = vshrl.u32 %v2238, 7
      %v2240 = vsub.s32 1, %v2239
      %v2241 = vrot.slane %v2232, %v2240
      %v2242 = vlaneseq
      %v2243 = vshrl.u32 %v2242, 7
      %v2244 = vsub.s32 2, %v2243
      %v2245 = vrot.slane %v2232, %v2244
      %v2246 = vlaneseq
      %v2247 = vshrl.u32 %v2246, 7
      %v2248 = vsub.s32 3, %v2247
      %v2249 = vrot.slane %v2232, %v2248
      %v2250 = vlaneseq
      %v2251 = vshrl.u32 %v2250, 7
      %v2252 = vsub.s32 4, %v2251
      %v2253 = vrot.slane %v2232, %v2252
      %v2254 = vlaneseq
      %v2255 = vshrl.u32 %v2254, 7
      %v2256 = vsub.s32 5, %v2255
      %v2257 = vrot.slane %v2232, %v2256
      %v2258 = vlaneseq
      %v2259 = vshrl.u32 %v2258, 7
      %v2260 = vsub.s32 6, %v2259
      %v2261 = vrot.slane %v2232, %v2260
      %v2262 = vlaneseq
      %v2263 = vshrl.u32 %v2262, 7
      %v2264 = vsub.s32 7, %v2263
      %v2265 = vrot.slane %v2232, %v2264
      %v2274 = vadd.f32 %v2104, %v2237
      %v2275 = vadd.f32 %v2105, %v2241
      %v2276 = vadd.f32 %v2106, %v2245
      %v2277 = vadd.f32 %v2107, %v2249
      %v2278 = vadd.f32 %v2108, %v2253
      %v2279 = vadd.f32 %v2109, %v2257
      %v2280 = vadd.f32 %v2110, %v2261
      %v2281 = vadd.f32 %v2111, %v2265
      %v2282 = vadd.f32 %v2112, %v2237
      %v2283 = vadd.f32 %v2113, %v2241
      %v2284 = vadd.f32 %v2114, %v2245
      %v2285 = vadd.f32 %v2115, %v2249
      %v2286 = vadd.f32 %v2116, %v2253
      %v2287 = vadd.f32 %v2117, %v2257
      %v2288 = vadd.f32 %v2118, %v2261
      %v2289 = vadd.f32 %v2119, %v2265
      %v2290 = vadd.f32 %v2120, %v2237
      %v2291 = vadd.f32 %v2121, %v2241
      %v2292 = vadd.f32 %v2122, %v2245
      %v2293 = vadd.f32 %v2123, %v2249
      %v2294 = vadd.f32 %v2124, %v2253
      %v2295 = vadd.f32 %v2125, %v2257
      %v2296 = vadd.f32 %v2126, %v2261
      %v2297 = vadd.f32 %v2127, %v2265
      %v2298 = vadd.f32 %v2128, %v2237
      %v2299 = vadd.f32 %v2129, %v2241
      %v2300 = vadd.f32 %v2130, %v2245
      %v2301 = vadd.f32 %v2131, %v2249
      %v2302 = vadd.f32 %v2132, %v2253
      %v2303 = vadd.f32 %v2133, %v2257
      %v2304 = vadd.f32 %v2134, %v2261
      %v2305 = vadd.f32 %v2135, %v2265
      %v2306 = vadd.f32 %v2136, %v2237
      %v2307 = vadd.f32 %v2137, %v2241
      %v2308 = vadd.f32 %v2138, %v2245
      %v2309 = vadd.f32 %v2139, %v2249
      %v2310 = vadd.f32 %v2140, %v2253
      %v2311 = vadd.f32 %v2141, %v2257
      %v2312 = vadd.f32 %v2142, %v2261
      %v2313 = vadd.f32 %v2143, %v2265
      %v2314 = vadd.f32 %v2144, %v2237
      %v2315 = vadd.f32 %v2145, %v2241
      %v2316 = vadd.f32 %v2146, %v2245
      %v2317 = vadd.f32 %v2147, %v2249
      %v2318 = vadd.f32 %v2148, %v2253
      %v2319 = vadd.f32 %v2149, %v2257
      %v2320 = vadd.f32 %v2150, %v2261
      %v2321 = vadd.f32 %v2151, %v2265
      %v2322 = vadd.f32 %v2152, %v2237
      %v2323 = vadd.f32 %v2153, %v2241
      %v2324 = vadd.f32 %v2154, %v2245
      %v2325 = vadd.f32 %v2155, %v2249
      %v2326 = vadd.f32 %v2156, %v2253
      %v2327 = vadd.f32 %v2157, %v2257
      %v2328 = vadd.f32 %v2158, %v2261
      %v2329 = vadd.f32 %v2159, %v2265
      %v2330 = vadd.f32 %v2160, %v2237
      %v2331 = vadd.f32 %v2161, %v2241
      %v2332 = vadd.f32 %v2162, %v2245
      %v2333 = vadd.f32 %v2163, %v2249
      %v2334 = vadd.f32 %v2164, %v2253
      %v2335 = vadd.f32 %v2165, %v2257
      %v2336 = vadd.f32 %v2166, %v2261
      %v2337 = vadd.f32 %v2167, %v2265
      %v2338 = vadd.f32 %v2168, %v2237
      %v2339 = vadd.f32 %v2169, %v2241
      %v2340 = vadd.f32 %v2170, %v2245
      %v2341 = vadd.f32 %v2171, %v2249
      %v2342 = vadd.f32 %v2172, %v2253
      %v2343 = vadd.f32 %v2173, %v2257
      %v2344 = vadd.f32 %v2174, %v2261
      %v2345 = vadd.f32 %v2175, %v2265
      %v2346 = vadd.f32 %v2176, %v2237
      %v2347 = vadd.f32 %v2177, %v2241
      %v2348 = vadd.f32 %v2178, %v2245
      %v2349 = vadd.f32 %v2179, %v2249
      %v2350 = vadd.f32 %v2180, %v2253
      %v2351 = vadd.f32 %v2181, %v2257
      %v2352 = vadd.f32 %v2182, %v2261
      %v2353 = vadd.f32 %v2183, %v2265
      %v2354 = vadd.f32 %v2184, %v2237
      %v2355 = vadd.f32 %v2185, %v2241
      %v2356 = vadd.f32 %v2186, %v2245
      %v2357 = vadd.f32 %v2187, %v2249
      %v2358 = vadd.f32 %v2188, %v2253
      %v2359 = vadd.f32 %v2189, %v2257
      %v2360 = vadd.f32 %v2190, %v2261
      %v2361 = vadd.f32 %v2191, %v2265
      %v2362 = vadd.f32 %v2192, %v2237
      %v2363 = vadd.f32 %v2193, %v2241
      %v2364 = vadd.f32 %v2194, %v2245
      %v2365 = vadd.f32 %v2195, %v2249
      %v2366 = vadd.f32 %v2196, %v2253
      %v2367 = vadd.f32 %v2197, %v2257
      %v2368 = vadd.f32 %v2198, %v2261
      %v2369 = vadd.f32 %v2199, %v2265
      %v2370 = vadd.f32 %v2200, %v2237
      %v2371 = vadd.f32 %v2201, %v2241
      %v2372 = vadd.f32 %v2202, %v2245
      %v2373 = vadd.f32 %v2203, %v2249
      %v2374 = vadd.f32 %v2204, %v2253
      %v2375 = vadd.f32 %v2205, %v2257
      %v2376 = vadd.f32 %v2206, %v2261
      %v2377 = vadd.f32 %v2207, %v2265
      %v2378 = vadd.f32 %v2208, %v2237
      %v2379 = vadd.f32 %v2209, %v2241
      %v2380 = vadd.f32 %v2210, %v2245
      %v2381 = vadd.f32 %v2211, %v2249
      %v2382 = vadd.f32 %v2212, %v2253
      %v2383 = vadd.f32 %v2213, %v2257
      %v2384 = vadd.f32 %v2214, %v2261
      %v2385 = vadd.f32 %v2215, %v2265
      %v2386 = vadd.f32 %v2216, %v2237
      %v2387 = vadd.f32 %v2217, %v2241
      %v2388 = vadd.f32 %v2218, %v2245
      %v2389 = vadd.f32 %v2219, %v2249
      %v2390 = vadd.f32 %v2220, %v2253
      %v2391 = vadd.f32 %v2221, %v2257
      %v2392 = vadd.f32 %v2222, %v2261
      %v2393 = vadd.f32 %v2223, %v2265
      %v2394 = vadd.f32 %v2224, %v2237
      %v2395 = vadd.f32 %v2225, %v2241
      %v2396 = vadd.f32 %v2226, %v2245
      %v2397 = vadd.f32 %v2227, %v2249
      %v2398 = vadd.f32 %v2228, %v2253
      %v2399 = vadd.f32 %v2229, %v2257
      %v2400 = vadd.f32 %v2230, %v2261
      %v2401 = vadd.f32 %v2231, %v2265
      %v2402 = vmax.f32 %v2274, 0.0
      %v2403 = vmax.f32 %v2275, 0.0
      %v2404 = vmax.f32 %v2276, 0.0
      %v2405 = vmax.f32 %v2277, 0.0
      %v2406 = vmax.f32 %v2278, 0.0
      %v2407 = vmax.f32 %v2279, 0.0
      %v2408 = vmax.f32 %v2280, 0.0
      %v2409 = vmax.f32 %v2281, 0.0
      %v2410 = vmax.f32 %v2282, 0.0
      %v2411 = vmax.f32 %v2283, 0.0
      %v2412 = vmax.f32 %v2284, 0.0
      %v2413 = vmax.f32 %v2285, 0.0
      %v2414 = vmax.f32 %v2286, 0.0
      %v2415 = vmax.f32 %v2287, 0.0
      %v2416 = vmax.f32 %v2288, 0.0
      %v2417 = vmax.f32 %v2289, 0.0
      %v2418 = vmax.f32 %v2290, 0.0
      %v2419 = vmax.f32 %v2291, 0.0
      %v2420 = vmax.f32 %v2292, 0.0
      %v2421 = vmax.f32 %v2293, 0.0
      %v2422 = vmax.f32 %v2294, 0.0
      %v2423 = vmax.f32 %v2295, 0.0
      %v2424 = vmax.f32 %v2296, 0.0
      %v2425 = vmax.f32 %v2297, 0.0
      %v2426 = vmax.f32 %v2298, 0.0
      %v2427 = vmax.f32 %v2299, 0.0
      %v2428 = vmax.f32 %v2300, 0.0
      %v2429 = vmax.f32 %v2301, 0.0
      %v2430 = vmax.f32 %v2302, 0.0
      %v2431 = vmax.f32 %v2303, 0.0
      %v2432 = vmax.f32 %v2304, 0.0
      %v2433 = vmax.f32 %v2305, 0.0
      %v2434 = vmax.f32 %v2306, 0.0
      %v2435 = vmax.f32 %v2307, 0.0
      %v2436 = vmax.f32 %v2308, 0.0
      %v2437 = vmax.f32 %v2309, 0.0
      %v2438 = vmax.f32 %v2310, 0.0
      %v2439 = vmax.f32 %v2311, 0.0
      %v2440 = vmax.f32 %v2312, 0.0
      %v2441 = vmax.f32 %v2313, 0.0
      %v2442 = vmax.f32 %v2314, 0.0
      %v2443 = vmax.f32 %v2315, 0.0
      %v2444 = vmax.f32 %v2316, 0.0
      %v2445 = vmax.f32 %v2317, 0.0
      %v2446 = vmax.f32 %v2318, 0.0
      %v2447 = vmax.f32 %v2319, 0.0
      %v2448 = vmax.f32 %v2320, 0.0
      %v2449 = vmax.f32 %v2321, 0.0
      %v2450 = vmax.f32 %v2322, 0.0
      %v2451 = vmax.f32 %v2323, 0.0
      %v2452 = vmax.f32 %v2324, 0.0
      %v2453 = vmax.f32 %v2325, 0.0
      %v2454 = vmax.f32 %v2326, 0.0
      %v2455 = vmax.f32 %v2327, 0.0
      %v2456 = vmax.f32 %v2328, 0.0
      %v2457 = vmax.f32 %v2329, 0.0
      %v2458 = vmax.f32 %v2330, 0.0
      %v2459 = vmax.f32 %v2331, 0.0
      %v2460 = vmax.f32 %v2332, 0.0
      %v2461 = vmax.f32 %v2333, 0.0
      %v2462 = vmax.f32 %v2334, 0.0
      %v2463 = vmax.f32 %v2335, 0.0
      %v2464 = vmax.f32 %v2336, 0.0
      %v2465 = vmax.f32 %v2337, 0.0
      %v2466 = vmax.f32 %v2338, 0.0
      %v2467 = vmax.f32 %v2339, 0.0
      %v2468 = vmax.f32 %v2340, 0.0
      %v2469 = vmax.f32 %v2341, 0.0
      %v2470 = vmax.f32 %v2342, 0.0
      %v2471 = vmax.f32 %v2343, 0.0
      %v2472 = vmax.f32 %v2344, 0.0
      %v2473 = vmax.f32 %v2345, 0.0
      %v2474 = vmax.f32 %v2346, 0.0
      %v2475 = vmax.f32 %v2347, 0.0
      %v2476 = vmax.f32 %v2348, 0.0
      %v2477 = vmax.f32 %v2349, 0.0
      %v2478 = vmax.f32 %v2350, 0.0
      %v2479 = vmax.f32 %v2351, 0.0
      %v2480 = vmax.f32 %v2352, 0.0
      %v2481 = vmax.f32 %v2353, 0.0
      %v2482 = vmax.f32 %v2354, 0.0
      %v2483 = vmax.f32 %v2355, 0.0
      %v2484 = vmax.f32 %v2356, 0.0
      %v2485 = vmax.f32 %v2357, 0.0
      %v2486 = vmax.f32 %v2358, 0.0
      %v2487 = vmax.f32 %v2359, 0.0
      %v2488 = vmax.f32 %v2360, 0.0
      %v2489 = vmax.f32 %v2361, 0.0
      %v2490 = vmax.f32 %v2362, 0.0
      %v2491 = vmax.f32 %v2363, 0.0
      %v2492 = vmax.f32 %v2364, 0.0
      %v2493 = vmax.f32 %v2365, 0.0
      %v2494 = vmax.f32 %v2366, 0.0
      %v2495 = vmax.f32 %v2367, 0.0
      %v2496 = vmax.f32 %v2368, 0.0
      %v2497 = vmax.f32 %v2369, 0.0
      %v2498 = vmax.f32 %v2370, 0.0
      %v2499 = vmax.f32 %v2371, 0.0
      %v2500 = vmax.f32 %v2372, 0.0
      %v2501 = vmax.f32 %v2373, 0.0
      %v2502 = vmax.f32 %v2374, 0.0
      %v2503 = vmax.f32 %v2375, 0.0
      %v2504 = vmax.f32 %v2376, 0.0
      %v2505 = vmax.f32 %v2377, 0.0
      %v2506 = vmax.f32 %v2378, 0.0
      %v2507 = vmax.f32 %v2379, 0.0
      %v2508 = vmax.f32 %v2380, 0.0
      %v2509 = vmax.f32 %v2381, 0.0
      %v2510 = vmax.f32 %v2382, 0.0
      %v2511 = vmax.f32 %v2383, 0.0
      %v2512 = vmax.f32 %v2384, 0.0
      %v2513 = vmax.f32 %v2385, 0.0
      %v2514 = vmax.f32 %v2386, 0.0
      %v2515 = vmax.f32 %v2387, 0.0
      %v2516 = vmax.f32 %v2388, 0.0
      %v2517 = vmax.f32 %v2389, 0.0
      %v2518 = vmax.f32 %v2390, 0.0
      %v2519 = vmax.f32 %v2391, 0.0
      %v2520 = vmax.f32 %v2392, 0.0
      %v2521 = vmax.f32 %v2393, 0.0
      %v2522 = vmax.f32 %v2394, 0.0
      %v2523 = vmax.f32 %v2395, 0.0
      %v2524 = vmax.f32 %v2396, 0.0
      %v2525 = vmax.f32 %v2397, 0.0
      %v2526 = vmax.f32 %v2398, 0.0
      %v2527 = vmax.f32 %v2399, 0.0
      %v2528 = vmax.f32 %v2400, 0.0
      %v2529 = vmax.f32 %v2401, 0.0
      %v2530 = vpack.c.bf16 %v2410, %v2402
      %v2531 = vpack.c.bf16 %v2411, %v2403
      %v2532 = vpack.c.bf16 %v2412, %v2404
      %v2533 = vpack.c.bf16 %v2413, %v2405
      %v2534 = vpack.c.bf16 %v2414, %v2406
      %v2535 = vpack.c.bf16 %v2415, %v2407
      %v2536 = vpack.c.bf16 %v2416, %v2408
      %v2537 = vpack.c.bf16 %v2417, %v2409
      %v2538 = vpack.c.bf16 %v2426, %v2418
      %v2539 = vpack.c.bf16 %v2427, %v2419
      %v2540 = vpack.c.bf16 %v2428, %v2420
      %v2541 = vpack.c.bf16 %v2429, %v2421
      %v2542 = vpack.c.bf16 %v2430, %v2422
      %v2543 = vpack.c.bf16 %v2431, %v2423
      %v2544 = vpack.c.bf16 %v2432, %v2424
      %v2545 = vpack.c.bf16 %v2433, %v2425
      %v2546 = vpack.c.bf16 %v2442, %v2434
      %v2547 = vpack.c.bf16 %v2443, %v2435
      %v2548 = vpack.c.bf16 %v2444, %v2436
      %v2549 = vpack.c.bf16 %v2445, %v2437
      %v2550 = vpack.c.bf16 %v2446, %v2438
      %v2551 = vpack.c.bf16 %v2447, %v2439
      %v2552 = vpack.c.bf16 %v2448, %v2440
      %v2553 = vpack.c.bf16 %v2449, %v2441
      %v2554 = vpack.c.bf16 %v2458, %v2450
      %v2555 = vpack.c.bf16 %v2459, %v2451
      %v2556 = vpack.c.bf16 %v2460, %v2452
      %v2557 = vpack.c.bf16 %v2461, %v2453
      %v2558 = vpack.c.bf16 %v2462, %v2454
      %v2559 = vpack.c.bf16 %v2463, %v2455
      %v2560 = vpack.c.bf16 %v2464, %v2456
      %v2561 = vpack.c.bf16 %v2465, %v2457
      %v2562 = vpack.c.bf16 %v2474, %v2466
      %v2563 = vpack.c.bf16 %v2475, %v2467
      %v2564 = vpack.c.bf16 %v2476, %v2468
      %v2565 = vpack.c.bf16 %v2477, %v2469
      %v2566 = vpack.c.bf16 %v2478, %v2470
      %v2567 = vpack.c.bf16 %v2479, %v2471
      %v2568 = vpack.c.bf16 %v2480, %v2472
      %v2569 = vpack.c.bf16 %v2481, %v2473
      %v2570 = vpack.c.bf16 %v2490, %v2482
      %v2571 = vpack.c.bf16 %v2491, %v2483
      %v2572 = vpack.c.bf16 %v2492, %v2484
      %v2573 = vpack.c.bf16 %v2493, %v2485
      %v2574 = vpack.c.bf16 %v2494, %v2486
      %v2575 = vpack.c.bf16 %v2495, %v2487
      %v2576 = vpack.c.bf16 %v2496, %v2488
      %v2577 = vpack.c.bf16 %v2497, %v2489
      %v2578 = vpack.c.bf16 %v2506, %v2498
      %v2579 = vpack.c.bf16 %v2507, %v2499
      %v2580 = vpack.c.bf16 %v2508, %v2500
      %v2581 = vpack.c.bf16 %v2509, %v2501
      %v2582 = vpack.c.bf16 %v2510, %v2502
      %v2583 = vpack.c.bf16 %v2511, %v2503
      %v2584 = vpack.c.bf16 %v2512, %v2504
      %v2585 = vpack.c.bf16 %v2513, %v2505
      %v2586 = vpack.c.bf16 %v2522, %v2514
      %v2587 = vpack.c.bf16 %v2523, %v2515
      %v2588 = vpack.c.bf16 %v2524, %v2516
      %v2589 = vpack.c.bf16 %v2525, %v2517
      %v2590 = vpack.c.bf16 %v2526, %v2518
      %v2591 = vpack.c.bf16 %v2527, %v2519
      %v2592 = vpack.c.bf16 %v2528, %v2520
      %v2593 = vpack.c.bf16 %v2529, %v2521
      %v2594 = vld [vmem:[%s3] sm:$0xf]
      %v2595 = vld [vmem:[%s3 + $0x4] sm:$0xf]
      %v2596 = vld [vmem:[%s3 + $0x8] sm:$0xf]
      %v2597 = vld [vmem:[%s3 + $0xc] sm:$0xf]
      %v2598 = vld [vmem:[%s3 + $0x10] sm:$0xf]
      %v2599 = vld [vmem:[%s3 + $0x14] sm:$0xf]
      %v2600 = vld [vmem:[%s3 + $0x18] sm:$0xf]
      %v2601 = vld [vmem:[%s3 + $0x1c] sm:$0xf]
      %v2602 = vld [vmem:[%s3 + $0x20] sm:$0xf]
      %v2603 = vld [vmem:[%s3 + $0x24] sm:$0xf]
      %v2604 = vld [vmem:[%s3 + $0x28] sm:$0xf]
      %v2605 = vld [vmem:[%s3 + $0x2c] sm:$0xf]
      %v2606 = vld [vmem:[%s3 + $0x30] sm:$0xf]
      %v2607 = vld [vmem:[%s3 + $0x34] sm:$0xf]
      %v2608 = vld [vmem:[%s3 + $0x38] sm:$0xf]
      %v2609 = vld [vmem:[%s3 + $0x3c] sm:$0xf]
      %v2610 = vld [vmem:[%s3 + $0x40] sm:$0xf]
      %v2611 = vld [vmem:[%s3 + $0x44] sm:$0xf]
      %v2612 = vld [vmem:[%s3 + $0x48] sm:$0xf]
      %v2613 = vld [vmem:[%s3 + $0x4c] sm:$0xf]
      %v2614 = vld [vmem:[%s3 + $0x50] sm:$0xf]
      %v2615 = vld [vmem:[%s3 + $0x54] sm:$0xf]
      %v2616 = vld [vmem:[%s3 + $0x58] sm:$0xf]
      %v2617 = vld [vmem:[%s3 + $0x5c] sm:$0xf]
      %v2618 = vld [vmem:[%s3 + $0x60] sm:$0xf]
      %v2619 = vld [vmem:[%s3 + $0x64] sm:$0xf]
      %v2620 = vld [vmem:[%s3 + $0x68] sm:$0xf]
      %v2621 = vld [vmem:[%s3 + $0x6c] sm:$0xf]
      %v2622 = vld [vmem:[%s3 + $0x70] sm:$0xf]
      %v2623 = vld [vmem:[%s3 + $0x74] sm:$0xf]
      %v2624 = vld [vmem:[%s3 + $0x78] sm:$0xf]
      %v2625 = vld [vmem:[%s3 + $0x7c] sm:$0xf]
      %v2626 = vld [vmem:[%s3 + $0x80] sm:$0xf]
      %v2627 = vld [vmem:[%s3 + $0x84] sm:$0xf]
      %v2628 = vld [vmem:[%s3 + $0x88] sm:$0xf]
      %v2629 = vld [vmem:[%s3 + $0x8c] sm:$0xf]
      %v2630 = vld [vmem:[%s3 + $0x90] sm:$0xf]
      %v2631 = vld [vmem:[%s3 + $0x94] sm:$0xf]
      %v2632 = vld [vmem:[%s3 + $0x98] sm:$0xf]
      %v2633 = vld [vmem:[%s3 + $0x9c] sm:$0xf]
      %v2634 = vld [vmem:[%s3 + $0xa0] sm:$0xf]
      %v2635 = vld [vmem:[%s3 + $0xa4] sm:$0xf]
      %v2636 = vld [vmem:[%s3 + $0xa8] sm:$0xf]
      %v2637 = vld [vmem:[%s3 + $0xac] sm:$0xf]
      %v2638 = vld [vmem:[%s3 + $0xb0] sm:$0xf]
      %v2639 = vld [vmem:[%s3 + $0xb4] sm:$0xf]
      %v2640 = vld [vmem:[%s3 + $0xb8] sm:$0xf]
      %v2641 = vld [vmem:[%s3 + $0xbc] sm:$0xf]
      %v2642 = vld [vmem:[%s3 + $0xc0] sm:$0xf]
      %v2643 = vld [vmem:[%s3 + $0xc4] sm:$0xf]
      %v2644 = vld [vmem:[%s3 + $0xc8] sm:$0xf]
      %v2645 = vld [vmem:[%s3 + $0xcc] sm:$0xf]
      %v2646 = vld [vmem:[%s3 + $0xd0] sm:$0xf]
      %v2647 = vld [vmem:[%s3 + $0xd4] sm:$0xf]
      %v2648 = vld [vmem:[%s3 + $0xd8] sm:$0xf]
      %v2649 = vld [vmem:[%s3 + $0xdc] sm:$0xf]
      %v2650 = vld [vmem:[%s3 + $0xe0] sm:$0xf]
      %v2651 = vld [vmem:[%s3 + $0xe4] sm:$0xf]
      %v2652 = vld [vmem:[%s3 + $0xe8] sm:$0xf]
      %v2653 = vld [vmem:[%s3 + $0xec] sm:$0xf]
      %v2654 = vld [vmem:[%s3 + $0xf0] sm:$0xf]
      %v2655 = vld [vmem:[%s3 + $0xf4] sm:$0xf]
      %v2656 = vld [vmem:[%s3 + $0xf8] sm:$0xf]
      %v2657 = vld [vmem:[%s3 + $0xfc] sm:$0xf]
      %v2658 = vld [vmem:[%s3 + $0x100] sm:$0xf]
      %v2659 = vld [vmem:[%s3 + $0x104] sm:$0xf]
      %v2660 = vld [vmem:[%s3 + $0x108] sm:$0xf]
      %v2661 = vld [vmem:[%s3 + $0x10c] sm:$0xf]
      %v2662 = vld [vmem:[%s3 + $0x110] sm:$0xf]
      %v2663 = vld [vmem:[%s3 + $0x114] sm:$0xf]
      %v2664 = vld [vmem:[%s3 + $0x118] sm:$0xf]
      %v2665 = vld [vmem:[%s3 + $0x11c] sm:$0xf]
      %v2666 = vld [vmem:[%s3 + $0x120] sm:$0xf]
      %v2667 = vld [vmem:[%s3 + $0x124] sm:$0xf]
      %v2668 = vld [vmem:[%s3 + $0x128] sm:$0xf]
      %v2669 = vld [vmem:[%s3 + $0x12c] sm:$0xf]
      %v2670 = vld [vmem:[%s3 + $0x130] sm:$0xf]
      %v2671 = vld [vmem:[%s3 + $0x134] sm:$0xf]
      %v2672 = vld [vmem:[%s3 + $0x138] sm:$0xf]
      %v2673 = vld [vmem:[%s3 + $0x13c] sm:$0xf]
      %v2674 = vld [vmem:[%s3 + $0x140] sm:$0xf]
      %v2675 = vld [vmem:[%s3 + $0x144] sm:$0xf]
      %v2676 = vld [vmem:[%s3 + $0x148] sm:$0xf]
      %v2677 = vld [vmem:[%s3 + $0x14c] sm:$0xf]
      %v2678 = vld [vmem:[%s3 + $0x150] sm:$0xf]
      %v2679 = vld [vmem:[%s3 + $0x154] sm:$0xf]
      %v2680 = vld [vmem:[%s3 + $0x158] sm:$0xf]
      %v2681 = vld [vmem:[%s3 + $0x15c] sm:$0xf]
      %v2682 = vld [vmem:[%s3 + $0x160] sm:$0xf]
      %v2683 = vld [vmem:[%s3 + $0x164] sm:$0xf]
      %v2684 = vld [vmem:[%s3 + $0x168] sm:$0xf]
      %v2685 = vld [vmem:[%s3 + $0x16c] sm:$0xf]
      %v2686 = vld [vmem:[%s3 + $0x170] sm:$0xf]
      %v2687 = vld [vmem:[%s3 + $0x174] sm:$0xf]
      %v2688 = vld [vmem:[%s3 + $0x178] sm:$0xf]
      %v2689 = vld [vmem:[%s3 + $0x17c] sm:$0xf]
      %v2690 = vld [vmem:[%s3 + $0x180] sm:$0xf]
      %v2691 = vld [vmem:[%s3 + $0x184] sm:$0xf]
      %v2692 = vld [vmem:[%s3 + $0x188] sm:$0xf]
      %v2693 = vld [vmem:[%s3 + $0x18c] sm:$0xf]
      %v2694 = vld [vmem:[%s3 + $0x190] sm:$0xf]
      %v2695 = vld [vmem:[%s3 + $0x194] sm:$0xf]
      %v2696 = vld [vmem:[%s3 + $0x198] sm:$0xf]
      %v2697 = vld [vmem:[%s3 + $0x19c] sm:$0xf]
      %v2698 = vld [vmem:[%s3 + $0x1a0] sm:$0xf]
      %v2699 = vld [vmem:[%s3 + $0x1a4] sm:$0xf]
      %v2700 = vld [vmem:[%s3 + $0x1a8] sm:$0xf]
      %v2701 = vld [vmem:[%s3 + $0x1ac] sm:$0xf]
      %v2702 = vld [vmem:[%s3 + $0x1b0] sm:$0xf]
      %v2703 = vld [vmem:[%s3 + $0x1b4] sm:$0xf]
      %v2704 = vld [vmem:[%s3 + $0x1b8] sm:$0xf]
      %v2705 = vld [vmem:[%s3 + $0x1bc] sm:$0xf]
      %v2706 = vld [vmem:[%s3 + $0x1c0] sm:$0xf]
      %v2707 = vld [vmem:[%s3 + $0x1c4] sm:$0xf]
      %v2708 = vld [vmem:[%s3 + $0x1c8] sm:$0xf]
      %v2709 = vld [vmem:[%s3 + $0x1cc] sm:$0xf]
      %v2710 = vld [vmem:[%s3 + $0x1d0] sm:$0xf]
      %v2711 = vld [vmem:[%s3 + $0x1d4] sm:$0xf]
      %v2712 = vld [vmem:[%s3 + $0x1d8] sm:$0xf]
      %v2713 = vld [vmem:[%s3 + $0x1dc] sm:$0xf]
      %v2714 = vld [vmem:[%s3 + $0x1e0] sm:$0xf]
      %v2715 = vld [vmem:[%s3 + $0x1e4] sm:$0xf]
      %v2716 = vld [vmem:[%s3 + $0x1e8] sm:$0xf]
      %v2717 = vld [vmem:[%s3 + $0x1ec] sm:$0xf]
      %v2718 = vld [vmem:[%s3 + $0x1f0] sm:$0xf]
      %v2719 = vld [vmem:[%s3 + $0x1f4] sm:$0xf]
      %v2720 = vld [vmem:[%s3 + $0x1f8] sm:$0xf]
      %v2721 = vld [vmem:[%s3 + $0x1fc] sm:$0xf]
      %v2722 = vld [vmem:[%s4] sm:$0x1]
      %v2724 = vlaneseq
      %v2725 = vshrl.u32 %v2724, 7
      %v2726 = vsub.s32 0, %v2725
      %v2727 = vrot.slane %v2722, %v2726
      %v2857 = vunpack.c.l.b16 %v2594
      %v2858 = vunpack.c.l.b16 %v2595
      %v2859 = vunpack.c.l.b16 %v2596
      %v2860 = vunpack.c.l.b16 %v2597
      %v2861 = vunpack.c.l.b16 %v2598
      %v2862 = vunpack.c.l.b16 %v2599
      %v2863 = vunpack.c.l.b16 %v2600
      %v2864 = vunpack.c.l.b16 %v2601
      %v2865 = vunpack.c.l.b16 %v2602
      %v2866 = vunpack.c.l.b16 %v2603
      %v2867 = vunpack.c.l.b16 %v2604
      %v2868 = vunpack.c.l.b16 %v2605
      %v2869 = vunpack.c.l.b16 %v2606
      %v2870 = vunpack.c.l.b16 %v2607
      %v2871 = vunpack.c.l.b16 %v2608
      %v2872 = vunpack.c.l.b16 %v2609
      %v2873 = vunpack.c.l.b16 %v2610
      %v2874 = vunpack.c.l.b16 %v2611
      %v2875 = vunpack.c.l.b16 %v2612
      %v2876 = vunpack.c.l.b16 %v2613
      %v2877 = vunpack.c.l.b16 %v2614
      %v2878 = vunpack.c.l.b16 %v2615
      %v2879 = vunpack.c.l.b16 %v2616
      %v2880 = vunpack.c.l.b16 %v2617
      %v2881 = vunpack.c.l.b16 %v2618
      %v2882 = vunpack.c.l.b16 %v2619
      %v2883 = vunpack.c.l.b16 %v2620
      %v2884 = vunpack.c.l.b16 %v2621
      %v2885 = vunpack.c.l.b16 %v2622
      %v2886 = vunpack.c.l.b16 %v2623
      %v2887 = vunpack.c.l.b16 %v2624
      %v2888 = vunpack.c.l.b16 %v2625
      %v2889 = vunpack.c.l.b16 %v2626
      %v2890 = vunpack.c.l.b16 %v2627
      %v2891 = vunpack.c.l.b16 %v2628
      %v2892 = vunpack.c.l.b16 %v2629
      %v2893 = vunpack.c.l.b16 %v2630
      %v2894 = vunpack.c.l.b16 %v2631
      %v2895 = vunpack.c.l.b16 %v2632
      %v2896 = vunpack.c.l.b16 %v2633
      %v2897 = vunpack.c.l.b16 %v2634
      %v2898 = vunpack.c.l.b16 %v2635
      %v2899 = vunpack.c.l.b16 %v2636
      %v2900 = vunpack.c.l.b16 %v2637
      %v2901 = vunpack.c.l.b16 %v2638
      %v2902 = vunpack.c.l.b16 %v2639
      %v2903 = vunpack.c.l.b16 %v2640
      %v2904 = vunpack.c.l.b16 %v2641
      %v2905 = vunpack.c.l.b16 %v2642
      %v2906 = vunpack.c.l.b16 %v2643
      %v2907 = vunpack.c.l.b16 %v2644
      %v2908 = vunpack.c.l.b16 %v2645
      %v2909 = vunpack.c.l.b16 %v2646
      %v2910 = vunpack.c.l.b16 %v2647
      %v2911 = vunpack.c.l.b16 %v2648
      %v2912 = vunpack.c.l.b16 %v2649
      %v2913 = vunpack.c.l.b16 %v2650
      %v2914 = vunpack.c.l.b16 %v2651
      %v2915 = vunpack.c.l.b16 %v2652
      %v2916 = vunpack.c.l.b16 %v2653
      %v2917 = vunpack.c.l.b16 %v2654
      %v2918 = vunpack.c.l.b16 %v2655
      %v2919 = vunpack.c.l.b16 %v2656
      %v2920 = vunpack.c.l.b16 %v2657
      %v2921 = vunpack.c.l.b16 %v2658
      %v2922 = vunpack.c.l.b16 %v2659
      %v2923 = vunpack.c.l.b16 %v2660
      %v2924 = vunpack.c.l.b16 %v2661
      %v2925 = vunpack.c.l.b16 %v2662
      %v2926 = vunpack.c.l.b16 %v2663
      %v2927 = vunpack.c.l.b16 %v2664
      %v2928 = vunpack.c.l.b16 %v2665
      %v2929 = vunpack.c.l.b16 %v2666
      %v2930 = vunpack.c.l.b16 %v2667
      %v2931 = vunpack.c.l.b16 %v2668
      %v2932 = vunpack.c.l.b16 %v2669
      %v2933 = vunpack.c.l.b16 %v2670
      %v2934 = vunpack.c.l.b16 %v2671
      %v2935 = vunpack.c.l.b16 %v2672
      %v2936 = vunpack.c.l.b16 %v2673
      %v2937 = vunpack.c.l.b16 %v2674
      %v2938 = vunpack.c.l.b16 %v2675
      %v2939 = vunpack.c.l.b16 %v2676
      %v2940 = vunpack.c.l.b16 %v2677
      %v2941 = vunpack.c.l.b16 %v2678
      %v2942 = vunpack.c.l.b16 %v2679
      %v2943 = vunpack.c.l.b16 %v2680
      %v2944 = vunpack.c.l.b16 %v2681
      %v2945 = vunpack.c.l.b16 %v2682
      %v2946 = vunpack.c.l.b16 %v2683
      %v2947 = vunpack.c.l.b16 %v2684
      %v2948 = vunpack.c.l.b16 %v2685
      %v2949 = vunpack.c.l.b16 %v2686
      %v2950 = vunpack.c.l.b16 %v2687
      %v2951 = vunpack.c.l.b16 %v2688
      %v2952 = vunpack.c.l.b16 %v2689
      %v2953 = vunpack.c.l.b16 %v2690
      %v2954 = vunpack.c.l.b16 %v2691
      %v2955 = vunpack.c.l.b16 %v2692
      %v2956 = vunpack.c.l.b16 %v2693
      %v2957 = vunpack.c.l.b16 %v2694
      %v2958 = vunpack.c.l.b16 %v2695
      %v2959 = vunpack.c.l.b16 %v2696
      %v2960 = vunpack.c.l.b16 %v2697
      %v2961 = vunpack.c.l.b16 %v2698
      %v2962 = vunpack.c.l.b16 %v2699
      %v2963 = vunpack.c.l.b16 %v2700
      %v2964 = vunpack.c.l.b16 %v2701
      %v2965 = vunpack.c.l.b16 %v2702
      %v2966 = vunpack.c.l.b16 %v2703
      %v2967 = vunpack.c.l.b16 %v2704
      %v2968 = vunpack.c.l.b16 %v2705
      %v2969 = vunpack.c.l.b16 %v2706
      %v2970 = vunpack.c.l.b16 %v2707
      %v2971 = vunpack.c.l.b16 %v2708
      %v2972 = vunpack.c.l.b16 %v2709
      %v2973 = vunpack.c.l.b16 %v2710
      %v2974 = vunpack.c.l.b16 %v2711
      %v2975 = vunpack.c.l.b16 %v2712
      %v2976 = vunpack.c.l.b16 %v2713
      %v2977 = vunpack.c.l.b16 %v2714
      %v2978 = vunpack.c.l.b16 %v2715
      %v2979 = vunpack.c.l.b16 %v2716
      %v2980 = vunpack.c.l.b16 %v2717
      %v2981 = vunpack.c.l.b16 %v2718
      %v2982 = vunpack.c.l.b16 %v2719
      %v2983 = vunpack.c.l.b16 %v2720
      %v2984 = vunpack.c.l.b16 %v2721
      %v2985 = vpack.c.b16 %v2858, %v2857
      %v2986 = vpack.c.b16 %v2860, %v2859
      %v2987 = vpack.c.b16 %v2862, %v2861
      %v2988 = vpack.c.b16 %v2864, %v2863
      %v2989 = vpack.c.b16 %v2866, %v2865
      %v2990 = vpack.c.b16 %v2868, %v2867
      %v2991 = vpack.c.b16 %v2870, %v2869
      %v2992 = vpack.c.b16 %v2872, %v2871
      %v2993 = vpack.c.b16 %v2874, %v2873
      %v2994 = vpack.c.b16 %v2876, %v2875
      %v2995 = vpack.c.b16 %v2878, %v2877
      %v2996 = vpack.c.b16 %v2880, %v2879
      %v2997 = vpack.c.b16 %v2882, %v2881
      %v2998 = vpack.c.b16 %v2884, %v2883
      %v2999 = vpack.c.b16 %v2886, %v2885
      %v3000 = vpack.c.b16 %v2888, %v2887
      %v3001 = vpack.c.b16 %v2890, %v2889
      %v3002 = vpack.c.b16 %v2892, %v2891
      %v3003 = vpack.c.b16 %v2894, %v2893
      %v3004 = vpack.c.b16 %v2896, %v2895
      %v3005 = vpack.c.b16 %v2898, %v2897
      %v3006 = vpack.c.b16 %v2900, %v2899
      %v3007 = vpack.c.b16 %v2902, %v2901
      %v3008 = vpack.c.b16 %v2904, %v2903
      %v3009 = vpack.c.b16 %v2906, %v2905
      %v3010 = vpack.c.b16 %v2908, %v2907
      %v3011 = vpack.c.b16 %v2910, %v2909
      %v3012 = vpack.c.b16 %v2912, %v2911
      %v3013 = vpack.c.b16 %v2914, %v2913
      %v3014 = vpack.c.b16 %v2916, %v2915
      %v3015 = vpack.c.b16 %v2918, %v2917
      %v3016 = vpack.c.b16 %v2920, %v2919
      %v3017 = vpack.c.b16 %v2922, %v2921
      %v3018 = vpack.c.b16 %v2924, %v2923
      %v3019 = vpack.c.b16 %v2926, %v2925
      %v3020 = vpack.c.b16 %v2928, %v2927
      %v3021 = vpack.c.b16 %v2930, %v2929
      %v3022 = vpack.c.b16 %v2932, %v2931
      %v3023 = vpack.c.b16 %v2934, %v2933
      %v3024 = vpack.c.b16 %v2936, %v2935
      %v3025 = vpack.c.b16 %v2938, %v2937
      %v3026 = vpack.c.b16 %v2940, %v2939
      %v3027 = vpack.c.b16 %v2942, %v2941
      %v3028 = vpack.c.b16 %v2944, %v2943
      %v3029 = vpack.c.b16 %v2946, %v2945
      %v3030 = vpack.c.b16 %v2948, %v2947
      %v3031 = vpack.c.b16 %v2950, %v2949
      %v3032 = vpack.c.b16 %v2952, %v2951
      %v3033 = vpack.c.b16 %v2954, %v2953
      %v3034 = vpack.c.b16 %v2956, %v2955
      %v3035 = vpack.c.b16 %v2958, %v2957
      %v3036 = vpack.c.b16 %v2960, %v2959
      %v3037 = vpack.c.b16 %v2962, %v2961
      %v3038 = vpack.c.b16 %v2964, %v2963
      %v3039 = vpack.c.b16 %v2966, %v2965
      %v3040 = vpack.c.b16 %v2968, %v2967
      %v3041 = vpack.c.b16 %v2970, %v2969
      %v3042 = vpack.c.b16 %v2972, %v2971
      %v3043 = vpack.c.b16 %v2974, %v2973
      %v3044 = vpack.c.b16 %v2976, %v2975
      %v3045 = vpack.c.b16 %v2978, %v2977
      %v3046 = vpack.c.b16 %v2980, %v2979
      %v3047 = vpack.c.b16 %v2982, %v2981
      %v3048 = vpack.c.b16 %v2984, %v2983
      %3113 = vmatprep.subr.bf16.mxu0 0
      %3114 = vmatpush1.bf16.msra.mxu0 %v2985
      %3115 = vmatprep.subr.bf16.mxu0 0
      %3116 = vmatpush1.bf16.msra.mxu0 %v2986
      %3117 = vmatprep.subr.bf16.mxu0 0
      %3118 = vmatpush1.bf16.msra.mxu0 %v2987
      %3119 = vmatprep.subr.bf16.mxu0 0
      %3120 = vmatpush1.bf16.msra.mxu0 %v2988
      %3121 = vmatprep.subr.bf16.mxu0 0
      %3122 = vmatpush1.bf16.msra.mxu0 %v2989
      %3123 = vmatprep.subr.bf16.mxu0 0
      %3124 = vmatpush1.bf16.msra.mxu0 %v2990
      %3125 = vmatprep.subr.bf16.mxu0 0
      %3126 = vmatpush1.bf16.msra.mxu0 %v2991
      %3127 = vmatprep.subr.bf16.mxu0 0
      %3128 = vmatpush1.bf16.msra.mxu0 %v2992
      %3129 = vmatprep.subr.bf16.mxu0 0
      %3130 = vmatpush1.bf16.msra.mxu0 %v2993
      %3131 = vmatprep.subr.bf16.mxu0 0
      %3132 = vmatpush1.bf16.msra.mxu0 %v2994
      %3133 = vmatprep.subr.bf16.mxu0 0
      %3134 = vmatpush1.bf16.msra.mxu0 %v2995
      %3135 = vmatprep.subr.bf16.mxu0 0
      %3136 = vmatpush1.bf16.msra.mxu0 %v2996
      %3137 = vmatprep.subr.bf16.mxu0 0
      %3138 = vmatpush1.bf16.msra.mxu0 %v2997
      %3139 = vmatprep.subr.bf16.mxu0 0
      %3140 = vmatpush1.bf16.msra.mxu0 %v2998
      %3141 = vmatprep.subr.bf16.mxu0 0
      %3142 = vmatpush1.bf16.msra.mxu0 %v2999
      %3143 = vmatprep.subr.bf16.mxu0 0
      %3144 = vmatpush1.bf16.msra.mxu0 %v3000
      %3145 = vmatprep.mubr.bf16.mxu0 %v2531
      %3146 = vmatmul.mubr.bf16.gmra.mrb[0].mxu0 %v2530
      %v3147 = vpop.f32.mrb[0].mxu0
      %v3148 = vadd.f32 %v2727, %v3147
      %v3149 = vpop.f32.mrb[0].mxu0
      %v3150 = vpop.f32.mrb[0].mxu0
      %v3151 = vadd.f32 %v2727, %v3150
      %v3152 = vpop.f32.mrb[0].mxu0
      %3153 = vmatprep.mubr.bf16.mxu0 %v2539
      %3154 = vmatmul.mubr.bf16.gmra.mrb[0].mxu0 %v2538
      %v3155 = vpop.f32.mrb[0].mxu0
      %v3156 = vadd.f32 %v2727, %v3155
      %v3157 = vpop.f32.mrb[0].mxu0
      %v3158 = vpop.f32.mrb[0].mxu0
      %v3159 = vadd.f32 %v2727, %v3158
      %v3160 = vpop.f32.mrb[0].mxu0
      %3161 = vmatprep.mubr.bf16.mxu0 %v2547
      %3162 = vmatmul.mubr.bf16.gmra.mrb[0].mxu0 %v2546
      %v3163 = vpop.f32.mrb[0].mxu0
      %v3164 = vadd.f32 %v2727, %v3163
      %v3165 = vpop.f32.mrb[0].mxu0
      %v3166 = vpop.f32.mrb[0].mxu0
      %v3167 = vadd.f32 %v2727, %v3166
      %v3168 = vpop.f32.mrb[0].mxu0
      %3169 = vmatprep.mubr.bf16.mxu0 %v2555
      %3170 = vmatmul.mubr.bf16.gmra.mrb[0].mxu0 %v2554
      %v3171 = vpop.f32.mrb[0].mxu0
      %v3172 = vadd.f32 %v2727, %v3171
      %v3173 = vpop.f32.mrb[0].mxu0
      %v3174 = vpop.f32.mrb[0].mxu0
      %v3175 = vadd.f32 %v2727, %v3174
      %v3176 = vpop.f32.mrb[0].mxu0
      %3177 = vmatprep.mubr.bf16.mxu0 %v2563
      %3178 = vmatmul.mubr.bf16.gmra.mrb[0].mxu0 %v2562
      %v3179 = vpop.f32.mrb[0].mxu0
      %v3180 = vadd.f32 %v2727, %v3179
      %v3181 = vpop.f32.mrb[0].mxu0
      %v3182 = vpop.f32.mrb[0].mxu0
      %v3183 = vadd.f32 %v2727, %v3182
      %v3184 = vpop.f32.mrb[0].mxu0
      %3185 = vmatprep.mubr.bf16.mxu0 %v2571
      %3186 = vmatmul.mubr.bf16.gmra.mrb[0].mxu0 %v2570
      %v3187 = vpop.f32.mrb[0].mxu0
      %v3188 = vadd.f32 %v2727, %v3187
      %v3189 = vpop.f32.mrb[0].mxu0
      %v3190 = vpop.f32.mrb[0].mxu0
      %v3191 = vadd.f32 %v2727, %v3190
      %v3192 = vpop.f32.mrb[0].mxu0
      %3193 = vmatprep.mubr.bf16.mxu0 %v2579
      %3194 = vmatmul.mubr.bf16.gmra.mrb[0].mxu0 %v2578
      %v3195 = vpop.f32.mrb[0].mxu0
      %v3196 = vadd.f32 %v2727, %v3195
      %v3197 = vpop.f32.mrb[0].mxu0
      %v3198 = vpop.f32.mrb[0].mxu0
      %v3199 = vadd.f32 %v2727, %v3198
      %v3200 = vpop.f32.mrb[0].mxu0
      %3201 = vmatprep.mubr.bf16.mxu0 %v2587
      %3202 = vmatmul.mubr.bf16.gmra.mrb[0].mxu0 %v2586
      %v3203 = vpop.f32.mrb[0].mxu0
      %v3204 = vadd.f32 %v2727, %v3203
      %v3205 = vpop.f32.mrb[0].mxu0
      %v3206 = vpop.f32.mrb[0].mxu0
      %v3207 = vadd.f32 %v2727, %v3206
      %v3208 = vpop.f32.mrb[0].mxu0
      %3209 = vdwg.mxu0
      %3210 = vmatprep.subr.bf16.mxu0 0
      %3211 = vmatpush1.bf16.msra.mxu0 %v3001
      %3212 = vmatprep.subr.bf16.mxu0 0
      %3213 = vmatpush1.bf16.msra.mxu0 %v3002
      %3214 = vmatprep.subr.bf16.mxu0 0
      %3215 = vmatpush1.bf16.msra.mxu0 %v3003
      %3216 = vmatprep.subr.bf16.mxu0 0
      %3217 = vmatpush1.bf16.msra.mxu0 %v3004
      %3218 = vmatprep.subr.bf16.mxu0 0
      %3219 = vmatpush1.bf16.msra.mxu0 %v3005
      %3220 = vmatprep.subr.bf16.mxu0 0
      %3221 = vmatpush1.bf16.msra.mxu0 %v3006
      %3222 = vmatprep.subr.bf16.mxu0 0
      %3223 = vmatpush1.bf16.msra.mxu0 %v3007
      %3224 = vmatprep.subr.bf16.mxu0 0
      %3225 = vmatpush1.bf16.msra.mxu0 %v3008
      %3226 = vmatprep.subr.bf16.mxu0 0
      %3227 = vmatpush1.bf16.msra.mxu0 %v3009
      %3228 = vmatprep.subr.bf16.mxu0 0
      %3229 = vmatpush1.bf16.msra.mxu0 %v3010
      %3230 = vmatprep.subr.bf16.mxu0 0
      %3231 = vmatpush1.bf16.msra.mxu0 %v3011
      %3232 = vmatprep.subr.bf16.mxu0 0
      %3233 = vmatpush1.bf16.msra.mxu0 %v3012
      %3234 = vmatprep.subr.bf16.mxu0 0
      %3235 = vmatpush1.bf16.msra.mxu0 %v3013
      %3236 = vmatprep.subr.bf16.mxu0 0
      %3237 = vmatpush1.bf16.msra.mxu0 %v3014
      %3238 = vmatprep.subr.bf16.mxu0 0
      %3239 = vmatpush1.bf16.msra.mxu0 %v3015
      %3240 = vmatprep.subr.bf16.mxu0 0
      %3241 = vmatpush1.bf16.msra.mxu0 %v3016
      %3242 = vmatprep.mubr.bf16.mxu0 %v2533
      %3243 = vmatmul.mubr.bf16.gmra.mrb[0].mxu0 %v2532
      %v3244 = vpop.f32.mrb[0].mxu0
      %v3245 = vadd.f32 %v3148, %v3244
      %v3246 = vpop.f32.mrb[0].mxu0
      %v3247 = vpop.f32.mrb[0].mxu0
      %v3248 = vadd.f32 %v3151, %v3247
      %v3249 = vpop.f32.mrb[0].mxu0
      %3250 = vmatprep.mubr.bf16.mxu0 %v2541
      %3251 = vmatmul.mubr.bf16.gmra.mrb[0].mxu0 %v2540
      %v3252 = vpop.f32.mrb[0].mxu0
      %v3253 = vadd.f32 %v3156, %v3252
      %v3254 = vpop.f32.mrb[0].mxu0
      %v3255 = vpop.f32.mrb[0].mxu0
      %v3256 = vadd.f32 %v3159, %v3255
      %v3257 = vpop.f32.mrb[0].mxu0
      %3258 = vmatprep.mubr.bf16.mxu0 %v2549
      %3259 = vmatmul.mubr.bf16.gmra.mrb[0].mxu0 %v2548
      %v3260 = vpop.f32.mrb[0].mxu0
      %v3261 = vadd.f32 %v3164, %v3260
      %v3262 = vpop.f32.mrb[0].mxu0
      %v3263 = vpop.f32.mrb[0].mxu0
      %v3264 = vadd.f32 %v3167, %v3263
      %v3265 = vpop.f32.mrb[0].mxu0
      %3266 = vmatprep.mubr.bf16.mxu0 %v2557
      %3267 = vmatmul.mubr.bf16.gmra.mrb[0].mxu0 %v2556
      %v3268 = vpop.f32.mrb[0].mxu0
      %v3269 = vadd.f32 %v3172, %v3268
      %v3270 = vpop.f32.mrb[0].mxu0
      %v3271 = vpop.f32.mrb[0].mxu0
      %v3272 = vadd.f32 %v3175, %v3271
      %v3273 = vpop.f32.mrb[0].mxu0
      %3274 = vmatprep.mubr.bf16.mxu0 %v2565
      %3275 = vmatmul.mubr.bf16.gmra.mrb[0].mxu0 %v2564
      %v3276 = vpop.f32.mrb[0].mxu0
      %v3277 = vadd.f32 %v3180, %v3276
      %v3278 = vpop.f32.mrb[0].mxu0
      %v3279 = vpop.f32.mrb[0].mxu0
      %v3280 = vadd.f32 %v3183, %v3279
      %v3281 = vpop.f32.mrb[0].mxu0
      %3282 = vmatprep.mubr.bf16.mxu0 %v2573
      %3283 = vmatmul.mubr.bf16.gmra.mrb[0].mxu0 %v2572
      %v3284 = vpop.f32.mrb[0].mxu0
      %v3285 = vadd.f32 %v3188, %v3284
      %v3286 = vpop.f32.mrb[0].mxu0
      %v3287 = vpop.f32.mrb[0].mxu0
      %v3288 = vadd.f32 %v3191, %v3287
      %v3289 = vpop.f32.mrb[0].mxu0
      %3290 = vmatprep.mubr.bf16.mxu0 %v2581
      %3291 = vmatmul.mubr.bf16.gmra.mrb[0].mxu0 %v2580
      %v3292 = vpop.f32.mrb[0].mxu0
      %v3293 = vadd.f32 %v3196, %v3292
      %v3294 = vpop.f32.mrb[0].mxu0
      %v3295 = vpop.f32.mrb[0].mxu0
      %v3296 = vadd.f32 %v3199, %v3295
      %v3297 = vpop.f32.mrb[0].mxu0
      %3298 = vmatprep.mubr.bf16.mxu0 %v2589
      %3299 = vmatmul.mubr.bf16.gmra.mrb[0].mxu0 %v2588
      %v3300 = vpop.f32.mrb[0].mxu0
      %v3301 = vadd.f32 %v3204, %v3300
      %v3302 = vpop.f32.mrb[0].mxu0
      %v3303 = vpop.f32.mrb[0].mxu0
      %v3304 = vadd.f32 %v3207, %v3303
      %v3305 = vpop.f32.mrb[0].mxu0
      %3306 = vdwg.mxu0
      %3307 = vmatprep.subr.bf16.mxu0 0
      %3308 = vmatpush1.bf16.msra.mxu0 %v3017
      %3309 = vmatprep.subr.bf16.mxu0 0
      %3310 = vmatpush1.bf16.msra.mxu0 %v3018
      %3311 = vmatprep.subr.bf16.mxu0 0
      %3312 = vmatpush1.bf16.msra.mxu0 %v3019
      %3313 = vmatprep.subr.bf16.mxu0 0
      %3314 = vmatpush1.bf16.msra.mxu0 %v3020
      %3315 = vmatprep.subr.bf16.mxu0 0
      %3316 = vmatpush1.bf16.msra.mxu0 %v3021
      %3317 = vmatprep.subr.bf16.mxu0 0
      %3318 = vmatpush1.bf16.msra.mxu0 %v3022
      %3319 = vmatprep.subr.bf16.mxu0 0
      %3320 = vmatpush1.bf16.msra.mxu0 %v3023
      %3321 = vmatprep.subr.bf16.mxu0 0
      %3322 = vmatpush1.bf16.msra.mxu0 %v3024
      %3323 = vmatprep.subr.bf16.mxu0 0
      %3324 = vmatpush1.bf16.msra.mxu0 %v3025
      %3325 = vmatprep.subr.bf16.mxu0 0
      %3326 = vmatpush1.bf16.msra.mxu0 %v3026
      %3327 = vmatprep.subr.bf16.mxu0 0
      %3328 = vmatpush1.bf16.msra.mxu0 %v3027
      %3329 = vmatprep.subr.bf16.mxu0 0
      %3330 = vmatpush1.bf16.msra.mxu0 %v3028
      %3331 = vmatprep.subr.bf16.mxu0 0
      %3332 = vmatpush1.bf16.msra.mxu0 %v3029
      %3333 = vmatprep.subr.bf16.mxu0 0
      %3334 = vmatpush1.bf16.msra.mxu0 %v3030
      %3335 = vmatprep.subr.bf16.mxu0 0
      %3336 = vmatpush1.bf16.msra.mxu0 %v3031
      %3337 = vmatprep.subr.bf16.mxu0 0
      %3338 = vmatpush1.bf16.msra.mxu0 %v3032
      %3339 = vmatprep.mubr.bf16.mxu0 %v2535
      %3340 = vmatmul.mubr.bf16.gmra.mrb[0].mxu0 %v2534
      %v3341 = vpop.f32.mrb[0].mxu0
      %v3342 = vadd.f32 %v3245, %v3341
      %v3343 = vpop.f32.mrb[0].mxu0
      %v3344 = vpop.f32.mrb[0].mxu0
      %v3345 = vadd.f32 %v3248, %v3344
      %v3346 = vpop.f32.mrb[0].mxu0
      %3347 = vmatprep.mubr.bf16.mxu0 %v2543
      %3348 = vmatmul.mubr.bf16.gmra.mrb[0].mxu0 %v2542
      %v3349 = vpop.f32.mrb[0].mxu0
      %v3350 = vadd.f32 %v3253, %v3349
      %v3351 = vpop.f32.mrb[0].mxu0
      %v3352 = vpop.f32.mrb[0].mxu0
      %v3353 = vadd.f32 %v3256, %v3352
      %v3354 = vpop.f32.mrb[0].mxu0
      %3355 = vmatprep.mubr.bf16.mxu0 %v2551
      %3356 = vmatmul.mubr.bf16.gmra.mrb[0].mxu0 %v2550
      %v3357 = vpop.f32.mrb[0].mxu0
      %v3358 = vadd.f32 %v3261, %v3357
      %v3359 = vpop.f32.mrb[0].mxu0
      %v3360 = vpop.f32.mrb[0].mxu0
      %v3361 = vadd.f32 %v3264, %v3360
      %v3362 = vpop.f32.mrb[0].mxu0
      %3363 = vmatprep.mubr.bf16.mxu0 %v2559
      %3364 = vmatmul.mubr.bf16.gmra.mrb[0].mxu0 %v2558
      %v3365 = vpop.f32.mrb[0].mxu0
      %v3366 = vadd.f32 %v3269, %v3365
      %v3367 = vpop.f32.mrb[0].mxu0
      %v3368 = vpop.f32.mrb[0].mxu0
      %v3369 = vadd.f32 %v3272, %v3368
      %v3370 = vpop.f32.mrb[0].mxu0
      %3371 = vmatprep.mubr.bf16.mxu0 %v2567
      %3372 = vmatmul.mubr.bf16.gmra.mrb[0].mxu0 %v2566
      %v3373 = vpop.f32.mrb[0].mxu0
      %v3374 = vadd.f32 %v3277, %v3373
      %v3375 = vpop.f32.mrb[0].mxu0
      %v3376 = vpop.f32.mrb[0].mxu0
      %v3377 = vadd.f32 %v3280, %v3376
      %v3378 = vpop.f32.mrb[0].mxu0
      %3379 = vmatprep.mubr.bf16.mxu0 %v2575
      %3380 = vmatmul.mubr.bf16.gmra.mrb[0].mxu0 %v2574
      %v3381 = vpop.f32.mrb[0].mxu0
      %v3382 = vadd.f32 %v3285, %v3381
      %v3383 = vpop.f32.mrb[0].mxu0
      %v3384 = vpop.f32.mrb[0].mxu0
      %v3385 = vadd.f32 %v3288, %v3384
      %v3386 = vpop.f32.mrb[0].mxu0
      %3387 = vmatprep.mubr.bf16.mxu0 %v2583
      %3388 = vmatmul.mubr.bf16.gmra.mrb[0].mxu0 %v2582
      %v3389 = vpop.f32.mrb[0].mxu0
      %v3390 = vadd.f32 %v3293, %v3389
      %v3391 = vpop.f32.mrb[0].mxu0
      %v3392 = vpop.f32.mrb[0].mxu0
      %v3393 = vadd.f32 %v3296, %v3392
      %v3394 = vpop.f32.mrb[0].mxu0
      %3395 = vmatprep.mubr.bf16.mxu0 %v2591
      %3396 = vmatmul.mubr.bf16.gmra.mrb[0].mxu0 %v2590
      %v3397 = vpop.f32.mrb[0].mxu0
      %v3398 = vadd.f32 %v3301, %v3397
      %v3399 = vpop.f32.mrb[0].mxu0
      %v3400 = vpop.f32.mrb[0].mxu0
      %v3401 = vadd.f32 %v3304, %v3400
      %v3402 = vpop.f32.mrb[0].mxu0
      %3403 = vdwg.mxu0
      %3404 = vmatprep.subr.bf16.mxu0 0
      %3405 = vmatpush1.bf16.msra.mxu0 %v3033
      %3406 = vmatprep.subr.bf16.mxu0 0
      %3407 = vmatpush1.bf16.msra.mxu0 %v3034
      %3408 = vmatprep.subr.bf16.mxu0 0
      %3409 = vmatpush1.bf16.msra.mxu0 %v3035
      %3410 = vmatprep.subr.bf16.mxu0 0
      %3411 = vmatpush1.bf16.msra.mxu0 %v3036
      %3412 = vmatprep.subr.bf16.mxu0 0
      %3413 = vmatpush1.bf16.msra.mxu0 %v3037
      %3414 = vmatprep.subr.bf16.mxu0 0
      %3415 = vmatpush1.bf16.msra.mxu0 %v3038
      %3416 = vmatprep.subr.bf16.mxu0 0
      %3417 = vmatpush1.bf16.msra.mxu0 %v3039
      %3418 = vmatprep.subr.bf16.mxu0 0
      %3419 = vmatpush1.bf16.msra.mxu0 %v3040
      %3420 = vmatprep.subr.bf16.mxu0 0
      %3421 = vmatpush1.bf16.msra.mxu0 %v3041
      %3422 = vmatprep.subr.bf16.mxu0 0
      %3423 = vmatpush1.bf16.msra.mxu0 %v3042
      %3424 = vmatprep.subr.bf16.mxu0 0
      %3425 = vmatpush1.bf16.msra.mxu0 %v3043
      %3426 = vmatprep.subr.bf16.mxu0 0
      %3427 = vmatpush1.bf16.msra.mxu0 %v3044
      %3428 = vmatprep.subr.bf16.mxu0 0
      %3429 = vmatpush1.bf16.msra.mxu0 %v3045
      %3430 = vmatprep.subr.bf16.mxu0 0
      %3431 = vmatpush1.bf16.msra.mxu0 %v3046
      %3432 = vmatprep.subr.bf16.mxu0 0
      %3433 = vmatpush1.bf16.msra.mxu0 %v3047
      %3434 = vmatprep.subr.bf16.mxu0 0
      %3435 = vmatpush1.bf16.msra.mxu0 %v3048
      %3436 = vmatprep.mubr.bf16.mxu0 %v2537
      %3437 = vmatmul.mubr.bf16.gmra.mrb[0].mxu0 %v2536
      %v3438 = vpop.f32.mrb[0].mxu0
      %v3439 = vadd.f32 %v3342, %v3438
      %v3440 = vpop.f32.mrb[0].mxu0
      %v3441 = vpop.f32.mrb[0].mxu0
      %v3442 = vadd.f32 %v3345, %v3441
      %v3443 = vpop.f32.mrb[0].mxu0
      %3444 = vmatprep.mubr.bf16.mxu0 %v2545
      %3445 = vmatmul.mubr.bf16.gmra.mrb[0].mxu0 %v2544
      %v3446 = vpop.f32.mrb[0].mxu0
      %v3447 = vadd.f32 %v3350, %v3446
      %v3448 = vpop.f32.mrb[0].mxu0
      %v3449 = vpop.f32.mrb[0].mxu0
      %v3450 = vadd.f32 %v3353, %v3449
      %v3451 = vpop.f32.mrb[0].mxu0
      %3452 = vmatprep.mubr.bf16.mxu0 %v2553
      %3453 = vmatmul.mubr.bf16.gmra.mrb[0].mxu0 %v2552
      %v3454 = vpop.f32.mrb[0].mxu0
      %v3455 = vadd.f32 %v3358, %v3454
      %v3456 = vpop.f32.mrb[0].mxu0
      %v3457 = vpop.f32.mrb[0].mxu0
      %v3458 = vadd.f32 %v3361, %v3457
      %v3459 = vpop.f32.mrb[0].mxu0
      %3460 = vmatprep.mubr.bf16.mxu0 %v2561
      %3461 = vmatmul.mubr.bf16.gmra.mrb[0].mxu0 %v2560
      %v3462 = vpop.f32.mrb[0].mxu0
      %v3463 = vadd.f32 %v3366, %v3462
      %v3464 = vpop.f32.mrb[0].mxu0
      %v3465 = vpop.f32.mrb[0].mxu0
      %v3466 = vadd.f32 %v3369, %v3465
      %v3467 = vpop.f32.mrb[0].mxu0
      %3468 = vmatprep.mubr.bf16.mxu0 %v2569
      %3469 = vmatmul.mubr.bf16.gmra.mrb[0].mxu0 %v2568
      %v3470 = vpop.f32.mrb[0].mxu0
      %v3471 = vadd.f32 %v3374, %v3470
      %v3472 = vpop.f32.mrb[0].mxu0
      %v3473 = vpop.f32.mrb[0].mxu0
      %v3474 = vadd.f32 %v3377, %v3473
      %v3475 = vpop.f32.mrb[0].mxu0
      %3476 = vmatprep.mubr.bf16.mxu0 %v2577
      %3477 = vmatmul.mubr.bf16.gmra.mrb[0].mxu0 %v2576
      %v3478 = vpop.f32.mrb[0].mxu0
      %v3479 = vadd.f32 %v3382, %v3478
      %v3480 = vpop.f32.mrb[0].mxu0
      %v3481 = vpop.f32.mrb[0].mxu0
      %v3482 = vadd.f32 %v3385, %v3481
      %v3483 = vpop.f32.mrb[0].mxu0
      %3484 = vmatprep.mubr.bf16.mxu0 %v2585
      %3485 = vmatmul.mubr.bf16.gmra.mrb[0].mxu0 %v2584
      %v3486 = vpop.f32.mrb[0].mxu0
      %v3487 = vadd.f32 %v3390, %v3486
      %v3488 = vpop.f32.mrb[0].mxu0
      %v3489 = vpop.f32.mrb[0].mxu0
      %v3490 = vadd.f32 %v3393, %v3489
      %v3491 = vpop.f32.mrb[0].mxu0
      %3492 = vmatprep.mubr.bf16.mxu0 %v2593
      %3493 = vmatmul.mubr.bf16.gmra.mrb[0].mxu0 %v2592
      %v3494 = vpop.f32.mrb[0].mxu0
      %v3495 = vadd.f32 %v3398, %v3494
      %v3496 = vpop.f32.mrb[0].mxu0
      %v3497 = vpop.f32.mrb[0].mxu0
      %v3498 = vadd.f32 %v3401, %v3497
      %v3499 = vpop.f32.mrb[0].mxu0
      %3500 = vdwg.mxu0
      %v3501 = vmax.f32 %v3439, 0.0
      %v3502 = vmax.f32 %v3442, 0.0
      %v3503 = vmax.f32 %v3447, 0.0
      %v3504 = vmax.f32 %v3450, 0.0
      %v3505 = vmax.f32 %v3455, 0.0
      %v3506 = vmax.f32 %v3458, 0.0
      %v3507 = vmax.f32 %v3463, 0.0
      %v3508 = vmax.f32 %v3466, 0.0
      %v3509 = vmax.f32 %v3471, 0.0
      %v3510 = vmax.f32 %v3474, 0.0
      %v3511 = vmax.f32 %v3479, 0.0
      %v3512 = vmax.f32 %v3482, 0.0
      %v3513 = vmax.f32 %v3487, 0.0
      %v3514 = vmax.f32 %v3490, 0.0
      %v3515 = vmax.f32 %v3495, 0.0
      %v3516 = vmax.f32 %v3498, 0.0
      %v3517 = vld [vmem:[%s5] sm:$0x1]
      %v3518 = vlaneseq
      %v3519 = vshrl.u32 %v3518, 7
      %v3520 = vsub.s32 0, %v3519
      %v3521 = vrot.slane %v3517, %v3520
      %v3522 = vmul.f32 %v3501, %v3521
      %v3523 = vmul.f32 %v3502, %v3521
      %v3524 = vmul.f32 %v3503, %v3521
      %v3525 = vmul.f32 %v3504, %v3521
      %v3526 = vmul.f32 %v3505, %v3521
      %v3527 = vmul.f32 %v3506, %v3521
      %v3528 = vmul.f32 %v3507, %v3521
      %v3529 = vmul.f32 %v3508, %v3521
      %v3530 = vmul.f32 %v3509, %v3521
      %v3531 = vmul.f32 %v3510, %v3521
      %v3532 = vmul.f32 %v3511, %v3521
      %v3533 = vmul.f32 %v3512, %v3521
      %v3534 = vmul.f32 %v3513, %v3521
      %v3535 = vmul.f32 %v3514, %v3521
      %v3536 = vmul.f32 %v3515, %v3521
      %v3537 = vmul.f32 %v3516, %v3521
      %vm3538 = vcmask 523264
      %v3539 = vsel %vm3538, %v3522, 0.0
      %3540 = vadd.xlane.f32.xlu0 %v3539
      %v3541 = vpop.xlane.xlu0 %3540
      %v3542 = vsel %vm3538, %v3523, 0.0
      %3543 = vadd.xlane.f32.xlu0 %v3542
      %v3544 = vpop.xlane.xlu0 %3543
      %v3545 = vsel %vm3538, %v3524, 0.0
      %3546 = vadd.xlane.f32.xlu0 %v3545
      %v3547 = vpop.xlane.xlu0 %3546
      %v3548 = vsel %vm3538, %v3525, 0.0
      %3549 = vadd.xlane.f32.xlu0 %v3548
      %v3550 = vpop.xlane.xlu0 %3549
      %v3551 = vsel %vm3538, %v3526, 0.0
      %3552 = vadd.xlane.f32.xlu0 %v3551
      %v3553 = vpop.xlane.xlu0 %3552
      %v3554 = vsel %vm3538, %v3527, 0.0
      %3555 = vadd.xlane.f32.xlu0 %v3554
      %v3556 = vpop.xlane.xlu0 %3555
      %v3557 = vsel %vm3538, %v3528, 0.0
      %3558 = vadd.xlane.f32.xlu0 %v3557
      %v3559 = vpop.xlane.xlu0 %3558
      %v3560 = vsel %vm3538, %v3529, 0.0
      %3561 = vadd.xlane.f32.xlu0 %v3560
      %v3562 = vpop.xlane.xlu0 %3561
      %v3563 = vsel %vm3538, %v3530, 0.0
      %3564 = vadd.xlane.f32.xlu0 %v3563
      %v3565 = vpop.xlane.xlu0 %3564
      %v3566 = vsel %vm3538, %v3531, 0.0
      %3567 = vadd.xlane.f32.xlu0 %v3566
      %v3568 = vpop.xlane.xlu0 %3567
      %v3569 = vsel %vm3538, %v3532, 0.0
      %3570 = vadd.xlane.f32.xlu0 %v3569
      %v3571 = vpop.xlane.xlu0 %3570
      %v3572 = vsel %vm3538, %v3533, 0.0
      %3573 = vadd.xlane.f32.xlu0 %v3572
      %v3574 = vpop.xlane.xlu0 %3573
      %v3575 = vsel %vm3538, %v3534, 0.0
      %3576 = vadd.xlane.f32.xlu0 %v3575
      %v3577 = vpop.xlane.xlu0 %3576
      %v3578 = vsel %vm3538, %v3535, 0.0
      %3579 = vadd.xlane.f32.xlu0 %v3578
      %v3580 = vpop.xlane.xlu0 %3579
      %v3581 = vsel %vm3538, %v3536, 0.0
      %3582 = vadd.xlane.f32.xlu0 %v3581
      %v3583 = vpop.xlane.xlu0 %3582
      %v3584 = vsel %vm3538, %v3537, 0.0
      %3585 = vadd.xlane.f32.xlu0 %v3584
      %v3586 = vpop.xlane.xlu0 %3585
      %v3587 = vld [vmem:[%s6] sm:$0x1]
      %v3589 = vlaneseq
      %v3590 = vshrl.u32 %v3589, 7
      %v3591 = vsub.s32 0, %v3590
      %v3592 = vrot.slane %v3587, %v3591
      %v3594 = vadd.f32 %v3541, %v3592
      %v3595 = vadd.f32 %v3544, %v3592
      %v3596 = vadd.f32 %v3547, %v3592
      %v3597 = vadd.f32 %v3550, %v3592
      %v3598 = vadd.f32 %v3553, %v3592
      %v3599 = vadd.f32 %v3556, %v3592
      %v3600 = vadd.f32 %v3559, %v3592
      %v3601 = vadd.f32 %v3562, %v3592
      %v3602 = vadd.f32 %v3565, %v3592
      %v3603 = vadd.f32 %v3568, %v3592
      %v3604 = vadd.f32 %v3571, %v3592
      %v3605 = vadd.f32 %v3574, %v3592
      %v3606 = vadd.f32 %v3577, %v3592
      %v3607 = vadd.f32 %v3580, %v3592
      %v3608 = vadd.f32 %v3583, %v3592
      %v3609 = vadd.f32 %v3586, %v3592
      %v3610 = vld [vmem:[%s5 + $0x1] sm:$0x1]
      %v3611 = vlaneseq
      %v3612 = vshrl.u32 %v3611, 7
      %v3613 = vsub.s32 0, %v3612
      %v3614 = vrot.slane %v3610, %v3613
      %v3615 = vmul.f32 %v3501, %v3614
      %v3616 = vmul.f32 %v3502, %v3614
      %v3617 = vmul.f32 %v3503, %v3614
      %v3618 = vmul.f32 %v3504, %v3614
      %v3619 = vmul.f32 %v3505, %v3614
      %v3620 = vmul.f32 %v3506, %v3614
      %v3621 = vmul.f32 %v3507, %v3614
      %v3622 = vmul.f32 %v3508, %v3614
      %v3623 = vmul.f32 %v3509, %v3614
      %v3624 = vmul.f32 %v3510, %v3614
      %v3625 = vmul.f32 %v3511, %v3614
      %v3626 = vmul.f32 %v3512, %v3614
      %v3627 = vmul.f32 %v3513, %v3614
      %v3628 = vmul.f32 %v3514, %v3614
      %v3629 = vmul.f32 %v3515, %v3614
      %v3630 = vmul.f32 %v3516, %v3614
      %v3631 = vsel %vm3538, %v3615, 0.0
      %3632 = vadd.xlane.f32.xlu0 %v3631
      %v3633 = vpop.xlane.xlu0 %3632
      %v3634 = vsel %vm3538, %v3616, 0.0
      %3635 = vadd.xlane.f32.xlu0 %v3634
      %v3636 = vpop.xlane.xlu0 %3635
      %v3637 = vsel %vm3538, %v3617, 0.0
      %3638 = vadd.xlane.f32.xlu0 %v3637
      %v3639 = vpop.xlane.xlu0 %3638
      %v3640 = vsel %vm3538, %v3618, 0.0
      %3641 = vadd.xlane.f32.xlu0 %v3640
      %v3642 = vpop.xlane.xlu0 %3641
      %v3643 = vsel %vm3538, %v3619, 0.0
      %3644 = vadd.xlane.f32.xlu0 %v3643
      %v3645 = vpop.xlane.xlu0 %3644
      %v3646 = vsel %vm3538, %v3620, 0.0
      %3647 = vadd.xlane.f32.xlu0 %v3646
      %v3648 = vpop.xlane.xlu0 %3647
      %v3649 = vsel %vm3538, %v3621, 0.0
      %3650 = vadd.xlane.f32.xlu0 %v3649
      %v3651 = vpop.xlane.xlu0 %3650
      %v3652 = vsel %vm3538, %v3622, 0.0
      %3653 = vadd.xlane.f32.xlu0 %v3652
      %v3654 = vpop.xlane.xlu0 %3653
      %v3655 = vsel %vm3538, %v3623, 0.0
      %3656 = vadd.xlane.f32.xlu0 %v3655
      %v3657 = vpop.xlane.xlu0 %3656
      %v3658 = vsel %vm3538, %v3624, 0.0
      %3659 = vadd.xlane.f32.xlu0 %v3658
      %v3660 = vpop.xlane.xlu0 %3659
      %v3661 = vsel %vm3538, %v3625, 0.0
      %3662 = vadd.xlane.f32.xlu0 %v3661
      %v3663 = vpop.xlane.xlu0 %3662
      %v3664 = vsel %vm3538, %v3626, 0.0
      %3665 = vadd.xlane.f32.xlu0 %v3664
      %v3666 = vpop.xlane.xlu0 %3665
      %v3667 = vsel %vm3538, %v3627, 0.0
      %3668 = vadd.xlane.f32.xlu0 %v3667
      %v3669 = vpop.xlane.xlu0 %3668
      %v3670 = vsel %vm3538, %v3628, 0.0
      %3671 = vadd.xlane.f32.xlu0 %v3670
      %v3672 = vpop.xlane.xlu0 %3671
      %v3673 = vsel %vm3538, %v3629, 0.0
      %3674 = vadd.xlane.f32.xlu0 %v3673
      %v3675 = vpop.xlane.xlu0 %3674
      %v3676 = vsel %vm3538, %v3630, 0.0
      %3677 = vadd.xlane.f32.xlu0 %v3676
      %v3678 = vpop.xlane.xlu0 %3677
      %v3679 = vadd.f32 %v3633, %v3592
      %v3680 = vadd.f32 %v3636, %v3592
      %v3681 = vadd.f32 %v3639, %v3592
      %v3682 = vadd.f32 %v3642, %v3592
      %v3683 = vadd.f32 %v3645, %v3592
      %v3684 = vadd.f32 %v3648, %v3592
      %v3685 = vadd.f32 %v3651, %v3592
      %v3686 = vadd.f32 %v3654, %v3592
      %v3687 = vadd.f32 %v3657, %v3592
      %v3688 = vadd.f32 %v3660, %v3592
      %v3689 = vadd.f32 %v3663, %v3592
      %v3690 = vadd.f32 %v3666, %v3592
      %v3691 = vadd.f32 %v3669, %v3592
      %v3692 = vadd.f32 %v3672, %v3592
      %v3693 = vadd.f32 %v3675, %v3592
      %v3694 = vadd.f32 %v3678, %v3592
      %3711 = vrot.lane.b32.xlu0 %v3679, 127
      %v3712 = vpop.permute.xlu0 %3711
      %3713 = vrot.lane.b32.xlu0 %v3680, 127
      %v3714 = vpop.permute.xlu0 %3713
      %3715 = vrot.lane.b32.xlu0 %v3681, 127
      %v3716 = vpop.permute.xlu0 %3715
      %3717 = vrot.lane.b32.xlu0 %v3682, 127
      %v3718 = vpop.permute.xlu0 %3717
      %3719 = vrot.lane.b32.xlu0 %v3683, 127
      %v3720 = vpop.permute.xlu0 %3719
      %3721 = vrot.lane.b32.xlu0 %v3684, 127
      %v3722 = vpop.permute.xlu0 %3721
      %3723 = vrot.lane.b32.xlu0 %v3685, 127
      %v3724 = vpop.permute.xlu0 %3723
      %3725 = vrot.lane.b32.xlu0 %v3686, 127
      %v3726 = vpop.permute.xlu0 %3725
      %3727 = vrot.lane.b32.xlu0 %v3687, 127
      %v3728 = vpop.permute.xlu0 %3727
      %3729 = vrot.lane.b32.xlu0 %v3688, 127
      %v3730 = vpop.permute.xlu0 %3729
      %3731 = vrot.lane.b32.xlu0 %v3689, 127
      %v3732 = vpop.permute.xlu0 %3731
      %3733 = vrot.lane.b32.xlu0 %v3690, 127
      %v3734 = vpop.permute.xlu0 %3733
      %3735 = vrot.lane.b32.xlu0 %v3691, 127
      %v3736 = vpop.permute.xlu0 %3735
      %3737 = vrot.lane.b32.xlu0 %v3692, 127
      %v3738 = vpop.permute.xlu0 %3737
      %3739 = vrot.lane.b32.xlu0 %v3693, 127
      %v3740 = vpop.permute.xlu0 %3739
      %3741 = vrot.lane.b32.xlu0 %v3694, 127
      %v3742 = vpop.permute.xlu0 %3741
      %v3759 = vmax.f32 %v3594, %v3712
      %v3760 = vmax.f32 %v3595, %v3714
      %v3761 = vmax.f32 %v3596, %v3716
      %v3762 = vmax.f32 %v3597, %v3718
      %v3763 = vmax.f32 %v3598, %v3720
      %v3764 = vmax.f32 %v3599, %v3722
      %v3765 = vmax.f32 %v3600, %v3724
      %v3766 = vmax.f32 %v3601, %v3726
      %v3767 = vmax.f32 %v3602, %v3728
      %v3768 = vmax.f32 %v3603, %v3730
      %v3769 = vmax.f32 %v3604, %v3732
      %v3770 = vmax.f32 %v3605, %v3734
      %v3771 = vmax.f32 %v3606, %v3736
      %v3772 = vmax.f32 %v3607, %v3738
      %v3773 = vmax.f32 %v3608, %v3740
      %v3774 = vmax.f32 %v3609, %v3742
      %v3775 = vsub.f32 %v3594, %v3759
      %v3776 = vsub.f32 %v3595, %v3760
      %v3777 = vsub.f32 %v3596, %v3761
      %v3778 = vsub.f32 %v3597, %v3762
      %v3779 = vsub.f32 %v3598, %v3763
      %v3780 = vsub.f32 %v3599, %v3764
      %v3781 = vsub.f32 %v3600, %v3765
      %v3782 = vsub.f32 %v3601, %v3766
      %v3783 = vsub.f32 %v3602, %v3767
      %v3784 = vsub.f32 %v3603, %v3768
      %v3785 = vsub.f32 %v3604, %v3769
      %v3786 = vsub.f32 %v3605, %v3770
      %v3787 = vsub.f32 %v3606, %v3771
      %v3788 = vsub.f32 %v3607, %v3772
      %v3789 = vsub.f32 %v3608, %v3773
      %v3790 = vsub.f32 %v3609, %v3774
      %v3791 = vmul.f32 %v3775, 1.442695
      %v3792 = vpow.pop %v3791
      %v3793 = vmul.f32 %v3776, 1.442695
      %v3794 = vpow.pop %v3793
      %v3795 = vmul.f32 %v3777, 1.442695
      %v3796 = vpow.pop %v3795
      %v3797 = vmul.f32 %v3778, 1.442695
      %v3798 = vpow.pop %v3797
      %v3799 = vmul.f32 %v3779, 1.442695
      %v3800 = vpow.pop %v3799
      %v3801 = vmul.f32 %v3780, 1.442695
      %v3802 = vpow.pop %v3801
      %v3803 = vmul.f32 %v3781, 1.442695
      %v3804 = vpow.pop %v3803
      %v3805 = vmul.f32 %v3782, 1.442695
      %v3806 = vpow.pop %v3805
      %v3807 = vmul.f32 %v3783, 1.442695
      %v3808 = vpow.pop %v3807
      %v3809 = vmul.f32 %v3784, 1.442695
      %v3810 = vpow.pop %v3809
      %v3811 = vmul.f32 %v3785, 1.442695
      %v3812 = vpow.pop %v3811
      %v3813 = vmul.f32 %v3786, 1.442695
      %v3814 = vpow.pop %v3813
      %v3815 = vmul.f32 %v3787, 1.442695
      %v3816 = vpow.pop %v3815
      %v3817 = vmul.f32 %v3788, 1.442695
      %v3818 = vpow.pop %v3817
      %v3819 = vmul.f32 %v3789, 1.442695
      %v3820 = vpow.pop %v3819
      %v3821 = vmul.f32 %v3790, 1.442695
      %v3822 = vpow.pop %v3821
      %3839 = vrot.lane.b32.xlu0 %v3759, 1
      %v3840 = vpop.permute.xlu0 %3839
      %3841 = vrot.lane.b32.xlu0 %v3760, 1
      %v3842 = vpop.permute.xlu0 %3841
      %3843 = vrot.lane.b32.xlu0 %v3761, 1
      %v3844 = vpop.permute.xlu0 %3843
      %3845 = vrot.lane.b32.xlu0 %v3762, 1
      %v3846 = vpop.permute.xlu0 %3845
      %3847 = vrot.lane.b32.xlu0 %v3763, 1
      %v3848 = vpop.permute.xlu0 %3847
      %3849 = vrot.lane.b32.xlu0 %v3764, 1
      %v3850 = vpop.permute.xlu0 %3849
      %3851 = vrot.lane.b32.xlu0 %v3765, 1
      %v3852 = vpop.permute.xlu0 %3851
      %3853 = vrot.lane.b32.xlu0 %v3766, 1
      %v3854 = vpop.permute.xlu0 %3853
      %3855 = vrot.lane.b32.xlu0 %v3767, 1
      %v3856 = vpop.permute.xlu0 %3855
      %3857 = vrot.lane.b32.xlu0 %v3768, 1
      %v3858 = vpop.permute.xlu0 %3857
      %3859 = vrot.lane.b32.xlu0 %v3769, 1
      %v3860 = vpop.permute.xlu0 %3859
      %3861 = vrot.lane.b32.xlu0 %v3770, 1
      %v3862 = vpop.permute.xlu0 %3861
      %3863 = vrot.lane.b32.xlu0 %v3771, 1
      %v3864 = vpop.permute.xlu0 %3863
      %3865 = vrot.lane.b32.xlu0 %v3772, 1
      %v3866 = vpop.permute.xlu0 %3865
      %3867 = vrot.lane.b32.xlu0 %v3773, 1
      %v3868 = vpop.permute.xlu0 %3867
      %3869 = vrot.lane.b32.xlu0 %v3774, 1
      %v3870 = vpop.permute.xlu0 %3869
      %v3887 = vsub.f32 %v3679, %v3840
      %v3888 = vsub.f32 %v3680, %v3842
      %v3889 = vsub.f32 %v3681, %v3844
      %v3890 = vsub.f32 %v3682, %v3846
      %v3891 = vsub.f32 %v3683, %v3848
      %v3892 = vsub.f32 %v3684, %v3850
      %v3893 = vsub.f32 %v3685, %v3852
      %v3894 = vsub.f32 %v3686, %v3854
      %v3895 = vsub.f32 %v3687, %v3856
      %v3896 = vsub.f32 %v3688, %v3858
      %v3897 = vsub.f32 %v3689, %v3860
      %v3898 = vsub.f32 %v3690, %v3862
      %v3899 = vsub.f32 %v3691, %v3864
      %v3900 = vsub.f32 %v3692, %v3866
      %v3901 = vsub.f32 %v3693, %v3868
      %v3902 = vsub.f32 %v3694, %v3870
      %v3903 = vmul.f32 %v3887, 1.442695
      %v3904 = vpow.pop %v3903
      %v3905 = vmul.f32 %v3888, 1.442695
      %v3906 = vpow.pop %v3905
      %v3907 = vmul.f32 %v3889, 1.442695
      %v3908 = vpow.pop %v3907
      %v3909 = vmul.f32 %v3890, 1.442695
      %v3910 = vpow.pop %v3909
      %v3911 = vmul.f32 %v3891, 1.442695
      %v3912 = vpow.pop %v3911
      %v3913 = vmul.f32 %v3892, 1.442695
      %v3914 = vpow.pop %v3913
      %v3915 = vmul.f32 %v3893, 1.442695
      %v3916 = vpow.pop %v3915
      %v3917 = vmul.f32 %v3894, 1.442695
      %v3918 = vpow.pop %v3917
      %v3919 = vmul.f32 %v3895, 1.442695
      %v3920 = vpow.pop %v3919
      %v3921 = vmul.f32 %v3896, 1.442695
      %v3922 = vpow.pop %v3921
      %v3923 = vmul.f32 %v3897, 1.442695
      %v3924 = vpow.pop %v3923
      %v3925 = vmul.f32 %v3898, 1.442695
      %v3926 = vpow.pop %v3925
      %v3927 = vmul.f32 %v3899, 1.442695
      %v3928 = vpow.pop %v3927
      %v3929 = vmul.f32 %v3900, 1.442695
      %v3930 = vpow.pop %v3929
      %v3931 = vmul.f32 %v3901, 1.442695
      %v3932 = vpow.pop %v3931
      %v3933 = vmul.f32 %v3902, 1.442695
      %v3934 = vpow.pop %v3933
      %3951 = vrot.lane.b32.xlu0 %v3904, 127
      %v3952 = vpop.permute.xlu0 %3951
      %3953 = vrot.lane.b32.xlu0 %v3906, 127
      %v3954 = vpop.permute.xlu0 %3953
      %3955 = vrot.lane.b32.xlu0 %v3908, 127
      %v3956 = vpop.permute.xlu0 %3955
      %3957 = vrot.lane.b32.xlu0 %v3910, 127
      %v3958 = vpop.permute.xlu0 %3957
      %3959 = vrot.lane.b32.xlu0 %v3912, 127
      %v3960 = vpop.permute.xlu0 %3959
      %3961 = vrot.lane.b32.xlu0 %v3914, 127
      %v3962 = vpop.permute.xlu0 %3961
      %3963 = vrot.lane.b32.xlu0 %v3916, 127
      %v3964 = vpop.permute.xlu0 %3963
      %3965 = vrot.lane.b32.xlu0 %v3918, 127
      %v3966 = vpop.permute.xlu0 %3965
      %3967 = vrot.lane.b32.xlu0 %v3920, 127
      %v3968 = vpop.permute.xlu0 %3967
      %3969 = vrot.lane.b32.xlu0 %v3922, 127
      %v3970 = vpop.permute.xlu0 %3969
      %3971 = vrot.lane.b32.xlu0 %v3924, 127
      %v3972 = vpop.permute.xlu0 %3971
      %3973 = vrot.lane.b32.xlu0 %v3926, 127
      %v3974 = vpop.permute.xlu0 %3973
      %3975 = vrot.lane.b32.xlu0 %v3928, 127
      %v3976 = vpop.permute.xlu0 %3975
      %3977 = vrot.lane.b32.xlu0 %v3930, 127
      %v3978 = vpop.permute.xlu0 %3977
      %3979 = vrot.lane.b32.xlu0 %v3932, 127
      %v3980 = vpop.permute.xlu0 %3979
      %3981 = vrot.lane.b32.xlu0 %v3934, 127
      %v3982 = vpop.permute.xlu0 %3981
      %v3999 = vadd.f32 %v3792, %v3952
      %v4000 = vadd.f32 %v3794, %v3954
      %v4001 = vadd.f32 %v3796, %v3956
      %v4002 = vadd.f32 %v3798, %v3958
      %v4003 = vadd.f32 %v3800, %v3960
      %v4004 = vadd.f32 %v3802, %v3962
      %v4005 = vadd.f32 %v3804, %v3964
      %v4006 = vadd.f32 %v3806, %v3966
      %v4007 = vadd.f32 %v3808, %v3968
      %v4008 = vadd.f32 %v3810, %v3970
      %v4009 = vadd.f32 %v3812, %v3972
      %v4010 = vadd.f32 %v3814, %v3974
      %v4011 = vadd.f32 %v3816, %v3976
      %v4012 = vadd.f32 %v3818, %v3978
      %v4013 = vadd.f32 %v3820, %v3980
      %v4014 = vadd.f32 %v3822, %v3982
      %v4015 = vrcp.pop %v3999
      %v4016 = vrcp.pop %v4000
      %v4017 = vrcp.pop %v4001
      %v4018 = vrcp.pop %v4002
      %v4019 = vrcp.pop %v4003
      %v4020 = vrcp.pop %v4004
      %v4021 = vrcp.pop %v4005
      %v4022 = vrcp.pop %v4006
      %v4023 = vrcp.pop %v4007
      %v4024 = vrcp.pop %v4008
      %v4025 = vrcp.pop %v4009
      %v4026 = vrcp.pop %v4010
      %v4027 = vrcp.pop %v4011
      %v4028 = vrcp.pop %v4012
      %v4029 = vrcp.pop %v4013
      %v4030 = vrcp.pop %v4014
      %vm4031 = vcmask 7168
      %v4032 = vsel %vm4031, %v3792, %v3904
      %v4033 = vsel %vm4031, %v3794, %v3906
      %v4034 = vsel %vm4031, %v3796, %v3908
      %v4035 = vsel %vm4031, %v3798, %v3910
      %v4036 = vsel %vm4031, %v3800, %v3912
      %v4037 = vsel %vm4031, %v3802, %v3914
      %v4038 = vsel %vm4031, %v3804, %v3916
      %v4039 = vsel %vm4031, %v3806, %v3918
      %v4040 = vsel %vm4031, %v3808, %v3920
      %v4041 = vsel %vm4031, %v3810, %v3922
      %v4042 = vsel %vm4031, %v3812, %v3924
      %v4043 = vsel %vm4031, %v3814, %v3926
      %v4044 = vsel %vm4031, %v3816, %v3928
      %v4045 = vsel %vm4031, %v3818, %v3930
      %v4046 = vsel %vm4031, %v3820, %v3932
      %v4047 = vsel %vm4031, %v3822, %v3934
      %4049 = vset.pattern.permute.xlu0 0
      %4050 = vperm.xlu0 %4049, %v4015
      %v4051 = vpop.permute.xlu0 %4050
      %4054 = vset.pattern.permute.xlu0 0
      %4055 = vperm.xlu0 %4054, %v4016
      %v4056 = vpop.permute.xlu0 %4055
      %4059 = vset.pattern.permute.xlu0 0
      %4060 = vperm.xlu0 %4059, %v4017
      %v4061 = vpop.permute.xlu0 %4060
      %4064 = vset.pattern.permute.xlu0 0
      %4065 = vperm.xlu0 %4064, %v4018
      %v4066 = vpop.permute.xlu0 %4065
      %4069 = vset.pattern.permute.xlu0 0
      %4070 = vperm.xlu0 %4069, %v4019
      %v4071 = vpop.permute.xlu0 %4070
      %4074 = vset.pattern.permute.xlu0 0
      %4075 = vperm.xlu0 %4074, %v4020
      %v4076 = vpop.permute.xlu0 %4075
      %4079 = vset.pattern.permute.xlu0 0
      %4080 = vperm.xlu0 %4079, %v4021
      %v4081 = vpop.permute.xlu0 %4080
      %4084 = vset.pattern.permute.xlu0 0
      %4085 = vperm.xlu0 %4084, %v4022
      %v4086 = vpop.permute.xlu0 %4085
      %4089 = vset.pattern.permute.xlu0 0
      %4090 = vperm.xlu0 %4089, %v4023
      %v4091 = vpop.permute.xlu0 %4090
      %4094 = vset.pattern.permute.xlu0 0
      %4095 = vperm.xlu0 %4094, %v4024
      %v4096 = vpop.permute.xlu0 %4095
      %4099 = vset.pattern.permute.xlu0 0
      %4100 = vperm.xlu0 %4099, %v4025
      %v4101 = vpop.permute.xlu0 %4100
      %4104 = vset.pattern.permute.xlu0 0
      %4105 = vperm.xlu0 %4104, %v4026
      %v4106 = vpop.permute.xlu0 %4105
      %4109 = vset.pattern.permute.xlu0 0
      %4110 = vperm.xlu0 %4109, %v4027
      %v4111 = vpop.permute.xlu0 %4110
      %4114 = vset.pattern.permute.xlu0 0
      %4115 = vperm.xlu0 %4114, %v4028
      %v4116 = vpop.permute.xlu0 %4115
      %4119 = vset.pattern.permute.xlu0 0
      %4120 = vperm.xlu0 %4119, %v4029
      %v4121 = vpop.permute.xlu0 %4120
      %4124 = vset.pattern.permute.xlu0 0
      %4125 = vperm.xlu0 %4124, %v4030
      %v4126 = vpop.permute.xlu0 %4125
      %v4128 = vmul.f32 %v4032, %v4051
      %v4129 = vmul.f32 %v4033, %v4056
      %v4130 = vmul.f32 %v4034, %v4061
      %v4131 = vmul.f32 %v4035, %v4066
      %v4132 = vmul.f32 %v4036, %v4071
      %v4133 = vmul.f32 %v4037, %v4076
      %v4134 = vmul.f32 %v4038, %v4081
      %v4135 = vmul.f32 %v4039, %v4086
      %v4136 = vmul.f32 %v4040, %v4091
      %v4137 = vmul.f32 %v4041, %v4096
      %v4138 = vmul.f32 %v4042, %v4101
      %v4139 = vmul.f32 %v4043, %v4106
      %v4140 = vmul.f32 %v4044, %v4111
      %v4141 = vmul.f32 %v4045, %v4116
      %v4142 = vmul.f32 %v4046, %v4121
      %v4143 = vmul.f32 %v4047, %v4126
      %vm4144 = vcmask 15360
      %4145 = vst.msk [vmem:[%s280] sm:$0xff] %vm4144, %v4128
      %4146 = vst.msk [vmem:[%s280 + $0x8] sm:$0xff] %vm4144, %v4129
      %4147 = vst.msk [vmem:[%s280 + $0x10] sm:$0xff] %vm4144, %v4130
      %4148 = vst.msk [vmem:[%s280 + $0x18] sm:$0xff] %vm4144, %v4131
      %4149 = vst.msk [vmem:[%s280 + $0x20] sm:$0xff] %vm4144, %v4132
      %4150 = vst.msk [vmem:[%s280 + $0x28] sm:$0xff] %vm4144, %v4133
      %4151 = vst.msk [vmem:[%s280 + $0x30] sm:$0xff] %vm4144, %v4134
      %4152 = vst.msk [vmem:[%s280 + $0x38] sm:$0xff] %vm4144, %v4135
      %4153 = vst.msk [vmem:[%s280 + $0x40] sm:$0xff] %vm4144, %v4136
      %4154 = vst.msk [vmem:[%s280 + $0x48] sm:$0xff] %vm4144, %v4137
      %4155 = vst.msk [vmem:[%s280 + $0x50] sm:$0xff] %vm4144, %v4138
      %4156 = vst.msk [vmem:[%s280 + $0x58] sm:$0xff] %vm4144, %v4139
      %4157 = vst.msk [vmem:[%s280 + $0x60] sm:$0xff] %vm4144, %v4140
      %4158 = vst.msk [vmem:[%s280 + $0x68] sm:$0xff] %vm4144, %v4141
      %4159 = vst.msk [vmem:[%s280 + $0x70] sm:$0xff] %vm4144, %v4142
      %4160 = vst.msk [vmem:[%s280 + $0x78] sm:$0xff] %vm4144, %v4143
      %s4161 = smul.u32 16, %s18
      %p4162 = scmp.lt.s32.totalorder %s4161, 31
      %s4163 = scalar_select %p4162, %s4161, 31
      %s4164 = smul.addr %s4163, 8
      %s4165 = scalar_lea.vmem %s7, %s4164
      // Predicated region
      $region49: #{cnn_forward.1} parent=47 // pred_check
        %p4166 = pneg %p188
      $region50: #{cnn_forward.1} parent=47 // pred_check_branch
        %4168 = sbr.rel (%p4166) target = $region52
      $region51: #{cnn_forward.1} parent=47 // pred_region
        %s4169 = smul.u32 16, %s18
      $region52: #{cnn_forward.1} parent=47 // pred_fallthru
        _
    $region48: #{cnn_forward.1} parent=5 // pred_fallthru
      _
    %p4170 = scmp.le.s32.totalorder 2, %s13
    // Predicated region
    $region53: #{cnn_forward.1} parent=5 // pred_check
      %p4171 = pneg %p4170
    $region54: #{cnn_forward.1} parent=5 // pred_check_branch
      %4173 = sbr.rel (%p4171) target = $region56
    $region55: #{cnn_forward.1} parent=5 // pred_region
      %s4174 = ssub.s32 %s13, 2
      // Predicated region
      $region57: #{cnn_forward.1} parent=55 // pred_check
        %p4175 = pneg %p194
      $region58: #{cnn_forward.1} parent=55 // pred_check_branch
        %4177 = sbr.rel (%p4175) target = $region60
      $region59: #{cnn_forward.1} parent=55 // pred_region
        %s4178 = smul.u32 16, %s19
        %p4179 = scmp.lt.s32.totalorder %s4178, 31
        %s4180 = scalar_select %p4179, %s4178, 31
        %s4181 = smul.addr %s4180, 8
        %s4182 = scalar_lea.vmem %s7, %s4181
      $region60: #{cnn_forward.1} parent=55 // pred_fallthru
        _
    $region56: #{cnn_forward.1} parent=5 // pred_fallthru
      _
  $region6: #{cnn_forward.1} parent=0 // loop_footer
    %s17 = sadd.s32 1, %s13
  $region7: #{cnn_forward.1} parent=0 // loop_footer_branch
    %12 = sbr.rel target = $region3
  $region8: #{cnn_forward.1} parent=0 // loop_exit
    _

</llo_original>
